<compile_context>
chip_gen: v6e
topology: v6e:2x2x1
jax: 0.10.0
libtpu: 0.0.40
codegen_flags: <defaults>
</compile_context>

<pallas_src>
import numpy as np
import jax
import jax.numpy as jnp
from jax.experimental import pallas as pl
from jax.experimental.pallas import tpu as pltpu

EPS = 1e-5          # PyTorch GroupNorm default eps
LANE = 128          # TPU lane width: channel dims are zero-padded to this
W_OFF = 8           # sublane-aligned column offset of real data in the scratch


def _rup(n, m=LANE):
    return ((n + m - 1) // m) * m


def _make_kernel(H, W, stride, Cin, P, Cout, Cin_p, P_p, Cout_p):
    """Builds the per-sample kernel; closes over all static shape config."""
    S = H * W
    Ho = (H + 2 - 3) // stride + 1
    Wo = (W + 2 - 3) // stride + 1
    So = Ho * Wo
    # GroupNorm(1, C) element counts over the REAL (unpadded) channels.
    n1 = float(S * P)
    n2 = float(So * P)
    n3 = float(So * Cout)

    def gn(h, gamma, beta, count):
        # Single-pass statistics: var = E[x^2] - E[x]^2.  Padded lanes are
        # exactly zero so they do not perturb the sums; `count` is the real
        # element count.  gamma/beta are zero on padded lanes, which maps the
        # padded lanes back to exactly zero after the affine transform.
        s1 = jnp.sum(h)
        s2 = jnp.sum(h * h)
        mu = s1 / count
        var = s2 / count - mu * mu
        inv = jax.lax.rsqrt(var + EPS)
        scale = gamma * inv                 # (1, C)
        shift = beta - mu * scale           # (1, C)
        return h * scale + shift

    def kernel(x_ref, w1_ref, g1_ref, b1_ref, w2_ref, g2_ref, b2_ref,
               w3_ref, g3_ref, b3_ref, ws_ref, gs_ref, bs_ref,
               o_ref, pad_ref):
        x = x_ref[0]                                           # (S, Cin_p)

        # ---- conv1 (1x1) -> GN -> ReLU -------------------------------------
        # Matmuls use default precision (bf16 MXU inputs, f32 accumulation);
        # HIGHEST was removed per the performance review.
        h1 = jnp.dot(x, w1_ref[...], preferred_element_type=jnp.float32)
        h1 = jnp.maximum(gn(h1, g1_ref[...], b1_ref[...], n1), 0.0)

        # ---- conv2 (3x3, stride, pad=1) -> GN -> ReLU ----------------------
        # Zero the halo buffer, drop h1 into its interior, then read the nine
        # shifted spatial windows.  The zero border IS the conv padding.
        # (Re-zeroed every grid step so the kernel is safe under megacore
        # sharding of the parallel batch axis.)
        pad_ref[...] = jnp.zeros_like(pad_ref)
        pad_ref[1:H + 1, W_OFF:W_OFF + W, :] = h1.reshape(H, W, P_p)

        taps = []
        for kh in range(3):
            for kw in range(3):
                c0 = W_OFF + kw - 1
                if stride == 1:
                    t = pad_ref[kh:kh + H, c0:c0 + W, :]
                else:
                    t = pad_ref[pl.ds(kh, Ho, stride), pl.ds(c0, Wo, stride), :]
                taps.append(t)
        # Fused im2col: ONE K = 9*P_p matmul instead of nine K = P_p matmuls.
        im2col = jnp.concatenate(taps, axis=-1).reshape(So, 9 * P_p)
        h2 = jnp.dot(im2col, w2_ref[...], preferred_element_type=jnp.float32)
        h2 = jnp.maximum(gn(h2, g2_ref[...], b2_ref[...], n2), 0.0)

        # ---- conv3 (1x1) -> GN (no ReLU yet) -------------------------------
        h3 = jnp.dot(h2, w3_ref[...], preferred_element_type=jnp.float32)
        h3 = gn(h3, g3_ref[...], b3_ref[...], n3)

        # ---- shortcut: (strided) 1x1 conv -> GN ----------------------------
        if stride == 1:
            xs = x                                   # identity selection: free
        else:
            # TODO(synk): stride>1 path (strided value slice) is not exercised
            # by the test below.
            xs = x.reshape(H, W, Cin_p)[::stride, ::stride, :].reshape(So, Cin_p)
        sc = jnp.dot(xs, ws_ref[...], preferred_element_type=jnp.float32)
        sc = gn(sc, gs_ref[...], bs_ref[...], n3)

        o_ref[0] = jnp.maximum(h3 + sc, 0.0).astype(o_ref.dtype)

    scratch = pltpu.VMEM((H + 2, W_OFF + W + 8, P_p), jnp.float32)
    return kernel, scratch, Ho, Wo, So


def _pad2(a, rows, cols):
    return jnp.pad(a, ((0, rows - a.shape[0]), (0, cols - a.shape[1])))


def bottleneck_ln_pallas(x_nchw, params, stride=1):
    N, Cin, H, W = x_nchw.shape
    P = params["w1"].shape[1]
    Cout = params["w3"].shape[1]
    Cin_p, P_p, Cout_p = _rup(Cin), _rup(P), _rup(Cout)
    S = H * W

    kernel, scratch, Ho, Wo, So = _make_kernel(
        H, W, stride, Cin, P, Cout, Cin_p, P_p, Cout_p)

    # NCHW -> (N, H*W, C) channels-last, zero-padded to the 128-lane width.
    x_flat = jnp.transpose(x_nchw, (0, 2, 3, 1)).reshape(N, S, Cin)
    x_flat = jnp.pad(x_flat, ((0, 0), (0, 0), (0, Cin_p - Cin)))

    # Weights in matmul form, zero-padded.  gamma/beta padded with ZEROS so the
    # padded lanes stay exactly zero through every stage.
    w1 = _pad2(params["w1"], Cin_p, P_p)
    w2 = jnp.pad(params["w2"],
                 ((0, 0), (0, P_p - P), (0, P_p - P))).reshape(9 * P_p, P_p)
    w3 = _pad2(params["w3"], P_p, Cout_p)
    ws = _pad2(params["ws"], Cin_p, Cout_p)
    g1, b1 = _pad2(params["g1"], 1, P_p), _pad2(params["b1"], 1, P_p)
    g2, b2 = _pad2(params["g2"], 1, P_p), _pad2(params["b2"], 1, P_p)
    g3, b3 = _pad2(params["g3"], 1, Cout_p), _pad2(params["b3"], 1, Cout_p)
    gs, bs = _pad2(params["gs"], 1, Cout_p), _pad2(params["bs"], 1, Cout_p)
    consts = (w1, g1, b1, w2, g2, b2, w3, g3, b3, ws, gs, bs)

    def const_spec(a):
        return pl.BlockSpec(a.shape, lambda n, _nd=a.ndim: (0,) * _nd)

    in_specs = [pl.BlockSpec((1, S, Cin_p), lambda n: (n, 0, 0))]
    in_specs += [const_spec(a) for a in consts]

    out = pl.pallas_call(
        kernel,
        out_shape=jax.ShapeDtypeStruct((N, So, Cout_p), x_nchw.dtype),
        grid=(N,),
        in_specs=in_specs,
        out_specs=pl.BlockSpec((1, So, Cout_p), lambda n: (n, 0, 0)),
        scratch_shapes=[scratch],
        compiler_params=pltpu.CompilerParams(
            dimension_semantics=("parallel",),
            vmem_limit_bytes=32 * 1024 * 1024),
    )(x_flat, *consts)

    # (N, Ho*Wo, Cout_p) -> slice real channels -> NCHW
    out = out[:, :, :Cout].reshape(N, Ho, Wo, Cout)
    return jnp.transpose(out, (0, 3, 1, 2))


def init_params(key, in_planes, planes, expansion=4):
    out = expansion * planes
    ks = jax.random.split(key, 5)
    kg = jax.random.split(ks[4], 8)
    s = 0.1
    g_init = lambda k, c: 1.0 + 0.05 * jax.random.normal(k, (1, c), jnp.float32)
    b_init = lambda k, c: 0.05 * jax.random.normal(k, (1, c), jnp.float32)
    return dict(
        # weights stored in "channels-in x channels-out" matmul form;
        # w2 holds the 9 taps in (kh*3+kw, Cin, Cout) order (== HWIO flattened).
        w1=s * jax.random.normal(ks[0], (in_planes, planes), jnp.float32),
        w2=s * jax.random.normal(ks[1], (9, planes, planes), jnp.float32),
        w3=s * jax.random.normal(ks[2], (planes, out), jnp.float32),
        ws=s * jax.random.normal(ks[3], (in_planes, out), jnp.float32),
        g1=g_init(kg[0], planes), b1=b_init(kg[1], planes),
        g2=g_init(kg[2], planes), b2=b_init(kg[3], planes),
        g3=g_init(kg[4], out), b3=b_init(kg[5], out),
        gs=g_init(kg[6], out), bs=b_init(kg[7], out),
    )


def bottleneck_ln_reference(x_nchw, params, stride=1):
    """Pure-JAX f32 reference (matches the PyTorch forward) for validation."""
    hi = jax.lax.Precision.HIGHEST
    x = jnp.transpose(x_nchw, (0, 2, 3, 1))  # NHWC

    def conv(inp, w_hwio, s, pad):
        return jax.lax.conv_general_dilated(
            inp, w_hwio, (s, s), [(pad, pad), (pad, pad)],
            dimension_numbers=("NHWC", "HWIO", "NHWC"), precision=hi)

    def gn(inp, g, b):
        mu = jnp.mean(inp, axis=(1, 2, 3), keepdims=True)
        var = jnp.mean((inp - mu) ** 2, axis=(1, 2, 3), keepdims=True)
        return ((inp - mu) * jax.lax.rsqrt(var + EPS)
                * g.reshape(1, 1, 1, -1) + b.reshape(1, 1, 1, -1))

    P = params["w1"].shape[1]
    w1 = params["w1"].reshape(1, 1, *params["w1"].shape)
    w2 = params["w2"].reshape(3, 3, P, P)
    w3 = params["w3"].reshape(1, 1, *params["w3"].shape)
    ws = params["ws"].reshape(1, 1, *params["ws"].shape)

    h = jax.nn.relu(gn(conv(x, w1, 1, 0), params["g1"], params["b1"]))
    h = jax.nn.relu(gn(conv(h, w2, stride, 1), params["g2"], params["b2"]))
    h = gn(conv(h, w3, 1, 0), params["g3"], params["b3"])
    sc = gn(conv(x, ws, stride, 0), params["gs"], params["bs"])
    return jnp.transpose(jax.nn.relu(h + sc), (0, 3, 1, 2))


if __name__ == "__main__":
    key = jax.random.PRNGKey(0)
    kx, kp = jax.random.split(key)

    # Small shapes consistent with Bottleneck_LN(in_planes=4, planes=4, stride=1)
    N, Cin, H, W = 2, 4, 16, 16
    planes, stride = 4, 1

    x = jax.random.normal(kx, (N, Cin, H, W), jnp.float32)
    params = init_params(kp, Cin, planes)

    out = bottleneck_ln_pallas(x, params, stride=stride)
    out = jax.block_until_ready(out)

    ref = bottleneck_ln_reference(x, params, stride=stride)
    # The kernel's matmuls use the TPU's native bf16 MXU path (f32 accumulate),
    # per the performance review (precision=HIGHEST removed), so parity vs. the
    # f32 reference is at the bf16-rounding level (~1e-2 worst-case through the
    # four GroupNorm stages), not 1e-4.
    np.testing.assert_allclose(np.asarray(out), np.asarray(ref),
                               atol=5e-2, rtol=5e-2)
    print("KERNEL_OK")
</pallas_src>

<mosaic_0001>
module attributes {stable_mosaic.version = 11 : i64} {
  func.func @kernel(%arg0: i32, %arg1: memref<1x256x128xf32, #tpu.memory_space<vmem>>, %arg2: memref<128x128xf32, #tpu.memory_space<vmem>>, %arg3: memref<1x128xf32, #tpu.memory_space<vmem>>, %arg4: memref<1x128xf32, #tpu.memory_space<vmem>>, %arg5: memref<1152x128xf32, #tpu.memory_space<vmem>>, %arg6: memref<1x128xf32, #tpu.memory_space<vmem>>, %arg7: memref<1x128xf32, #tpu.memory_space<vmem>>, %arg8: memref<128x128xf32, #tpu.memory_space<vmem>>, %arg9: memref<1x128xf32, #tpu.memory_space<vmem>>, %arg10: memref<1x128xf32, #tpu.memory_space<vmem>>, %arg11: memref<128x128xf32, #tpu.memory_space<vmem>>, %arg12: memref<1x128xf32, #tpu.memory_space<vmem>>, %arg13: memref<1x128xf32, #tpu.memory_space<vmem>>, %arg14: memref<1x256x128xf32, #tpu.memory_space<vmem>>, %arg15: memref<18x32x128xf32, #tpu.memory_space<vmem>>) attributes {dimension_semantics = [#tpu.dimension_semantics<parallel>], iteration_bounds = array<i64: 2>, scalar_prefetch = 0 : i64, scratch_operands = 1 : i64, tpu.core_type = #tpu.core_type<tc>, window_params = [{transform_indices = @transform_0, window_bounds = array<i64: 1, 256, 128>}, {pipeline_mode = #tpu.pipeline_mode<synchronous>, transform_indices = @transform_1, window_bounds = array<i64: 128, 128>}, {pipeline_mode = #tpu.pipeline_mode<synchronous>, transform_indices = @transform_2, window_bounds = array<i64: 1, 128>}, {pipeline_mode = #tpu.pipeline_mode<synchronous>, transform_indices = @transform_3, window_bounds = array<i64: 1, 128>}, {pipeline_mode = #tpu.pipeline_mode<synchronous>, transform_indices = @transform_4, window_bounds = array<i64: 1152, 128>}, {pipeline_mode = #tpu.pipeline_mode<synchronous>, transform_indices = @transform_5, window_bounds = array<i64: 1, 128>}, {pipeline_mode = #tpu.pipeline_mode<synchronous>, transform_indices = @transform_6, window_bounds = array<i64: 1, 128>}, {pipeline_mode = #tpu.pipeline_mode<synchronous>, transform_indices = @transform_7, window_bounds = array<i64: 128, 128>}, {pipeline_mode = #tpu.pipeline_mode<synchronous>, transform_indices = @transform_8, window_bounds = array<i64: 1, 128>}, {pipeline_mode = #tpu.pipeline_mode<synchronous>, transform_indices = @transform_9, window_bounds = array<i64: 1, 128>}, {pipeline_mode = #tpu.pipeline_mode<synchronous>, transform_indices = @transform_10, window_bounds = array<i64: 128, 128>}, {pipeline_mode = #tpu.pipeline_mode<synchronous>, transform_indices = @transform_11, window_bounds = array<i64: 1, 128>}, {pipeline_mode = #tpu.pipeline_mode<synchronous>, transform_indices = @transform_12, window_bounds = array<i64: 1, 128>}, {transform_indices = @transform_13, window_bounds = array<i64: 1, 256, 128>}]} {
    %c0 = arith.constant 0 : index
    %c0_0 = arith.constant 0 : index
    %c0_1 = arith.constant 0 : index
    %0 = vector.load %arg1[%c0, %c0_0, %c0_1] : memref<1x256x128xf32, #tpu.memory_space<vmem>>, vector<1x256x128xf32>
    %1 = vector.shape_cast %0 : vector<1x256x128xf32> to vector<256x128xf32>
    %c0_2 = arith.constant 0 : index
    %c0_3 = arith.constant 0 : index
    %2 = vector.load %arg2[%c0_2, %c0_3] : memref<128x128xf32, #tpu.memory_space<vmem>>, vector<128x128xf32>
    %cst = arith.constant dense<0.000000e+00> : vector<256x128xf32>
    %3 = tpu.matmul %1, %2, %cst {dimension_numbers = #tpu.dot_dimension_numbers<[1], [0], [0], [1], [0, 0, 1, 1], [], []>} : vector<256x128xf32>, vector<128x128xf32>, vector<256x128xf32> -> vector<256x128xf32>
    %c0_4 = arith.constant 0 : index
    %c0_5 = arith.constant 0 : index
    %4 = vector.load %arg3[%c0_4, %c0_5] : memref<1x128xf32, #tpu.memory_space<vmem>>, vector<1x128xf32>
    %c0_6 = arith.constant 0 : index
    %c0_7 = arith.constant 0 : index
    %5 = vector.load %arg4[%c0_6, %c0_7] : memref<1x128xf32, #tpu.memory_space<vmem>>, vector<1x128xf32>
    %6 = vector.shape_cast %3 : vector<256x128xf32> to vector<1x256x128xf32>
    %cst_8 = arith.constant dense<0.000000e+00> : vector<1xf32>
    %7 = vector.multi_reduction <add>, %6, %cst_8 [1, 2] : vector<1x256x128xf32> to vector<1xf32>
    %8 = vector.shape_cast %7 : vector<1xf32> to vector<1x1x1xf32>
    %9 = vector.extract %8[0, 0, 0] : f32 from vector<1x1x1xf32>
    %10 = arith.mulf %3, %3 : vector<256x128xf32>
    %11 = vector.shape_cast %10 : vector<256x128xf32> to vector<1x256x128xf32>
    %cst_9 = arith.constant dense<0.000000e+00> : vector<1xf32>
    %12 = vector.multi_reduction <add>, %11, %cst_9 [1, 2] : vector<1x256x128xf32> to vector<1xf32>
    %13 = vector.shape_cast %12 : vector<1xf32> to vector<1x1x1xf32>
    %14 = vector.extract %13[0, 0, 0] : f32 from vector<1x1x1xf32>
    %cst_10 = arith.constant 1.024000e+03 : f32
    %15 = arith.divf %9, %cst_10 : f32
    %cst_11 = arith.constant 1.024000e+03 : f32
    %16 = arith.divf %14, %cst_11 : f32
    %17 = arith.mulf %15, %15 : f32
    %18 = arith.subf %16, %17 : f32
    %cst_12 = arith.constant 9.99999974E-6 : f32
    %19 = arith.addf %18, %cst_12 : f32
    %20 = math.rsqrt %19 : f32
    %21 = vector.broadcast %20 : f32 to vector<1x128xf32>
    %22 = arith.mulf %4, %21 : vector<1x128xf32>
    %23 = vector.broadcast %15 : f32 to vector<1x128xf32>
    %24 = arith.mulf %23, %22 : vector<1x128xf32>
    %25 = arith.subf %5, %24 : vector<1x128xf32>
    %26 = vector.broadcast %22 : vector<1x128xf32> to vector<256x128xf32>
    %27 = arith.mulf %3, %26 : vector<256x128xf32>
    %28 = vector.broadcast %25 : vector<1x128xf32> to vector<256x128xf32>
    %29 = arith.addf %27, %28 : vector<256x128xf32>
    %cst_13 = arith.constant 0.000000e+00 : f32
    %30 = vector.broadcast %cst_13 : f32 to vector<256x128xf32>
    %31 = arith.maximumf %29, %30 : vector<256x128xf32>
    %cst_14 = arith.constant 0.000000e+00 : f32
    %32 = vector.broadcast %cst_14 : f32 to vector<18x32x128xf32>
    %c0_15 = arith.constant 0 : index
    %c0_16 = arith.constant 0 : index
    %c0_17 = arith.constant 0 : index
    %33 = vector.load %arg15[%c0_15, %c0_16, %c0_17] : memref<18x32x128xf32, #tpu.memory_space<vmem>>, vector<18x32x128xf32>
    tpu.vector_store %arg15[%c0_15, %c0_16, %c0_17], %32 {strides = array<i32>} : memref<18x32x128xf32, #tpu.memory_space<vmem>>, vector<18x32x128xf32>,
    %34 = vector.shape_cast %31 : vector<256x128xf32> to vector<16x16x128xf32>
    %c1 = arith.constant 1 : index
    %c8 = arith.constant 8 : index
    %c0_18 = arith.constant 0 : index
    %35 = vector.load %arg15[%c1, %c8, %c0_18] : memref<18x32x128xf32, #tpu.memory_space<vmem>>, vector<16x16x128xf32>
    tpu.vector_store %arg15[%c1, %c8, %c0_18], %34 {strides = array<i32>} : memref<18x32x128xf32, #tpu.memory_space<vmem>>, vector<16x16x128xf32>,
    %c0_19 = arith.constant 0 : index
    %c7 = arith.constant 7 : index
    %c0_20 = arith.constant 0 : index
    %36 = vector.load %arg15[%c0_19, %c7, %c0_20] : memref<18x32x128xf32, #tpu.memory_space<vmem>>, vector<16x16x128xf32>
    %c0_21 = arith.constant 0 : index
    %c8_22 = arith.constant 8 : index
    %c0_23 = arith.constant 0 : index
    %37 = vector.load %arg15[%c0_21, %c8_22, %c0_23] : memref<18x32x128xf32, #tpu.memory_space<vmem>>, vector<16x16x128xf32>
    %c0_24 = arith.constant 0 : index
    %c9 = arith.constant 9 : index
    %c0_25 = arith.constant 0 : index
    %38 = vector.load %arg15[%c0_24, %c9, %c0_25] : memref<18x32x128xf32, #tpu.memory_space<vmem>>, vector<16x16x128xf32>
    %c1_26 = arith.constant 1 : index
    %c7_27 = arith.constant 7 : index
    %c0_28 = arith.constant 0 : index
    %39 = vector.load %arg15[%c1_26, %c7_27, %c0_28] : memref<18x32x128xf32, #tpu.memory_space<vmem>>, vector<16x16x128xf32>
    %c1_29 = arith.constant 1 : index
    %c8_30 = arith.constant 8 : index
    %c0_31 = arith.constant 0 : index
    %40 = vector.load %arg15[%c1_29, %c8_30, %c0_31] : memref<18x32x128xf32, #tpu.memory_space<vmem>>, vector<16x16x128xf32>
    %c1_32 = arith.constant 1 : index
    %c9_33 = arith.constant 9 : index
    %c0_34 = arith.constant 0 : index
    %41 = vector.load %arg15[%c1_32, %c9_33, %c0_34] : memref<18x32x128xf32, #tpu.memory_space<vmem>>, vector<16x16x128xf32>
    %c2 = arith.constant 2 : index
    %c7_35 = arith.constant 7 : index
    %c0_36 = arith.constant 0 : index
    %42 = vector.load %arg15[%c2, %c7_35, %c0_36] : memref<18x32x128xf32, #tpu.memory_space<vmem>>, vector<16x16x128xf32>
    %c2_37 = arith.constant 2 : index
    %c8_38 = arith.constant 8 : index
    %c0_39 = arith.constant 0 : index
    %43 = vector.load %arg15[%c2_37, %c8_38, %c0_39] : memref<18x32x128xf32, #tpu.memory_space<vmem>>, vector<16x16x128xf32>
    %c2_40 = arith.constant 2 : index
    %c9_41 = arith.constant 9 : index
    %c0_42 = arith.constant 0 : index
    %44 = vector.load %arg15[%c2_40, %c9_41, %c0_42] : memref<18x32x128xf32, #tpu.memory_space<vmem>>, vector<16x16x128xf32>
    %45 = tpu.concatenate %36, %37, %38, %39, %40, %41, %42, %43, %44 in 2 : vector<16x16x128xf32>, vector<16x16x128xf32>, vector<16x16x128xf32>, vector<16x16x128xf32>, vector<16x16x128xf32>, vector<16x16x128xf32>, vector<16x16x128xf32>, vector<16x16x128xf32>, vector<16x16x128xf32> -> vector<16x16x1152xf32>
    %46 = vector.shape_cast %45 : vector<16x16x1152xf32> to vector<256x1152xf32>
    %c0_43 = arith.constant 0 : index
    %c0_44 = arith.constant 0 : index
    %47 = vector.load %arg5[%c0_43, %c0_44] : memref<1152x128xf32, #tpu.memory_space<vmem>>, vector<1152x128xf32>
    %cst_45 = arith.constant dense<0.000000e+00> : vector<256x128xf32>
    %48 = tpu.matmul %46, %47, %cst_45 {dimension_numbers = #tpu.dot_dimension_numbers<[1], [0], [0], [1], [0, 0, 1, 1], [], []>} : vector<256x1152xf32>, vector<1152x128xf32>, vector<256x128xf32> -> vector<256x128xf32>
    %c0_46 = arith.constant 0 : index
    %c0_47 = arith.constant 0 : index
    %49 = vector.load %arg6[%c0_46, %c0_47] : memref<1x128xf32, #tpu.memory_space<vmem>>, vector<1x128xf32>
    %c0_48 = arith.constant 0 : index
    %c0_49 = arith.constant 0 : index
    %50 = vector.load %arg7[%c0_48, %c0_49] : memref<1x128xf32, #tpu.memory_space<vmem>>, vector<1x128xf32>
    %51 = vector.shape_cast %48 : vector<256x128xf32> to vector<1x256x128xf32>
    %cst_50 = arith.constant dense<0.000000e+00> : vector<1xf32>
    %52 = vector.multi_reduction <add>, %51, %cst_50 [1, 2] : vector<1x256x128xf32> to vector<1xf32>
    %53 = vector.shape_cast %52 : vector<1xf32> to vector<1x1x1xf32>
    %54 = vector.extract %53[0, 0, 0] : f32 from vector<1x1x1xf32>
    %55 = arith.mulf %48, %48 : vector<256x128xf32>
    %56 = vector.shape_cast %55 : vector<256x128xf32> to vector<1x256x128xf32>
    %cst_51 = arith.constant dense<0.000000e+00> : vector<1xf32>
    %57 = vector.multi_reduction <add>, %56, %cst_51 [1, 2] : vector<1x256x128xf32> to vector<1xf32>
    %58 = vector.shape_cast %57 : vector<1xf32> to vector<1x1x1xf32>
    %59 = vector.extract %58[0, 0, 0] : f32 from vector<1x1x1xf32>
    %cst_52 = arith.constant 1.024000e+03 : f32
    %60 = arith.divf %54, %cst_52 : f32
    %cst_53 = arith.constant 1.024000e+03 : f32
    %61 = arith.divf %59, %cst_53 : f32
    %62 = arith.mulf %60, %60 : f32
    %63 = arith.subf %61, %62 : f32
    %cst_54 = arith.constant 9.99999974E-6 : f32
    %64 = arith.addf %63, %cst_54 : f32
    %65 = math.rsqrt %64 : f32
    %66 = vector.broadcast %65 : f32 to vector<1x128xf32>
    %67 = arith.mulf %49, %66 : vector<1x128xf32>
    %68 = vector.broadcast %60 : f32 to vector<1x128xf32>
    %69 = arith.mulf %68, %67 : vector<1x128xf32>
    %70 = arith.subf %50, %69 : vector<1x128xf32>
    %71 = vector.broadcast %67 : vector<1x128xf32> to vector<256x128xf32>
    %72 = arith.mulf %48, %71 : vector<256x128xf32>
    %73 = vector.broadcast %70 : vector<1x128xf32> to vector<256x128xf32>
    %74 = arith.addf %72, %73 : vector<256x128xf32>
    %cst_55 = arith.constant 0.000000e+00 : f32
    %75 = vector.broadcast %cst_55 : f32 to vector<256x128xf32>
    %76 = arith.maximumf %74, %75 : vector<256x128xf32>
    %c0_56 = arith.constant 0 : index
    %c0_57 = arith.constant 0 : index
    %77 = vector.load %arg8[%c0_56, %c0_57] : memref<128x128xf32, #tpu.memory_space<vmem>>, vector<128x128xf32>
    %cst_58 = arith.constant dense<0.000000e+00> : vector<256x128xf32>
    %78 = tpu.matmul %76, %77, %cst_58 {dimension_numbers = #tpu.dot_dimension_numbers<[1], [0], [0], [1], [0, 0, 1, 1], [], []>} : vector<256x128xf32>, vector<128x128xf32>, vector<256x128xf32> -> vector<256x128xf32>
    %c0_59 = arith.constant 0 : index
    %c0_60 = arith.constant 0 : index
    %79 = vector.load %arg9[%c0_59, %c0_60] : memref<1x128xf32, #tpu.memory_space<vmem>>, vector<1x128xf32>
    %c0_61 = arith.constant 0 : index
    %c0_62 = arith.constant 0 : index
    %80 = vector.load %arg10[%c0_61, %c0_62] : memref<1x128xf32, #tpu.memory_space<vmem>>, vector<1x128xf32>
    %81 = vector.shape_cast %78 : vector<256x128xf32> to vector<1x256x128xf32>
    %cst_63 = arith.constant dense<0.000000e+00> : vector<1xf32>
    %82 = vector.multi_reduction <add>, %81, %cst_63 [1, 2] : vector<1x256x128xf32> to vector<1xf32>
    %83 = vector.shape_cast %82 : vector<1xf32> to vector<1x1x1xf32>
    %84 = vector.extract %83[0, 0, 0] : f32 from vector<1x1x1xf32>
    %85 = arith.mulf %78, %78 : vector<256x128xf32>
    %86 = vector.shape_cast %85 : vector<256x128xf32> to vector<1x256x128xf32>
    %cst_64 = arith.constant dense<0.000000e+00> : vector<1xf32>
    %87 = vector.multi_reduction <add>, %86, %cst_64 [1, 2] : vector<1x256x128xf32> to vector<1xf32>
    %88 = vector.shape_cast %87 : vector<1xf32> to vector<1x1x1xf32>
    %89 = vector.extract %88[0, 0, 0] : f32 from vector<1x1x1xf32>
    %cst_65 = arith.constant 4.096000e+03 : f32
    %90 = arith.divf %84, %cst_65 : f32
    %cst_66 = arith.constant 4.096000e+03 : f32
    %91 = arith.divf %89, %cst_66 : f32
    %92 = arith.mulf %90, %90 : f32
    %93 = arith.subf %91, %92 : f32
    %cst_67 = arith.constant 9.99999974E-6 : f32
    %94 = arith.addf %93, %cst_67 : f32
    %95 = math.rsqrt %94 : f32
    %96 = vector.broadcast %95 : f32 to vector<1x128xf32>
    %97 = arith.mulf %79, %96 : vector<1x128xf32>
    %98 = vector.broadcast %90 : f32 to vector<1x128xf32>
    %99 = arith.mulf %98, %97 : vector<1x128xf32>
    %100 = arith.subf %80, %99 : vector<1x128xf32>
    %101 = vector.broadcast %97 : vector<1x128xf32> to vector<256x128xf32>
    %102 = arith.mulf %78, %101 : vector<256x128xf32>
    %103 = vector.broadcast %100 : vector<1x128xf32> to vector<256x128xf32>
    %104 = arith.addf %102, %103 : vector<256x128xf32>
    %c0_68 = arith.constant 0 : index
    %c0_69 = arith.constant 0 : index
    %105 = vector.load %arg11[%c0_68, %c0_69] : memref<128x128xf32, #tpu.memory_space<vmem>>, vector<128x128xf32>
    %cst_70 = arith.constant dense<0.000000e+00> : vector<256x128xf32>
    %106 = tpu.matmul %1, %105, %cst_70 {dimension_numbers = #tpu.dot_dimension_numbers<[1], [0], [0], [1], [0, 0, 1, 1], [], []>} : vector<256x128xf32>, vector<128x128xf32>, vector<256x128xf32> -> vector<256x128xf32>
    %c0_71 = arith.constant 0 : index
    %c0_72 = arith.constant 0 : index
    %107 = vector.load %arg12[%c0_71, %c0_72] : memref<1x128xf32, #tpu.memory_space<vmem>>, vector<1x128xf32>
    %c0_73 = arith.constant 0 : index
    %c0_74 = arith.constant 0 : index
    %108 = vector.load %arg13[%c0_73, %c0_74] : memref<1x128xf32, #tpu.memory_space<vmem>>, vector<1x128xf32>
    %109 = vector.shape_cast %106 : vector<256x128xf32> to vector<1x256x128xf32>
    %cst_75 = arith.constant dense<0.000000e+00> : vector<1xf32>
    %110 = vector.multi_reduction <add>, %109, %cst_75 [1, 2] : vector<1x256x128xf32> to vector<1xf32>
    %111 = vector.shape_cast %110 : vector<1xf32> to vector<1x1x1xf32>
    %112 = vector.extract %111[0, 0, 0] : f32 from vector<1x1x1xf32>
    %113 = arith.mulf %106, %106 : vector<256x128xf32>
    %114 = vector.shape_cast %113 : vector<256x128xf32> to vector<1x256x128xf32>
    %cst_76 = arith.constant dense<0.000000e+00> : vector<1xf32>
    %115 = vector.multi_reduction <add>, %114, %cst_76 [1, 2] : vector<1x256x128xf32> to vector<1xf32>
    %116 = vector.shape_cast %115 : vector<1xf32> to vector<1x1x1xf32>
    %117 = vector.extract %116[0, 0, 0] : f32 from vector<1x1x1xf32>
    %cst_77 = arith.constant 4.096000e+03 : f32
    %118 = arith.divf %112, %cst_77 : f32
    %cst_78 = arith.constant 4.096000e+03 : f32
    %119 = arith.divf %117, %cst_78 : f32
    %120 = arith.mulf %118, %118 : f32
    %121 = arith.subf %119, %120 : f32
    %cst_79 = arith.constant 9.99999974E-6 : f32
    %122 = arith.addf %121, %cst_79 : f32
    %123 = math.rsqrt %122 : f32
    %124 = vector.broadcast %123 : f32 to vector<1x128xf32>
    %125 = arith.mulf %107, %124 : vector<1x128xf32>
    %126 = vector.broadcast %118 : f32 to vector<1x128xf32>
    %127 = arith.mulf %126, %125 : vector<1x128xf32>
    %128 = arith.subf %108, %127 : vector<1x128xf32>
    %129 = vector.broadcast %125 : vector<1x128xf32> to vector<256x128xf32>
    %130 = arith.mulf %106, %129 : vector<256x128xf32>
    %131 = vector.broadcast %128 : vector<1x128xf32> to vector<256x128xf32>
    %132 = arith.addf %130, %131 : vector<256x128xf32>
    %133 = arith.addf %104, %132 : vector<256x128xf32>
    %cst_80 = arith.constant 0.000000e+00 : f32
    %134 = vector.broadcast %cst_80 : f32 to vector<256x128xf32>
    %135 = arith.maximumf %133, %134 : vector<256x128xf32>
    %c0_81 = arith.constant 0 : index
    %c0_82 = arith.constant 0 : index
    %c0_83 = arith.constant 0 : index
    %136 = vector.load %arg14[%c0_81, %c0_82, %c0_83] : memref<1x256x128xf32, #tpu.memory_space<vmem>>, vector<1x256x128xf32>
    %137 = vector.shape_cast %136 : vector<1x256x128xf32> to vector<256x128xf32>
    %138 = vector.shape_cast %135 : vector<256x128xf32> to vector<1x256x128xf32>
    tpu.vector_store %arg14[%c0_81, %c0_82, %c0_83], %138 {strides = array<i32>} : memref<1x256x128xf32, #tpu.memory_space<vmem>>, vector<1x256x128xf32>,
    return
  }
  func.func @transform_0(%arg0: i32) -> (i32, i32, i32) {
    %c0_i32 = arith.constant 0 : i32
    %c0_i32_0 = arith.constant 0 : i32
    %c0_i32_1 = arith.constant 0 : i32
    return %arg0, %c0_i32, %c0_i32_0 : i32, i32, i32
  }
  func.func @transform_1(%arg0: i32) -> (i32, i32) {
    %c0_i32 = arith.constant 0 : i32
    %c0_i32_0 = arith.constant 0 : i32
    %c0_i32_1 = arith.constant 0 : i32
    return %c0_i32, %c0_i32_0 : i32, i32
  }
  func.func @transform_2(%arg0: i32) -> (i32, i32) {
    %c0_i32 = arith.constant 0 : i32
    %c0_i32_0 = arith.constant 0 : i32
    %c0_i32_1 = arith.constant 0 : i32
    return %c0_i32, %c0_i32_0 : i32, i32
  }
  func.func @transform_3(%arg0: i32) -> (i32, i32) {
    %c0_i32 = arith.constant 0 : i32
    %c0_i32_0 = arith.constant 0 : i32
    %c0_i32_1 = arith.constant 0 : i32
    return %c0_i32, %c0_i32_0 : i32, i32
  }
  func.func @transform_4(%arg0: i32) -> (i32, i32) {
    %c0_i32 = arith.constant 0 : i32
    %c0_i32_0 = arith.constant 0 : i32
    %c0_i32_1 = arith.constant 0 : i32
    return %c0_i32, %c0_i32_0 : i32, i32
  }
  func.func @transform_5(%arg0: i32) -> (i32, i32) {
    %c0_i32 = arith.constant 0 : i32
    %c0_i32_0 = arith.constant 0 : i32
    %c0_i32_1 = arith.constant 0 : i32
    return %c0_i32, %c0_i32_0 : i32, i32
  }
  func.func @transform_6(%arg0: i32) -> (i32, i32) {
    %c0_i32 = arith.constant 0 : i32
    %c0_i32_0 = arith.constant 0 : i32
    %c0_i32_1 = arith.constant 0 : i32
    return %c0_i32, %c0_i32_0 : i32, i32
  }
  func.func @transform_7(%arg0: i32) -> (i32, i32) {
    %c0_i32 = arith.constant 0 : i32
    %c0_i32_0 = arith.constant 0 : i32
    %c0_i32_1 = arith.constant 0 : i32
    return %c0_i32, %c0_i32_0 : i32, i32
  }
  func.func @transform_8(%arg0: i32) -> (i32, i32) {
    %c0_i32 = arith.constant 0 : i32
    %c0_i32_0 = arith.constant 0 : i32
    %c0_i32_1 = arith.constant 0 : i32
    return %c0_i32, %c0_i32_0 : i32, i32
  }
  func.func @transform_9(%arg0: i32) -> (i32, i32) {
    %c0_i32 = arith.constant 0 : i32
    %c0_i32_0 = arith.constant 0 : i32
    %c0_i32_1 = arith.constant 0 : i32
    return %c0_i32, %c0_i32_0 : i32, i32
  }
  func.func @transform_10(%arg0: i32) -> (i32, i32) {
    %c0_i32 = arith.constant 0 : i32
    %c0_i32_0 = arith.constant 0 : i32
    %c0_i32_1 = arith.constant 0 : i32
    return %c0_i32, %c0_i32_0 : i32, i32
  }
  func.func @transform_11(%arg0: i32) -> (i32, i32) {
    %c0_i32 = arith.constant 0 : i32
    %c0_i32_0 = arith.constant 0 : i32
    %c0_i32_1 = arith.constant 0 : i32
    return %c0_i32, %c0_i32_0 : i32, i32
  }
  func.func @transform_12(%arg0: i32) -> (i32, i32) {
    %c0_i32 = arith.constant 0 : i32
    %c0_i32_0 = arith.constant 0 : i32
    %c0_i32_1 = arith.constant 0 : i32
    return %c0_i32, %c0_i32_0 : i32, i32
  }
  func.func @transform_13(%arg0: i32) -> (i32, i32, i32) {
    %c0_i32 = arith.constant 0 : i32
    %c0_i32_0 = arith.constant 0 : i32
    %c0_i32_1 = arith.constant 0 : i32
    return %arg0, %c0_i32, %c0_i32_0 : i32, i32, i32
  }
}

</mosaic_0001>

<llo_original>
// kernel: tpu_custom_call.1
$region0: #{tpu_custom_call.1}
  #allocation0 [shape = 'u32[]', space=smem, size = 0x4, offset = 0x4, fixed_abs, tag = 'smem constant byte address 0x4 - core index']
  #allocation1 [shape = 'u32[144,128]{1,0:T(1,128)}', space=vmem, size = 0x12000, scoped, tag = 'internal scratch']
  #allocation2 [shape = 'f32[18,32,128]{2,1,0:T(8,128)}', space=vmem, size = 0x48000, scoped, tag = 'scratch operand']
  %s0 = inlined_call_operand.hbm [shape: f32[2,256,128], index: 0, kind: input, shape index: {}]
  %s1 = inlined_call_operand.hbm [shape: f32[128,128], index: 1, kind: input, shape index: {}]
  %s2 = inlined_call_operand.vmem [shape: f32[1,128], index: 2, kind: input, shape index: {}]
  %s3 = inlined_call_operand.vmem [shape: f32[1,128], index: 3, kind: input, shape index: {}]
  %s4 = inlined_call_operand.hbm [shape: f32[1152,128], index: 4, kind: input, shape index: {}]
  %s5 = inlined_call_operand.vmem [shape: f32[1,128], index: 5, kind: input, shape index: {}]
  %s6 = inlined_call_operand.vmem [shape: f32[1,128], index: 6, kind: input, shape index: {}]
  %s7 = inlined_call_operand.hbm [shape: f32[128,128], index: 7, kind: input, shape index: {}]
  %s8 = inlined_call_operand.vmem [shape: f32[1,128], index: 8, kind: input, shape index: {}]
  %s9 = inlined_call_operand.vmem [shape: f32[1,128], index: 9, kind: input, shape index: {}]
  %s10 = inlined_call_operand.hbm [shape: f32[128,128], index: 10, kind: input, shape index: {}]
  %s11 = inlined_call_operand.vmem [shape: f32[1,128], index: 11, kind: input, shape index: {}]
  %s12 = inlined_call_operand.vmem [shape: f32[1,128], index: 12, kind: input, shape index: {}]
  %s13 = inlined_call_operand.hbm [shape: f32[2,256,128], index: 13, kind: output, shape index: {}]
  %s14 = sld [smem:[#allocation0]]
  $region105: #{tpu_custom_call.1} parent=0
    _
  %s16 = ssub.s32 1, %s14
  %s17 = scalar_select 0, %s16, %s14
  $region1: #{tpu_custom_call.1} parent=0
    #allocation3 [shape = 'u8[262144]{0}', space=vmem, size = 0x40000, scoped, tag = 'input window, operand 0']
    #allocation4 [shape = 's32[2]{0}', space=sflag, size = 0x8, scoped, tag = 'scoped memory for tpu_custom_call.1']
    #allocation5 [shape = 's32[2]{0}', space=sflag, size = 0x8, scoped, tag = 'scoped memory for tpu_custom_call.1']
    #allocation6 [shape = 'u8[65536]{0}', space=vmem, size = 0x10000, scoped, tag = 'input window, operand 1, single buffered']
    #allocation7 [shape = 's32[1]{0}', space=sflag, size = 0x4, scoped, tag = 'scoped memory for tpu_custom_call.1']
    #allocation8 [shape = 'u8[589824]{0}', space=vmem, size = 0x90000, scoped, tag = 'input window, operand 4, single buffered']
    #allocation9 [shape = 'u8[65536]{0}', space=vmem, size = 0x10000, scoped, tag = 'input window, operand 7, single buffered']
    #allocation10 [shape = 's32[1]{0}', space=sflag, size = 0x4, scoped, tag = 'scoped memory for tpu_custom_call.1']
    #allocation11 [shape = 'u8[65536]{0}', space=vmem, size = 0x10000, scoped, tag = 'input window, operand 10, single buffered']
    #allocation12 [shape = 'u8[262144]{0}', space=vmem, size = 0x40000, scoped, tag = 'output window, operand 0']
    %18 = vsyncpa [#allocation4], 0
    %s19 = scalar_lea.sflag [#allocation4], 1
    %20 = vsyncpa %s19, 0
    %21 = vsyncpa [#allocation7], 0
    %22 = vsyncpa [#allocation10], 0
    %23 = vsyncpa [#allocation5], 0
    %s24 = scalar_lea.sflag [#allocation5], 1
    %25 = vsyncpa %s24, 0
    loop: start=0, step=1, limit=4
    $region2: #{tpu_custom_call.1} parent=1 // loop_pre_header
      _
    $region3: #{tpu_custom_call.1} parent=1 // loop_header
      %s27 = sphi 0, %s31
      %p28 = scmp.ge.s32.totalorder %s27, 4
      %s37 = sphi 0, %s39
      %s40 = sphi 0, %s37
      %s41 = sphi 0, %s40
      %s57 = sphi 0, %s41
      %s61 = sphi 0, %s61
      %s63 = sphi 0, %s61
      %s64 = sphi 0, %s63
      %s78 = sphi 0, %s64
      %s82 = sphi 0, %s82
      %s84 = sphi 0, %s82
      %s85 = sphi 0, %s84
      %s99 = sphi 0, %s85
      %s103 = sphi 0, %s103
      %s105 = sphi 0, %s103
      %s106 = sphi 0, %s105
      %s120 = sphi 0, %s106
      %s124 = sphi 0, %s124
      %s126 = sphi 0, %s124
      %s127 = sphi 0, %s126
      %s141 = sphi 0, %s127
      %s145 = sphi 0, %s145
      %s147 = sphi 0, %s145
      %s148 = sphi 0, %s147
      %s162 = sphi 0, %s148
      %s166 = sphi 0, %s166
      %s168 = sphi 0, %s166
      %s169 = sphi 0, %s168
      %s183 = sphi 0, %s169
      %s187 = sphi 0, %s187
      %s189 = sphi 0, %s187
      %s190 = sphi 0, %s189
      %s204 = sphi 0, %s190
      %s208 = sphi 0, %s208
      %s210 = sphi 0, %s208
      %s211 = sphi 0, %s210
      %s225 = sphi 0, %s211
      %s229 = sphi 0, %s229
      %s231 = sphi 0, %s229
      %s232 = sphi 0, %s231
      %s246 = sphi 0, %s232
      %s250 = sphi 0, %s250
      %s252 = sphi 0, %s250
      %s253 = sphi 0, %s252
      %s267 = sphi 0, %s253
      %s271 = sphi 0, %s271
      %s273 = sphi 0, %s271
      %s274 = sphi 0, %s273
      %s288 = sphi 0, %s274
      %s292 = sphi 0, %s292
      %s294 = sphi 0, %s292
      %s295 = sphi 0, %s294
      %s309 = sphi 0, %s295
      %s315 = sphi 0, %s317
      %s318 = sphi 0, %s315
      %s319 = sphi 0, %s318
      %s335 = sphi 0, %s319
    $region4: #{tpu_custom_call.1} parent=1 // loop_header_branch
      %30 = sbr.rel (%p28) target = $region8
    $region5: #{tpu_custom_call.1} parent=1 // loop_body
      %s32 = ssub.s32 %s27, 1
      %s33 = ssub.s32 %s27, 2
      %s34 = sadd.s32 %s27, 1
      %s35 = ssub.s32 %s27, %s34
      %p36 = scmp.eq.s32.totalorder %s35, 0
      %s38 = sadd.s32 %s37, 1
      %s39 = scalar_select %p36, %s37, %s38
      %p42 = pneg %p36
      %p43 = scmp.eq.s32.totalorder %s27, 1
      %p44 = por %p42, %p43
      %p45 = scmp.ne.s32.totalorder %s37, %s40
      %p46 = scmp.eq.s32.totalorder %s27, 0
      %p47 = por %p45, %p46
      %p48 = scmp.ne.s32.totalorder %s37, %s40
      %p49 = scmp.eq.s32.totalorder %s32, 1
      %p50 = por %p48, %p49
      %p51 = scmp.ne.s32.totalorder %s40, %s41
      %p52 = scmp.eq.s32.totalorder %s32, 0
      %p53 = por %p51, %p52
      %p54 = scmp.ne.s32.totalorder %s40, %s41
      %p55 = scmp.eq.s32.totalorder %s33, 1
      %p56 = por %p54, %p55
      %p58 = scmp.ne.s32.totalorder %s41, %s57
      %p59 = scmp.eq.s32.totalorder %s33, 0
      %p60 = por %p58, %p59
      %s62 = sadd.s32 %s61, 1
      %p65 = scmp.eq.s32.totalorder %s27, 1
      %p66 = scmp.ne.s32.totalorder %s61, %s63
      %p67 = scmp.eq.s32.totalorder %s27, 0
      %p68 = por %p66, %p67
      %p69 = scmp.ne.s32.totalorder %s61, %s63
      %p70 = scmp.eq.s32.totalorder %s32, 1
      %p71 = por %p69, %p70
      %p72 = scmp.ne.s32.totalorder %s63, %s64
      %p73 = scmp.eq.s32.totalorder %s32, 0
      %p74 = por %p72, %p73
      %p75 = scmp.ne.s32.totalorder %s63, %s64
      %p76 = scmp.eq.s32.totalorder %s33, 1
      %p77 = por %p75, %p76
      %p79 = scmp.ne.s32.totalorder %s64, %s78
      %p80 = scmp.eq.s32.totalorder %s33, 0
      %p81 = por %p79, %p80
      %s83 = sadd.s32 %s82, 1
      %p86 = scmp.eq.s32.totalorder %s27, 1
      %p87 = scmp.ne.s32.totalorder %s82, %s84
      %p88 = scmp.eq.s32.totalorder %s27, 0
      %p89 = por %p87, %p88
      %p90 = scmp.ne.s32.totalorder %s82, %s84
      %p91 = scmp.eq.s32.totalorder %s32, 1
      %p92 = por %p90, %p91
      %p93 = scmp.ne.s32.totalorder %s84, %s85
      %p94 = scmp.eq.s32.totalorder %s32, 0
      %p95 = por %p93, %p94
      %p96 = scmp.ne.s32.totalorder %s84, %s85
      %p97 = scmp.eq.s32.totalorder %s33, 1
      %p98 = por %p96, %p97
      %p100 = scmp.ne.s32.totalorder %s85, %s99
      %p101 = scmp.eq.s32.totalorder %s33, 0
      %p102 = por %p100, %p101
      %s104 = sadd.s32 %s103, 1
      %p107 = scmp.eq.s32.totalorder %s27, 1
      %p108 = scmp.ne.s32.totalorder %s103, %s105
      %p109 = scmp.eq.s32.totalorder %s27, 0
      %p110 = por %p108, %p109
      %p111 = scmp.ne.s32.totalorder %s103, %s105
      %p112 = scmp.eq.s32.totalorder %s32, 1
      %p113 = por %p111, %p112
      %p114 = scmp.ne.s32.totalorder %s105, %s106
      %p115 = scmp.eq.s32.totalorder %s32, 0
      %p116 = por %p114, %p115
      %p117 = scmp.ne.s32.totalorder %s105, %s106
      %p118 = scmp.eq.s32.totalorder %s33, 1
      %p119 = por %p117, %p118
      %p121 = scmp.ne.s32.totalorder %s106, %s120
      %p122 = scmp.eq.s32.totalorder %s33, 0
      %p123 = por %p121, %p122
      %s125 = sadd.s32 %s124, 1
      %p128 = scmp.eq.s32.totalorder %s27, 1
      %p129 = scmp.ne.s32.totalorder %s124, %s126
      %p130 = scmp.eq.s32.totalorder %s27, 0
      %p131 = por %p129, %p130
      %p132 = scmp.ne.s32.totalorder %s124, %s126
      %p133 = scmp.eq.s32.totalorder %s32, 1
      %p134 = por %p132, %p133
      %p135 = scmp.ne.s32.totalorder %s126, %s127
      %p136 = scmp.eq.s32.totalorder %s32, 0
      %p137 = por %p135, %p136
      %p138 = scmp.ne.s32.totalorder %s126, %s127
      %p139 = scmp.eq.s32.totalorder %s33, 1
      %p140 = por %p138, %p139
      %p142 = scmp.ne.s32.totalorder %s127, %s141
      %p143 = scmp.eq.s32.totalorder %s33, 0
      %p144 = por %p142, %p143
      %s146 = sadd.s32 %s145, 1
      %p149 = scmp.eq.s32.totalorder %s27, 1
      %p150 = scmp.ne.s32.totalorder %s145, %s147
      %p151 = scmp.eq.s32.totalorder %s27, 0
      %p152 = por %p150, %p151
      %p153 = scmp.ne.s32.totalorder %s145, %s147
      %p154 = scmp.eq.s32.totalorder %s32, 1
      %p155 = por %p153, %p154
      %p156 = scmp.ne.s32.totalorder %s147, %s148
      %p157 = scmp.eq.s32.totalorder %s32, 0
      %p158 = por %p156, %p157
      %p159 = scmp.ne.s32.totalorder %s147, %s148
      %p160 = scmp.eq.s32.totalorder %s33, 1
      %p161 = por %p159, %p160
      %p163 = scmp.ne.s32.totalorder %s148, %s162
      %p164 = scmp.eq.s32.totalorder %s33, 0
      %p165 = por %p163, %p164
      %s167 = sadd.s32 %s166, 1
      %p170 = scmp.eq.s32.totalorder %s27, 1
      %p171 = scmp.ne.s32.totalorder %s166, %s168
      %p172 = scmp.eq.s32.totalorder %s27, 0
      %p173 = por %p171, %p172
      %p174 = scmp.ne.s32.totalorder %s166, %s168
      %p175 = scmp.eq.s32.totalorder %s32, 1
      %p176 = por %p174, %p175
      %p177 = scmp.ne.s32.totalorder %s168, %s169
      %p178 = scmp.eq.s32.totalorder %s32, 0
      %p179 = por %p177, %p178
      %p180 = scmp.ne.s32.totalorder %s168, %s169
      %p181 = scmp.eq.s32.totalorder %s33, 1
      %p182 = por %p180, %p181
      %p184 = scmp.ne.s32.totalorder %s169, %s183
      %p185 = scmp.eq.s32.totalorder %s33, 0
      %p186 = por %p184, %p185
      %s188 = sadd.s32 %s187, 1
      %p191 = scmp.eq.s32.totalorder %s27, 1
      %p192 = scmp.ne.s32.totalorder %s187, %s189
      %p193 = scmp.eq.s32.totalorder %s27, 0
      %p194 = por %p192, %p193
      %p195 = scmp.ne.s32.totalorder %s187, %s189
      %p196 = scmp.eq.s32.totalorder %s32, 1
      %p197 = por %p195, %p196
      %p198 = scmp.ne.s32.totalorder %s189, %s190
      %p199 = scmp.eq.s32.totalorder %s32, 0
      %p200 = por %p198, %p199
      %p201 = scmp.ne.s32.totalorder %s189, %s190
      %p202 = scmp.eq.s32.totalorder %s33, 1
      %p203 = por %p201, %p202
      %p205 = scmp.ne.s32.totalorder %s190, %s204
      %p206 = scmp.eq.s32.totalorder %s33, 0
      %p207 = por %p205, %p206
      %s209 = sadd.s32 %s208, 1
      %p212 = scmp.eq.s32.totalorder %s27, 1
      %p213 = scmp.ne.s32.totalorder %s208, %s210
      %p214 = scmp.eq.s32.totalorder %s27, 0
      %p215 = por %p213, %p214
      %p216 = scmp.ne.s32.totalorder %s208, %s210
      %p217 = scmp.eq.s32.totalorder %s32, 1
      %p218 = por %p216, %p217
      %p219 = scmp.ne.s32.totalorder %s210, %s211
      %p220 = scmp.eq.s32.totalorder %s32, 0
      %p221 = por %p219, %p220
      %p222 = scmp.ne.s32.totalorder %s210, %s211
      %p223 = scmp.eq.s32.totalorder %s33, 1
      %p224 = por %p222, %p223
      %p226 = scmp.ne.s32.totalorder %s211, %s225
      %p227 = scmp.eq.s32.totalorder %s33, 0
      %p228 = por %p226, %p227
      %s230 = sadd.s32 %s229, 1
      %p233 = scmp.eq.s32.totalorder %s27, 1
      %p234 = scmp.ne.s32.totalorder %s229, %s231
      %p235 = scmp.eq.s32.totalorder %s27, 0
      %p236 = por %p234, %p235
      %p237 = scmp.ne.s32.totalorder %s229, %s231
      %p238 = scmp.eq.s32.totalorder %s32, 1
      %p239 = por %p237, %p238
      %p240 = scmp.ne.s32.totalorder %s231, %s232
      %p241 = scmp.eq.s32.totalorder %s32, 0
      %p242 = por %p240, %p241
      %p243 = scmp.ne.s32.totalorder %s231, %s232
      %p244 = scmp.eq.s32.totalorder %s33, 1
      %p245 = por %p243, %p244
      %p247 = scmp.ne.s32.totalorder %s232, %s246
      %p248 = scmp.eq.s32.totalorder %s33, 0
      %p249 = por %p247, %p248
      %s251 = sadd.s32 %s250, 1
      %p254 = scmp.eq.s32.totalorder %s27, 1
      %p255 = scmp.ne.s32.totalorder %s250, %s252
      %p256 = scmp.eq.s32.totalorder %s27, 0
      %p257 = por %p255, %p256
      %p258 = scmp.ne.s32.totalorder %s250, %s252
      %p259 = scmp.eq.s32.totalorder %s32, 1
      %p260 = por %p258, %p259
      %p261 = scmp.ne.s32.totalorder %s252, %s253
      %p262 = scmp.eq.s32.totalorder %s32, 0
      %p263 = por %p261, %p262
      %p264 = scmp.ne.s32.totalorder %s252, %s253
      %p265 = scmp.eq.s32.totalorder %s33, 1
      %p266 = por %p264, %p265
      %p268 = scmp.ne.s32.totalorder %s253, %s267
      %p269 = scmp.eq.s32.totalorder %s33, 0
      %p270 = por %p268, %p269
      %s272 = sadd.s32 %s271, 1
      %p275 = scmp.eq.s32.totalorder %s27, 1
      %p276 = scmp.ne.s32.totalorder %s271, %s273
      %p277 = scmp.eq.s32.totalorder %s27, 0
      %p278 = por %p276, %p277
      %p279 = scmp.ne.s32.totalorder %s271, %s273
      %p280 = scmp.eq.s32.totalorder %s32, 1
      %p281 = por %p279, %p280
      %p282 = scmp.ne.s32.totalorder %s273, %s274
      %p283 = scmp.eq.s32.totalorder %s32, 0
      %p284 = por %p282, %p283
      %p285 = scmp.ne.s32.totalorder %s273, %s274
      %p286 = scmp.eq.s32.totalorder %s33, 1
      %p287 = por %p285, %p286
      %p289 = scmp.ne.s32.totalorder %s274, %s288
      %p290 = scmp.eq.s32.totalorder %s33, 0
      %p291 = por %p289, %p290
      %s293 = sadd.s32 %s292, 1
      %p296 = scmp.eq.s32.totalorder %s27, 1
      %p297 = scmp.ne.s32.totalorder %s292, %s294
      %p298 = scmp.eq.s32.totalorder %s27, 0
      %p299 = por %p297, %p298
      %p300 = scmp.ne.s32.totalorder %s292, %s294
      %p301 = scmp.eq.s32.totalorder %s32, 1
      %p302 = por %p300, %p301
      %p303 = scmp.ne.s32.totalorder %s294, %s295
      %p304 = scmp.eq.s32.totalorder %s32, 0
      %p305 = por %p303, %p304
      %p306 = scmp.ne.s32.totalorder %s294, %s295
      %p307 = scmp.eq.s32.totalorder %s33, 1
      %p308 = por %p306, %p307
      %p310 = scmp.ne.s32.totalorder %s295, %s309
      %p311 = scmp.eq.s32.totalorder %s33, 0
      %p312 = por %p310, %p311
      %s313 = ssub.s32 %s27, %s34
      %p314 = scmp.eq.s32.totalorder %s313, 0
      %s316 = sadd.s32 %s315, 1
      %s317 = scalar_select %p314, %s315, %s316
      %p320 = pneg %p314
      %p321 = scmp.eq.s32.totalorder %s27, 1
      %p322 = por %p320, %p321
      %p323 = scmp.ne.s32.totalorder %s315, %s318
      %p324 = scmp.eq.s32.totalorder %s27, 0
      %p325 = por %p323, %p324
      %p326 = scmp.ne.s32.totalorder %s315, %s318
      %p327 = scmp.eq.s32.totalorder %s32, 1
      %p328 = por %p326, %p327
      %p329 = scmp.ne.s32.totalorder %s318, %s319
      %p330 = scmp.eq.s32.totalorder %s32, 0
      %p331 = por %p329, %p330
      %p332 = scmp.ne.s32.totalorder %s318, %s319
      %p333 = scmp.eq.s32.totalorder %s33, 1
      %p334 = por %p332, %p333
      %p336 = scmp.ne.s32.totalorder %s319, %s335
      %p337 = scmp.eq.s32.totalorder %s33, 0
      %p338 = por %p336, %p337
      %p339 = scmp.le.s32.totalorder 1, %s27
      %p340 = scmp.lt.s32.totalorder %s27, 3
      %p341 = pnand %p339, %p340
      %p342 = pneg %p341
      // Predicated region
      $region9: #{tpu_custom_call.1} parent=5 // pred_check
        _
      $region10: #{tpu_custom_call.1} parent=5 // pred_check_branch
        %344 = sbr.rel (%p341) target = $region12
      $region11: #{tpu_custom_call.1} parent=5 // pred_region
        %s345 = ssub.s32 %s27, 1
        // Predicated region
        $region13: #{tpu_custom_call.1} parent=11 // pred_check
          %p346 = pneg %p74
        $region14: #{tpu_custom_call.1} parent=11 // pred_check_branch
          %348 = sbr.rel (%p346) target = $region16
        $region15: #{tpu_custom_call.1} parent=11 // pred_region
          %s350 = ssub.s32 2048, 2048
          %351 = vsyncadd [#allocation7], %s350
          %s352 = sshll.u32 [#allocation6], 4
          %s353 = int_to_ptr.vmem [resolvable:$true] %s352
          %358 = dma.hbm_to_vmem [thread:$0]  %s1, 2048, %s353, [#allocation7], 128, 128, 8
        $region16: #{tpu_custom_call.1} parent=11 // pred_fallthru
          _
        // Predicated region
        $region17: #{tpu_custom_call.1} parent=11 // pred_check
          %p359 = pneg %p95
        $region18: #{tpu_custom_call.1} parent=11 // pred_check_branch
          %361 = sbr.rel (%p359) target = $region20
        $region19: #{tpu_custom_call.1} parent=11 // pred_region
          _
        $region20: #{tpu_custom_call.1} parent=11 // pred_fallthru
          _
        // Predicated region
        $region21: #{tpu_custom_call.1} parent=11 // pred_check
          %p362 = pneg %p116
        $region22: #{tpu_custom_call.1} parent=11 // pred_check_branch
          %364 = sbr.rel (%p362) target = $region24
        $region23: #{tpu_custom_call.1} parent=11 // pred_region
          _
        $region24: #{tpu_custom_call.1} parent=11 // pred_fallthru
          _
        // Predicated region
        $region25: #{tpu_custom_call.1} parent=11 // pred_check
          %p365 = pneg %p137
        $region26: #{tpu_custom_call.1} parent=11 // pred_check_branch
          %367 = sbr.rel (%p365) target = $region28
        $region27: #{tpu_custom_call.1} parent=11 // pred_region
          %s369 = ssub.s32 18432, 18432
          %370 = vsyncadd [#allocation7], %s369
          %s371 = sshll.u32 [#allocation8], 4
          %s372 = int_to_ptr.vmem [resolvable:$true] %s371
          %377 = dma.hbm_to_vmem [thread:$0]  %s4, 18432, %s372, [#allocation7], 128, 128, 8
        $region28: #{tpu_custom_call.1} parent=11 // pred_fallthru
          _
        // Predicated region
        $region29: #{tpu_custom_call.1} parent=11 // pred_check
          %p378 = pneg %p158
        $region30: #{tpu_custom_call.1} parent=11 // pred_check_branch
          %380 = sbr.rel (%p378) target = $region32
        $region31: #{tpu_custom_call.1} parent=11 // pred_region
          _
        $region32: #{tpu_custom_call.1} parent=11 // pred_fallthru
          _
        // Predicated region
        $region33: #{tpu_custom_call.1} parent=11 // pred_check
          %p381 = pneg %p179
        $region34: #{tpu_custom_call.1} parent=11 // pred_check_branch
          %383 = sbr.rel (%p381) target = $region36
        $region35: #{tpu_custom_call.1} parent=11 // pred_region
          _
        $region36: #{tpu_custom_call.1} parent=11 // pred_fallthru
          _
        // Predicated region
        $region37: #{tpu_custom_call.1} parent=11 // pred_check
          %p384 = pneg %p200
        $region38: #{tpu_custom_call.1} parent=11 // pred_check_branch
          %386 = sbr.rel (%p384) target = $region40
        $region39: #{tpu_custom_call.1} parent=11 // pred_region
          %s388 = ssub.s32 2048, 2048
          %389 = vsyncadd [#allocation10], %s388
          %s390 = sshll.u32 [#allocation9], 4
          %s391 = int_to_ptr.vmem [resolvable:$true] %s390
          %396 = dma.hbm_to_vmem [thread:$0]  %s7, 2048, %s391, [#allocation10], 128, 128, 8
        $region40: #{tpu_custom_call.1} parent=11 // pred_fallthru
          _
        // Predicated region
        $region41: #{tpu_custom_call.1} parent=11 // pred_check
          %p397 = pneg %p221
        $region42: #{tpu_custom_call.1} parent=11 // pred_check_branch
          %399 = sbr.rel (%p397) target = $region44
        $region43: #{tpu_custom_call.1} parent=11 // pred_region
          _
        $region44: #{tpu_custom_call.1} parent=11 // pred_fallthru
          _
        // Predicated region
        $region45: #{tpu_custom_call.1} parent=11 // pred_check
          %p400 = pneg %p242
        $region46: #{tpu_custom_call.1} parent=11 // pred_check_branch
          %402 = sbr.rel (%p400) target = $region48
        $region47: #{tpu_custom_call.1} parent=11 // pred_region
          _
        $region48: #{tpu_custom_call.1} parent=11 // pred_fallthru
          _
        // Predicated region
        $region49: #{tpu_custom_call.1} parent=11 // pred_check
          %p403 = pneg %p263
        $region50: #{tpu_custom_call.1} parent=11 // pred_check_branch
          %405 = sbr.rel (%p403) target = $region52
        $region51: #{tpu_custom_call.1} parent=11 // pred_region
          %s407 = ssub.s32 2048, 2048
          %408 = vsyncadd [#allocation10], %s407
          %s409 = sshll.u32 [#allocation11], 4
          %s410 = int_to_ptr.vmem [resolvable:$true] %s409
          %415 = dma.hbm_to_vmem [thread:$0]  %s10, 2048, %s410, [#allocation10], 128, 128, 8
        $region52: #{tpu_custom_call.1} parent=11 // pred_fallthru
          _
        // Predicated region
        $region53: #{tpu_custom_call.1} parent=11 // pred_check
          %p416 = pneg %p284
        $region54: #{tpu_custom_call.1} parent=11 // pred_check_branch
          %418 = sbr.rel (%p416) target = $region56
        $region55: #{tpu_custom_call.1} parent=11 // pred_region
          _
        $region56: #{tpu_custom_call.1} parent=11 // pred_fallthru
          _
        // Predicated region
        $region57: #{tpu_custom_call.1} parent=11 // pred_check
          %p419 = pneg %p305
        $region58: #{tpu_custom_call.1} parent=11 // pred_check_branch
          %421 = sbr.rel (%p419) target = $region60
        $region59: #{tpu_custom_call.1} parent=11 // pred_region
          _
        $region60: #{tpu_custom_call.1} parent=11 // pred_fallthru
          _
      $region12: #{tpu_custom_call.1} parent=5 // pred_fallthru
        _
      %p422 = scmp.lt.s32.totalorder %s27, 2
      // Predicated region
      $region61: #{tpu_custom_call.1} parent=5 // pred_check
        %p423 = pneg %p422
      $region62: #{tpu_custom_call.1} parent=5 // pred_check_branch
        %425 = sbr.rel (%p423) target = $region64
      $region63: #{tpu_custom_call.1} parent=5 // pred_region
        // Predicated region
        $region65: #{tpu_custom_call.1} parent=63 // pred_check
          %p426 = pneg %p47
        $region66: #{tpu_custom_call.1} parent=63 // pred_check_branch
          %428 = sbr.rel (%p426) target = $region68
        $region67: #{tpu_custom_call.1} parent=63 // pred_region
          %s429 = sand.u32 %s37, 1
          %s430 = scalar_lea.sflag [#allocation4], %s429
          %s431 = sand.u32 %s37, 1
          %s432 = smul.addr %s431, 256
          %s433 = scalar_lea.vmem [#allocation3], %s432
          %s435 = ssub.s32 4096, 4096
          %436 = vsyncadd %s430, %s435
          %s437 = smul.addr %s27, 32
          %s438 = smul.addr %s437, 128
          %s439 = scalar_lea.hbm %s0, %s438
          %s440 = sshll.u32 %s433, 4
          %s441 = int_to_ptr.vmem [resolvable:$true] %s440
          %446 = dma.hbm_to_vmem [thread:$0]  %s439, 4096, %s441, %s430, 128, 128, 8
        $region68: #{tpu_custom_call.1} parent=63 // pred_fallthru
          _
      $region64: #{tpu_custom_call.1} parent=5 // pred_fallthru
        _
      %p447 = scmp.le.s32.totalorder 1, %s27
      %p448 = scmp.lt.s32.totalorder %s27, 3
      %p449 = pnand %p447, %p448
      %p450 = pneg %p449
      // Predicated region
      $region69: #{tpu_custom_call.1} parent=5 // pred_check
        _
      $region70: #{tpu_custom_call.1} parent=5 // pred_check_branch
        %452 = sbr.rel (%p449) target = $region72
      $region71: #{tpu_custom_call.1} parent=5 // pred_region
        %s453 = ssub.s32 %s27, 1
        %s454 = sand.u32 %s40, 1
        %s455 = scalar_lea.sflag [#allocation4], %s454
        %s456 = sand.u32 %s40, 1
        %s457 = smul.addr %s456, 256
        %s458 = scalar_lea.vmem [#allocation3], %s457
        // Predicated region
        $region73: #{tpu_custom_call.1} parent=71 // pred_check
          %p459 = pneg %p53
        $region74: #{tpu_custom_call.1} parent=71 // pred_check_branch
          %461 = sbr.rel (%p459) target = $region76
        $region75: #{tpu_custom_call.1} parent=71 // pred_region
          %462 = dma.done %s455, 4096
        $region76: #{tpu_custom_call.1} parent=71 // pred_fallthru
          _
        // Predicated region
        $region77: #{tpu_custom_call.1} parent=71 // pred_check
          %p463 = pneg %p74
        $region78: #{tpu_custom_call.1} parent=71 // pred_check_branch
          %465 = sbr.rel (%p463) target = $region80
        $region79: #{tpu_custom_call.1} parent=71 // pred_region
          %466 = dma.done [#allocation7], 2048
        $region80: #{tpu_custom_call.1} parent=71 // pred_fallthru
          _
        // Predicated region
        $region81: #{tpu_custom_call.1} parent=71 // pred_check
          %p467 = pneg %p137
        $region82: #{tpu_custom_call.1} parent=71 // pred_check_branch
          %469 = sbr.rel (%p467) target = $region84
        $region83: #{tpu_custom_call.1} parent=71 // pred_region
          %470 = dma.done [#allocation7], 18432
        $region84: #{tpu_custom_call.1} parent=71 // pred_fallthru
          _
        // Predicated region
        $region85: #{tpu_custom_call.1} parent=71 // pred_check
          %p471 = pneg %p200
        $region86: #{tpu_custom_call.1} parent=71 // pred_check_branch
          %473 = sbr.rel (%p471) target = $region88
        $region87: #{tpu_custom_call.1} parent=71 // pred_region
          %474 = dma.done [#allocation10], 2048
        $region88: #{tpu_custom_call.1} parent=71 // pred_fallthru
          _
        // Predicated region
        $region89: #{tpu_custom_call.1} parent=71 // pred_check
          %p475 = pneg %p263
        $region90: #{tpu_custom_call.1} parent=71 // pred_check_branch
          %477 = sbr.rel (%p475) target = $region92
        $region91: #{tpu_custom_call.1} parent=71 // pred_region
          %478 = dma.done [#allocation10], 2048
        $region92: #{tpu_custom_call.1} parent=71 // pred_fallthru
          _
        %s479 = sand.u32 %s40, 1
        %s480 = scalar_lea.sflag [#allocation4], %s479
        %s481 = sand.u32 %s40, 1
        %s482 = smul.addr %s481, 256
        %s483 = scalar_lea.vmem [#allocation3], %s482
        %p484 = pneg %p53
        %p485 = pneg %p50
        %p486 = pneg %p74
        %p487 = pneg %p71
        %p488 = pneg %p95
        %p489 = pneg %p92
        %p490 = pneg %p116
        %p491 = pneg %p113
        %p492 = pneg %p137
        %p493 = pneg %p134
        %p494 = pneg %p158
        %p495 = pneg %p155
        %p496 = pneg %p179
        %p497 = pneg %p176
        %p498 = pneg %p200
        %p499 = pneg %p197
        %p500 = pneg %p221
        %p501 = pneg %p218
        %p502 = pneg %p242
        %p503 = pneg %p239
        %p504 = pneg %p263
        %p505 = pneg %p260
        %p506 = pneg %p284
        %p507 = pneg %p281
        %p508 = pneg %p305
        %p509 = pneg %p302
        %p510 = pneg %p331
        %p511 = pneg %p328
        %s512 = sand.u32 %s318, 1
        %s513 = scalar_lea.sflag [#allocation5], %s512
        %s514 = sand.u32 %s318, 1
        %s515 = smul.addr %s514, 256
        %s516 = scalar_lea.vmem [#allocation12], %s515
        %v517 = vld [vmem:[%s458] sm:$0xff]
        %v518 = vld [vmem:[%s458 + $0x8] sm:$0xff]
        %v519 = vld [vmem:[%s458 + $0x10] sm:$0xff]
        %v520 = vld [vmem:[%s458 + $0x18] sm:$0xff]
        %v521 = vld [vmem:[%s458 + $0x20] sm:$0xff]
        %v522 = vld [vmem:[%s458 + $0x28] sm:$0xff]
        %v523 = vld [vmem:[%s458 + $0x30] sm:$0xff]
        %v524 = vld [vmem:[%s458 + $0x38] sm:$0xff]
        %v525 = vld [vmem:[%s458 + $0x40] sm:$0xff]
        %v526 = vld [vmem:[%s458 + $0x48] sm:$0xff]
        %v527 = vld [vmem:[%s458 + $0x50] sm:$0xff]
        %v528 = vld [vmem:[%s458 + $0x58] sm:$0xff]
        %v529 = vld [vmem:[%s458 + $0x60] sm:$0xff]
        %v530 = vld [vmem:[%s458 + $0x68] sm:$0xff]
        %v531 = vld [vmem:[%s458 + $0x70] sm:$0xff]
        %v532 = vld [vmem:[%s458 + $0x78] sm:$0xff]
        %v533 = vld [vmem:[%s458 + $0x80] sm:$0xff]
        %v534 = vld [vmem:[%s458 + $0x88] sm:$0xff]
        %v535 = vld [vmem:[%s458 + $0x90] sm:$0xff]
        %v536 = vld [vmem:[%s458 + $0x98] sm:$0xff]
        %v537 = vld [vmem:[%s458 + $0xa0] sm:$0xff]
        %v538 = vld [vmem:[%s458 + $0xa8] sm:$0xff]
        %v539 = vld [vmem:[%s458 + $0xb0] sm:$0xff]
        %v540 = vld [vmem:[%s458 + $0xb8] sm:$0xff]
        %v541 = vld [vmem:[%s458 + $0xc0] sm:$0xff]
        %v542 = vld [vmem:[%s458 + $0xc8] sm:$0xff]
        %v543 = vld [vmem:[%s458 + $0xd0] sm:$0xff]
        %v544 = vld [vmem:[%s458 + $0xd8] sm:$0xff]
        %v545 = vld [vmem:[%s458 + $0xe0] sm:$0xff]
        %v546 = vld [vmem:[%s458 + $0xe8] sm:$0xff]
        %v547 = vld [vmem:[%s458 + $0xf0] sm:$0xff]
        %v548 = vld [vmem:[%s458 + $0xf8] sm:$0xff]
        %v549 = vld [vmem:[#allocation6] sm:$0xff]
        %v550 = vld [vmem:[#allocation6 + $0x8] sm:$0xff]
        %v551 = vld [vmem:[#allocation6 + $0x10] sm:$0xff]
        %v552 = vld [vmem:[#allocation6 + $0x18] sm:$0xff]
        %v553 = vld [vmem:[#allocation6 + $0x20] sm:$0xff]
        %v554 = vld [vmem:[#allocation6 + $0x28] sm:$0xff]
        %v555 = vld [vmem:[#allocation6 + $0x30] sm:$0xff]
        %v556 = vld [vmem:[#allocation6 + $0x38] sm:$0xff]
        %v557 = vld [vmem:[#allocation6 + $0x40] sm:$0xff]
        %v558 = vld [vmem:[#allocation6 + $0x48] sm:$0xff]
        %v559 = vld [vmem:[#allocation6 + $0x50] sm:$0xff]
        %v560 = vld [vmem:[#allocation6 + $0x58] sm:$0xff]
        %v561 = vld [vmem:[#allocation6 + $0x60] sm:$0xff]
        %v562 = vld [vmem:[#allocation6 + $0x68] sm:$0xff]
        %v563 = vld [vmem:[#allocation6 + $0x70] sm:$0xff]
        %v564 = vld [vmem:[#allocation6 + $0x78] sm:$0xff]
        %565 = vmatprep.subr.mxu0 0.0
        %566 = vmatpush1.msra.mxu0 %v564
        %567 = vmatprep.subr.mxu0 0.0
        %568 = vmatpush1.msra.mxu0 %v563
        %569 = vmatprep.subr.mxu0 0.0
        %570 = vmatpush1.msra.mxu0 %v562
        %571 = vmatprep.subr.mxu0 0.0
        %572 = vmatpush1.msra.mxu0 %v561
        %573 = vmatprep.subr.mxu0 0.0
        %574 = vmatpush1.msra.mxu0 %v560
        %575 = vmatprep.subr.mxu0 0.0
        %576 = vmatpush1.msra.mxu0 %v559
        %577 = vmatprep.subr.mxu0 0.0
        %578 = vmatpush1.msra.mxu0 %v558
        %579 = vmatprep.subr.mxu0 0.0
        %580 = vmatpush1.msra.mxu0 %v557
        %581 = vmatprep.subr.mxu0 0.0
        %582 = vmatpush1.msra.mxu0 %v556
        %583 = vmatprep.subr.mxu0 0.0
        %584 = vmatpush1.msra.mxu0 %v555
        %585 = vmatprep.subr.mxu0 0.0
        %586 = vmatpush1.msra.mxu0 %v554
        %587 = vmatprep.subr.mxu0 0.0
        %588 = vmatpush1.msra.mxu0 %v553
        %589 = vmatprep.subr.mxu0 0.0
        %590 = vmatpush1.msra.mxu0 %v552
        %591 = vmatprep.subr.mxu0 0.0
        %592 = vmatpush1.msra.mxu0 %v551
        %593 = vmatprep.subr.mxu0 0.0
        %594 = vmatpush1.msra.mxu0 %v550
        %595 = vmatprep.subr.mxu0 0.0
        %596 = vmatpush1.msra.mxu0 %v549
        %597 = vmatprep.subr.mxu0 0.0
        %598 = vmatpush2.msra.mxu0 0.0
        %599 = vmatprep.subr.mxu0 0.0
        %600 = vmatpush2.msra.mxu0 0.0
        %601 = vmatprep.subr.mxu0 0.0
        %602 = vmatpush2.msra.mxu0 0.0
        %603 = vmatprep.subr.mxu0 0.0
        %604 = vmatpush2.msra.mxu0 0.0
        %605 = vmatprep.subr.mxu0 0.0
        %606 = vmatpush2.msra.mxu0 0.0
        %607 = vmatprep.subr.mxu0 0.0
        %608 = vmatpush2.msra.mxu0 0.0
        %609 = vmatprep.subr.mxu0 0.0
        %610 = vmatpush2.msra.mxu0 0.0
        %611 = vmatprep.subr.mxu0 0.0
        %612 = vmatpush2.msra.mxu0 0.0
        %613 = vmatprep.subr.mxu0 0.0
        %614 = vmatpush2.msra.mxu0 0.0
        %615 = vmatprep.subr.mxu0 0.0
        %616 = vmatpush2.msra.mxu0 0.0
        %617 = vmatprep.subr.mxu0 0.0
        %618 = vmatpush2.msra.mxu0 0.0
        %619 = vmatprep.subr.mxu0 0.0
        %620 = vmatpush2.msra.mxu0 0.0
        %621 = vmatprep.subr.mxu0 0.0
        %622 = vmatpush2.msra.mxu0 0.0
        %623 = vmatprep.subr.mxu0 0.0
        %624 = vmatpush2.msra.mxu0 0.0
        %625 = vmatprep.subr.mxu0 0.0
        %626 = vmatpush2.msra.mxu0 0.0
        %627 = vmatprep.subr.mxu0 0.0
        %628 = vmatpush2.msra.mxu0 0.0
        %629 = vmatprep.mubr.f32.mxu0 0.0
        %630 = vmatmul.mubr.f32.gmra.mxu0 %v517
        %v631 = vpop.f32.mrf.mxu0
        %v632 = vadd.f32 0.0, %v631
        %v633 = vpop.f32.mrf.mxu0
        %634 = vmatprep.mubr.f32.mxu0 0.0
        %635 = vmatmul.mubr.f32.gmra.mxu0 %v518
        %v636 = vpop.f32.mrf.mxu0
        %v637 = vadd.f32 0.0, %v636
        %v638 = vpop.f32.mrf.mxu0
        %639 = vmatprep.mubr.f32.mxu0 0.0
        %640 = vmatmul.mubr.f32.gmra.mxu0 %v519
        %v641 = vpop.f32.mrf.mxu0
        %v642 = vadd.f32 0.0, %v641
        %v643 = vpop.f32.mrf.mxu0
        %644 = vmatprep.mubr.f32.mxu0 0.0
        %645 = vmatmul.mubr.f32.gmra.mxu0 %v520
        %v646 = vpop.f32.mrf.mxu0
        %v647 = vadd.f32 0.0, %v646
        %v648 = vpop.f32.mrf.mxu0
        %649 = vmatprep.mubr.f32.mxu0 0.0
        %650 = vmatmul.mubr.f32.gmra.mxu0 %v521
        %v651 = vpop.f32.mrf.mxu0
        %v652 = vadd.f32 0.0, %v651
        %v653 = vpop.f32.mrf.mxu0
        %654 = vmatprep.mubr.f32.mxu0 0.0
        %655 = vmatmul.mubr.f32.gmra.mxu0 %v522
        %v656 = vpop.f32.mrf.mxu0
        %v657 = vadd.f32 0.0, %v656
        %v658 = vpop.f32.mrf.mxu0
        %659 = vmatprep.mubr.f32.mxu0 0.0
        %660 = vmatmul.mubr.f32.gmra.mxu0 %v523
        %v661 = vpop.f32.mrf.mxu0
        %v662 = vadd.f32 0.0, %v661
        %v663 = vpop.f32.mrf.mxu0
        %664 = vmatprep.mubr.f32.mxu0 0.0
        %665 = vmatmul.mubr.f32.gmra.mxu0 %v524
        %v666 = vpop.f32.mrf.mxu0
        %v667 = vadd.f32 0.0, %v666
        %v668 = vpop.f32.mrf.mxu0
        %669 = vmatprep.mubr.f32.mxu0 0.0
        %670 = vmatmul.mubr.f32.gmra.mxu0 %v525
        %v671 = vpop.f32.mrf.mxu0
        %v672 = vadd.f32 0.0, %v671
        %v673 = vpop.f32.mrf.mxu0
        %674 = vmatprep.mubr.f32.mxu0 0.0
        %675 = vmatmul.mubr.f32.gmra.mxu0 %v526
        %v676 = vpop.f32.mrf.mxu0
        %v677 = vadd.f32 0.0, %v676
        %v678 = vpop.f32.mrf.mxu0
        %679 = vmatprep.mubr.f32.mxu0 0.0
        %680 = vmatmul.mubr.f32.gmra.mxu0 %v527
        %v681 = vpop.f32.mrf.mxu0
        %v682 = vadd.f32 0.0, %v681
        %v683 = vpop.f32.mrf.mxu0
        %684 = vmatprep.mubr.f32.mxu0 0.0
        %685 = vmatmul.mubr.f32.gmra.mxu0 %v528
        %v686 = vpop.f32.mrf.mxu0
        %v687 = vadd.f32 0.0, %v686
        %v688 = vpop.f32.mrf.mxu0
        %689 = vmatprep.mubr.f32.mxu0 0.0
        %690 = vmatmul.mubr.f32.gmra.mxu0 %v529
        %v691 = vpop.f32.mrf.mxu0
        %v692 = vadd.f32 0.0, %v691
        %v693 = vpop.f32.mrf.mxu0
        %694 = vmatprep.mubr.f32.mxu0 0.0
        %695 = vmatmul.mubr.f32.gmra.mxu0 %v530
        %v696 = vpop.f32.mrf.mxu0
        %v697 = vadd.f32 0.0, %v696
        %v698 = vpop.f32.mrf.mxu0
        %699 = vmatprep.mubr.f32.mxu0 0.0
        %700 = vmatmul.mubr.f32.gmra.mxu0 %v531
        %v701 = vpop.f32.mrf.mxu0
        %v702 = vadd.f32 0.0, %v701
        %v703 = vpop.f32.mrf.mxu0
        %704 = vmatprep.mubr.f32.mxu0 0.0
        %705 = vmatmul.mubr.f32.gmra.mxu0 %v532
        %v706 = vpop.f32.mrf.mxu0
        %v707 = vadd.f32 0.0, %v706
        %v708 = vpop.f32.mrf.mxu0
        %709 = vmatprep.mubr.f32.mxu0 0.0
        %710 = vmatmul.mubr.f32.gmra.mxu0 %v533
        %v711 = vpop.f32.mrf.mxu0
        %v712 = vadd.f32 0.0, %v711
        %v713 = vpop.f32.mrf.mxu0
        %714 = vmatprep.mubr.f32.mxu0 0.0
        %715 = vmatmul.mubr.f32.gmra.mxu0 %v534
        %v716 = vpop.f32.mrf.mxu0
        %v717 = vadd.f32 0.0, %v716
        %v718 = vpop.f32.mrf.mxu0
        %719 = vmatprep.mubr.f32.mxu0 0.0
        %720 = vmatmul.mubr.f32.gmra.mxu0 %v535
        %v721 = vpop.f32.mrf.mxu0
        %v722 = vadd.f32 0.0, %v721
        %v723 = vpop.f32.mrf.mxu0
        %724 = vmatprep.mubr.f32.mxu0 0.0
        %725 = vmatmul.mubr.f32.gmra.mxu0 %v536
        %v726 = vpop.f32.mrf.mxu0
        %v727 = vadd.f32 0.0, %v726
        %v728 = vpop.f32.mrf.mxu0
        %729 = vmatprep.mubr.f32.mxu0 0.0
        %730 = vmatmul.mubr.f32.gmra.mxu0 %v537
        %v731 = vpop.f32.mrf.mxu0
        %v732 = vadd.f32 0.0, %v731
        %v733 = vpop.f32.mrf.mxu0
        %734 = vmatprep.mubr.f32.mxu0 0.0
        %735 = vmatmul.mubr.f32.gmra.mxu0 %v538
        %v736 = vpop.f32.mrf.mxu0
        %v737 = vadd.f32 0.0, %v736
        %v738 = vpop.f32.mrf.mxu0
        %739 = vmatprep.mubr.f32.mxu0 0.0
        %740 = vmatmul.mubr.f32.gmra.mxu0 %v539
        %v741 = vpop.f32.mrf.mxu0
        %v742 = vadd.f32 0.0, %v741
        %v743 = vpop.f32.mrf.mxu0
        %744 = vmatprep.mubr.f32.mxu0 0.0
        %745 = vmatmul.mubr.f32.gmra.mxu0 %v540
        %v746 = vpop.f32.mrf.mxu0
        %v747 = vadd.f32 0.0, %v746
        %v748 = vpop.f32.mrf.mxu0
        %749 = vmatprep.mubr.f32.mxu0 0.0
        %750 = vmatmul.mubr.f32.gmra.mxu0 %v541
        %v751 = vpop.f32.mrf.mxu0
        %v752 = vadd.f32 0.0, %v751
        %v753 = vpop.f32.mrf.mxu0
        %754 = vmatprep.mubr.f32.mxu0 0.0
        %755 = vmatmul.mubr.f32.gmra.mxu0 %v542
        %v756 = vpop.f32.mrf.mxu0
        %v757 = vadd.f32 0.0, %v756
        %v758 = vpop.f32.mrf.mxu0
        %759 = vmatprep.mubr.f32.mxu0 0.0
        %760 = vmatmul.mubr.f32.gmra.mxu0 %v543
        %v761 = vpop.f32.mrf.mxu0
        %v762 = vadd.f32 0.0, %v761
        %v763 = vpop.f32.mrf.mxu0
        %764 = vmatprep.mubr.f32.mxu0 0.0
        %765 = vmatmul.mubr.f32.gmra.mxu0 %v544
        %v766 = vpop.f32.mrf.mxu0
        %v767 = vadd.f32 0.0, %v766
        %v768 = vpop.f32.mrf.mxu0
        %769 = vmatprep.mubr.f32.mxu0 0.0
        %770 = vmatmul.mubr.f32.gmra.mxu0 %v545
        %v771 = vpop.f32.mrf.mxu0
        %v772 = vadd.f32 0.0, %v771
        %v773 = vpop.f32.mrf.mxu0
        %774 = vmatprep.mubr.f32.mxu0 0.0
        %775 = vmatmul.mubr.f32.gmra.mxu0 %v546
        %v776 = vpop.f32.mrf.mxu0
        %v777 = vadd.f32 0.0, %v776
        %v778 = vpop.f32.mrf.mxu0
        %779 = vmatprep.mubr.f32.mxu0 0.0
        %780 = vmatmul.mubr.f32.gmra.mxu0 %v547
        %v781 = vpop.f32.mrf.mxu0
        %v782 = vadd.f32 0.0, %v781
        %v783 = vpop.f32.mrf.mxu0
        %784 = vmatprep.mubr.f32.mxu0 0.0
        %785 = vmatmul.mubr.f32.gmra.mxu0 %v548
        %v786 = vpop.f32.mrf.mxu0
        %v787 = vadd.f32 0.0, %v786
        %v788 = vpop.f32.mrf.mxu0
        %789 = vdwg.mxu0
        %v790 = vld [vmem:[%s2] sm:$0x1]
        %v791 = vld [vmem:[%s3] sm:$0x1]
        %v792 = vadd.f32 %v632, %v637
        %v793 = vadd.f32 %v792, %v642
        %v794 = vadd.f32 %v793, %v647
        %v795 = vadd.f32 %v794, %v652
        %v796 = vadd.f32 %v795, %v657
        %v797 = vadd.f32 %v796, %v662
        %v798 = vadd.f32 %v797, %v667
        %v799 = vadd.f32 %v798, %v672
        %v800 = vadd.f32 %v799, %v677
        %v801 = vadd.f32 %v800, %v682
        %v802 = vadd.f32 %v801, %v687
        %v803 = vadd.f32 %v802, %v692
        %v804 = vadd.f32 %v803, %v697
        %v805 = vadd.f32 %v804, %v702
        %v806 = vadd.f32 %v805, %v707
        %v807 = vadd.f32 %v806, %v712
        %v808 = vadd.f32 %v807, %v717
        %v809 = vadd.f32 %v808, %v722
        %v810 = vadd.f32 %v809, %v727
        %v811 = vadd.f32 %v810, %v732
        %v812 = vadd.f32 %v811, %v737
        %v813 = vadd.f32 %v812, %v742
        %v814 = vadd.f32 %v813, %v747
        %v815 = vadd.f32 %v814, %v752
        %v816 = vadd.f32 %v815, %v757
        %v817 = vadd.f32 %v816, %v762
        %v818 = vadd.f32 %v817, %v767
        %v819 = vadd.f32 %v818, %v772
        %v820 = vadd.f32 %v819, %v777
        %v821 = vadd.f32 %v820, %v782
        %v822 = vadd.f32 %v821, %v787
        %823 = vadd.xlane.f32.xlu0 %v822
        %v824 = vpop.xlane.xlu0 %823
        %v825 = vrot.slane %v824, 4
        %v826 = vadd.f32 %v824, %v825
        %v827 = vrot.slane %v826, 2
        %v828 = vadd.f32 %v826, %v827
        %v829 = vrot.slane %v828, 1
        %v830 = vadd.f32 %v828, %v829
        %s831 = vtos %v830
        %v832 = vmul.f32 %v632, %v632
        %v833 = vmul.f32 %v637, %v637
        %v834 = vmul.f32 %v642, %v642
        %v835 = vmul.f32 %v647, %v647
        %v836 = vmul.f32 %v652, %v652
        %v837 = vmul.f32 %v657, %v657
        %v838 = vmul.f32 %v662, %v662
        %v839 = vmul.f32 %v667, %v667
        %v840 = vmul.f32 %v672, %v672
        %v841 = vmul.f32 %v677, %v677
        %v842 = vmul.f32 %v682, %v682
        %v843 = vmul.f32 %v687, %v687
        %v844 = vmul.f32 %v692, %v692
        %v845 = vmul.f32 %v697, %v697
        %v846 = vmul.f32 %v702, %v702
        %v847 = vmul.f32 %v707, %v707
        %v848 = vmul.f32 %v712, %v712
        %v849 = vmul.f32 %v717, %v717
        %v850 = vmul.f32 %v722, %v722
        %v851 = vmul.f32 %v727, %v727
        %v852 = vmul.f32 %v732, %v732
        %v853 = vmul.f32 %v737, %v737
        %v854 = vmul.f32 %v742, %v742
        %v855 = vmul.f32 %v747, %v747
        %v856 = vmul.f32 %v752, %v752
        %v857 = vmul.f32 %v757, %v757
        %v858 = vmul.f32 %v762, %v762
        %v859 = vmul.f32 %v767, %v767
        %v860 = vmul.f32 %v772, %v772
        %v861 = vmul.f32 %v777, %v777
        %v862 = vmul.f32 %v782, %v782
        %v863 = vmul.f32 %v787, %v787
        %v864 = vadd.f32 %v832, %v833
        %v865 = vadd.f32 %v864, %v834
        %v866 = vadd.f32 %v865, %v835
        %v867 = vadd.f32 %v866, %v836
        %v868 = vadd.f32 %v867, %v837
        %v869 = vadd.f32 %v868, %v838
        %v870 = vadd.f32 %v869, %v839
        %v871 = vadd.f32 %v870, %v840
        %v872 = vadd.f32 %v871, %v841
        %v873 = vadd.f32 %v872, %v842
        %v874 = vadd.f32 %v873, %v843
        %v875 = vadd.f32 %v874, %v844
        %v876 = vadd.f32 %v875, %v845
        %v877 = vadd.f32 %v876, %v846
        %v878 = vadd.f32 %v877, %v847
        %v879 = vadd.f32 %v878, %v848
        %v880 = vadd.f32 %v879, %v849
        %v881 = vadd.f32 %v880, %v850
        %v882 = vadd.f32 %v881, %v851
        %v883 = vadd.f32 %v882, %v852
        %v884 = vadd.f32 %v883, %v853
        %v885 = vadd.f32 %v884, %v854
        %v886 = vadd.f32 %v885, %v855
        %v887 = vadd.f32 %v886, %v856
        %v888 = vadd.f32 %v887, %v857
        %v889 = vadd.f32 %v888, %v858
        %v890 = vadd.f32 %v889, %v859
        %v891 = vadd.f32 %v890, %v860
        %v892 = vadd.f32 %v891, %v861
        %v893 = vadd.f32 %v892, %v862
        %v894 = vadd.f32 %v893, %v863
        %895 = vadd.xlane.f32.xlu0 %v894
        %v896 = vpop.xlane.xlu0 %895
        %v897 = vrot.slane %v896, 4
        %v898 = vadd.f32 %v896, %v897
        %v899 = vrot.slane %v898, 2
        %v900 = vadd.f32 %v898, %v899
        %v901 = vrot.slane %v900, 1
        %v902 = vadd.f32 %v900, %v901
        %s903 = vtos %v902
        %v904 = vrcp.pop 1024.0
        %s905 = vtos %v904
        %s906 = smul.f32 %s831, %s905
        %v907 = vrcp.pop 1024.0
        %s908 = vtos %v907
        %s909 = smul.f32 %s903, %s908
        %s910 = smul.f32 %s906, %s906
        %s911 = ssub.f32 %s909, %s910
        %s912 = sadd.f32 %s911, 1e-05
        %v913 = vstv %s912
        %v914 = vrsqrt.pop %v913
        %s915 = vtos %v914
        %v916 = vstv %s915
        %v917 = vmul.f32 %v790, %v916
        %v918 = vstv %s906
        %v919 = vmul.f32 %v918, %v917
        %v920 = vsub.f32 %v791, %v919
        %v922 = vlaneseq
        %v923 = vshrl.u32 %v922, 7
        %v924 = vsub.s32 0, %v923
        %v925 = vrot.slane %v917, %v924
        %v927 = vmul.f32 %v632, %v925
        %v928 = vmul.f32 %v637, %v925
        %v929 = vmul.f32 %v642, %v925
        %v930 = vmul.f32 %v647, %v925
        %v931 = vmul.f32 %v652, %v925
        %v932 = vmul.f32 %v657, %v925
        %v933 = vmul.f32 %v662, %v925
        %v934 = vmul.f32 %v667, %v925
        %v935 = vmul.f32 %v672, %v925
        %v936 = vmul.f32 %v677, %v925
        %v937 = vmul.f32 %v682, %v925
        %v938 = vmul.f32 %v687, %v925
        %v939 = vmul.f32 %v692, %v925
        %v940 = vmul.f32 %v697, %v925
        %v941 = vmul.f32 %v702, %v925
        %v942 = vmul.f32 %v707, %v925
        %v943 = vmul.f32 %v712, %v925
        %v944 = vmul.f32 %v717, %v925
        %v945 = vmul.f32 %v722, %v925
        %v946 = vmul.f32 %v727, %v925
        %v947 = vmul.f32 %v732, %v925
        %v948 = vmul.f32 %v737, %v925
        %v949 = vmul.f32 %v742, %v925
        %v950 = vmul.f32 %v747, %v925
        %v951 = vmul.f32 %v752, %v925
        %v952 = vmul.f32 %v757, %v925
        %v953 = vmul.f32 %v762, %v925
        %v954 = vmul.f32 %v767, %v925
        %v955 = vmul.f32 %v772, %v925
        %v956 = vmul.f32 %v777, %v925
        %v957 = vmul.f32 %v782, %v925
        %v958 = vmul.f32 %v787, %v925
        %v960 = vlaneseq
        %v961 = vshrl.u32 %v960, 7
        %v962 = vsub.s32 0, %v961
        %v963 = vrot.slane %v920, %v962
        %v965 = vadd.f32 %v927, %v963
        %v966 = vadd.f32 %v928, %v963
        %v967 = vadd.f32 %v929, %v963
        %v968 = vadd.f32 %v930, %v963
        %v969 = vadd.f32 %v931, %v963
        %v970 = vadd.f32 %v932, %v963
        %v971 = vadd.f32 %v933, %v963
        %v972 = vadd.f32 %v934, %v963
        %v973 = vadd.f32 %v935, %v963
        %v974 = vadd.f32 %v936, %v963
        %v975 = vadd.f32 %v937, %v963
        %v976 = vadd.f32 %v938, %v963
        %v977 = vadd.f32 %v939, %v963
        %v978 = vadd.f32 %v940, %v963
        %v979 = vadd.f32 %v941, %v963
        %v980 = vadd.f32 %v942, %v963
        %v981 = vadd.f32 %v943, %v963
        %v982 = vadd.f32 %v944, %v963
        %v983 = vadd.f32 %v945, %v963
        %v984 = vadd.f32 %v946, %v963
        %v985 = vadd.f32 %v947, %v963
        %v986 = vadd.f32 %v948, %v963
        %v987 = vadd.f32 %v949, %v963
        %v988 = vadd.f32 %v950, %v963
        %v989 = vadd.f32 %v951, %v963
        %v990 = vadd.f32 %v952, %v963
        %v991 = vadd.f32 %v953, %v963
        %v992 = vadd.f32 %v954, %v963
        %v993 = vadd.f32 %v955, %v963
        %v994 = vadd.f32 %v956, %v963
        %v995 = vadd.f32 %v957, %v963
        %v996 = vadd.f32 %v958, %v963
        %v997 = vmax.f32 %v965, 0.0
        %v998 = vmax.f32 %v966, 0.0
        %v999 = vmax.f32 %v967, 0.0
        %v1000 = vmax.f32 %v968, 0.0
        %v1001 = vmax.f32 %v969, 0.0
        %v1002 = vmax.f32 %v970, 0.0
        %v1003 = vmax.f32 %v971, 0.0
        %v1004 = vmax.f32 %v972, 0.0
        %v1005 = vmax.f32 %v973, 0.0
        %v1006 = vmax.f32 %v974, 0.0
        %v1007 = vmax.f32 %v975, 0.0
        %v1008 = vmax.f32 %v976, 0.0
        %v1009 = vmax.f32 %v977, 0.0
        %v1010 = vmax.f32 %v978, 0.0
        %v1011 = vmax.f32 %v979, 0.0
        %v1012 = vmax.f32 %v980, 0.0
        %v1013 = vmax.f32 %v981, 0.0
        %v1014 = vmax.f32 %v982, 0.0
        %v1015 = vmax.f32 %v983, 0.0
        %v1016 = vmax.f32 %v984, 0.0
        %v1017 = vmax.f32 %v985, 0.0
        %v1018 = vmax.f32 %v986, 0.0
        %v1019 = vmax.f32 %v987, 0.0
        %v1020 = vmax.f32 %v988, 0.0
        %v1021 = vmax.f32 %v989, 0.0
        %v1022 = vmax.f32 %v990, 0.0
        %v1023 = vmax.f32 %v991, 0.0
        %v1024 = vmax.f32 %v992, 0.0
        %v1025 = vmax.f32 %v993, 0.0
        %v1026 = vmax.f32 %v994, 0.0
        %v1027 = vmax.f32 %v995, 0.0
        %v1028 = vmax.f32 %v996, 0.0
        %1029 = vst [vmem:[#allocation2] sm:$0xff] 0.0
        %1030 = vst [vmem:[#allocation2 + $0x8] sm:$0xff] 0.0
        %1031 = vst [vmem:[#allocation2 + $0x10] sm:$0xff] 0.0
        %1032 = vst [vmem:[#allocation2 + $0x18] sm:$0xff] 0.0
        %1033 = vst [vmem:[#allocation2 + $0x20] sm:$0xff] 0.0
        %1034 = vst [vmem:[#allocation2 + $0x28] sm:$0xff] 0.0
        %1035 = vst [vmem:[#allocation2 + $0x30] sm:$0xff] 0.0
        %1036 = vst [vmem:[#allocation2 + $0x38] sm:$0xff] 0.0
        %1037 = vst [vmem:[#allocation2 + $0x40] sm:$0xff] 0.0
        %1038 = vst [vmem:[#allocation2 + $0x48] sm:$0xff] 0.0
        %1039 = vst [vmem:[#allocation2 + $0x50] sm:$0xff] 0.0
        %1040 = vst [vmem:[#allocation2 + $0x58] sm:$0xff] 0.0
        %1041 = vst [vmem:[#allocation2 + $0x60] sm:$0xff] 0.0
        %1042 = vst [vmem:[#allocation2 + $0x68] sm:$0xff] 0.0
        %1043 = vst [vmem:[#allocation2 + $0x70] sm:$0xff] 0.0
        %1044 = vst [vmem:[#allocation2 + $0x78] sm:$0xff] 0.0
        %1045 = vst [vmem:[#allocation2 + $0x80] sm:$0xff] 0.0
        %1046 = vst [vmem:[#allocation2 + $0x88] sm:$0xff] 0.0
        %1047 = vst [vmem:[#allocation2 + $0x90] sm:$0xff] 0.0
        %1048 = vst [vmem:[#allocation2 + $0x98] sm:$0xff] 0.0
        %1049 = vst [vmem:[#allocation2 + $0xa0] sm:$0xff] 0.0
        %1050 = vst [vmem:[#allocation2 + $0xa8] sm:$0xff] 0.0
        %1051 = vst [vmem:[#allocation2 + $0xb0] sm:$0xff] 0.0
        %1052 = vst [vmem:[#allocation2 + $0xb8] sm:$0xff] 0.0
        %1053 = vst [vmem:[#allocation2 + $0xc0] sm:$0xff] 0.0
        %1054 = vst [vmem:[#allocation2 + $0xc8] sm:$0xff] 0.0
        %1055 = vst [vmem:[#allocation2 + $0xd0] sm:$0xff] 0.0
        %1056 = vst [vmem:[#allocation2 + $0xd8] sm:$0xff] 0.0
        %1057 = vst [vmem:[#allocation2 + $0xe0] sm:$0xff] 0.0
        %1058 = vst [vmem:[#allocation2 + $0xe8] sm:$0xff] 0.0
        %1059 = vst [vmem:[#allocation2 + $0xf0] sm:$0xff] 0.0
        %1060 = vst [vmem:[#allocation2 + $0xf8] sm:$0xff] 0.0
        %1061 = vst [vmem:[#allocation2 + $0x100] sm:$0xff] 0.0
        %1062 = vst [vmem:[#allocation2 + $0x108] sm:$0xff] 0.0
        %1063 = vst [vmem:[#allocation2 + $0x110] sm:$0xff] 0.0
        %1064 = vst [vmem:[#allocation2 + $0x118] sm:$0xff] 0.0
        %1065 = vst [vmem:[#allocation2 + $0x120] sm:$0xff] 0.0
        %1066 = vst [vmem:[#allocation2 + $0x128] sm:$0xff] 0.0
        %1067 = vst [vmem:[#allocation2 + $0x130] sm:$0xff] 0.0
        %1068 = vst [vmem:[#allocation2 + $0x138] sm:$0xff] 0.0
        %1069 = vst [vmem:[#allocation2 + $0x140] sm:$0xff] 0.0
        %1070 = vst [vmem:[#allocation2 + $0x148] sm:$0xff] 0.0
        %1071 = vst [vmem:[#allocation2 + $0x150] sm:$0xff] 0.0
        %1072 = vst [vmem:[#allocation2 + $0x158] sm:$0xff] 0.0
        %1073 = vst [vmem:[#allocation2 + $0x160] sm:$0xff] 0.0
        %1074 = vst [vmem:[#allocation2 + $0x168] sm:$0xff] 0.0
        %1075 = vst [vmem:[#allocation2 + $0x170] sm:$0xff] 0.0
        %1076 = vst [vmem:[#allocation2 + $0x178] sm:$0xff] 0.0
        %1077 = vst [vmem:[#allocation2 + $0x180] sm:$0xff] 0.0
        %1078 = vst [vmem:[#allocation2 + $0x188] sm:$0xff] 0.0
        %1079 = vst [vmem:[#allocation2 + $0x190] sm:$0xff] 0.0
        %1080 = vst [vmem:[#allocation2 + $0x198] sm:$0xff] 0.0
        %1081 = vst [vmem:[#allocation2 + $0x1a0] sm:$0xff] 0.0
        %1082 = vst [vmem:[#allocation2 + $0x1a8] sm:$0xff] 0.0
        %1083 = vst [vmem:[#allocation2 + $0x1b0] sm:$0xff] 0.0
        %1084 = vst [vmem:[#allocation2 + $0x1b8] sm:$0xff] 0.0
        %1085 = vst [vmem:[#allocation2 + $0x1c0] sm:$0xff] 0.0
        %1086 = vst [vmem:[#allocation2 + $0x1c8] sm:$0xff] 0.0
        %1087 = vst [vmem:[#allocation2 + $0x1d0] sm:$0xff] 0.0
        %1088 = vst [vmem:[#allocation2 + $0x1d8] sm:$0xff] 0.0
        %1089 = vst [vmem:[#allocation2 + $0x1e0] sm:$0xff] 0.0
        %1090 = vst [vmem:[#allocation2 + $0x1e8] sm:$0xff] 0.0
        %1091 = vst [vmem:[#allocation2 + $0x1f0] sm:$0xff] 0.0
        %1092 = vst [vmem:[#allocation2 + $0x1f8] sm:$0xff] 0.0
        %1093 = vst [vmem:[#allocation2 + $0x200] sm:$0xff] 0.0
        %1094 = vst [vmem:[#allocation2 + $0x208] sm:$0xff] 0.0
        %1095 = vst [vmem:[#allocation2 + $0x210] sm:$0xff] 0.0
        %1096 = vst [vmem:[#allocation2 + $0x218] sm:$0xff] 0.0
        %1097 = vst [vmem:[#allocation2 + $0x220] sm:$0xff] 0.0
        %1098 = vst [vmem:[#allocation2 + $0x228] sm:$0xff] 0.0
        %1099 = vst [vmem:[#allocation2 + $0x230] sm:$0xff] 0.0
        %1100 = vst [vmem:[#allocation2 + $0x238] sm:$0xff] 0.0
        %s1101 = scalar_lea.vmem [#allocation2], 32
        %1102 = vst [vmem:[%s1101 + $0x8] sm:$0xff] %v997
        %1103 = vst [vmem:[%s1101 + $0x10] sm:$0xff] %v998
        %1104 = vst [vmem:[%s1101 + $0x28] sm:$0xff] %v999
        %1105 = vst [vmem:[%s1101 + $0x30] sm:$0xff] %v1000
        %1106 = vst [vmem:[%s1101 + $0x48] sm:$0xff] %v1001
        %1107 = vst [vmem:[%s1101 + $0x50] sm:$0xff] %v1002
        %1108 = vst [vmem:[%s1101 + $0x68] sm:$0xff] %v1003
        %1109 = vst [vmem:[%s1101 + $0x70] sm:$0xff] %v1004
        %1110 = vst [vmem:[%s1101 + $0x88] sm:$0xff] %v1005
        %1111 = vst [vmem:[%s1101 + $0x90] sm:$0xff] %v1006
        %1112 = vst [vmem:[%s1101 + $0xa8] sm:$0xff] %v1007
        %1113 = vst [vmem:[%s1101 + $0xb0] sm:$0xff] %v1008
        %1114 = vst [vmem:[%s1101 + $0xc8] sm:$0xff] %v1009
        %1115 = vst [vmem:[%s1101 + $0xd0] sm:$0xff] %v1010
        %1116 = vst [vmem:[%s1101 + $0xe8] sm:$0xff] %v1011
        %1117 = vst [vmem:[%s1101 + $0xf0] sm:$0xff] %v1012
        %1118 = vst [vmem:[%s1101 + $0x108] sm:$0xff] %v1013
        %1119 = vst [vmem:[%s1101 + $0x110] sm:$0xff] %v1014
        %1120 = vst [vmem:[%s1101 + $0x128] sm:$0xff] %v1015
        %1121 = vst [vmem:[%s1101 + $0x130] sm:$0xff] %v1016
        %1122 = vst [vmem:[%s1101 + $0x148] sm:$0xff] %v1017
        %1123 = vst [vmem:[%s1101 + $0x150] sm:$0xff] %v1018
        %1124 = vst [vmem:[%s1101 + $0x168] sm:$0xff] %v1019
        %1125 = vst [vmem:[%s1101 + $0x170] sm:$0xff] %v1020
        %1126 = vst [vmem:[%s1101 + $0x188] sm:$0xff] %v1021
        %1127 = vst [vmem:[%s1101 + $0x190] sm:$0xff] %v1022
        %1128 = vst [vmem:[%s1101 + $0x1a8] sm:$0xff] %v1023
        %1129 = vst [vmem:[%s1101 + $0x1b0] sm:$0xff] %v1024
        %1130 = vst [vmem:[%s1101 + $0x1c8] sm:$0xff] %v1025
        %1131 = vst [vmem:[%s1101 + $0x1d0] sm:$0xff] %v1026
        %1132 = vst [vmem:[%s1101 + $0x1e8] sm:$0xff] %v1027
        %1133 = vst [vmem:[%s1101 + $0x1f0] sm:$0xff] %v1028
        %v1134 = vld [vmem:[#allocation2 + $0x7] sm:$0xff]
        %v1135 = vld [vmem:[#allocation2 + $0xf] sm:$0xff]
        %v1136 = vld [vmem:[#allocation2 + $0x27] sm:$0xff]
        %v1137 = vld [vmem:[#allocation2 + $0x2f] sm:$0xff]
        %v1138 = vld [vmem:[#allocation2 + $0x47] sm:$0xff]
        %v1139 = vld [vmem:[#allocation2 + $0x4f] sm:$0xff]
        %v1140 = vld [vmem:[#allocation2 + $0x67] sm:$0xff]
        %v1141 = vld [vmem:[#allocation2 + $0x6f] sm:$0xff]
        %v1142 = vld [vmem:[#allocation2 + $0x87] sm:$0xff]
        %v1143 = vld [vmem:[#allocation2 + $0x8f] sm:$0xff]
        %v1144 = vld [vmem:[#allocation2 + $0xa7] sm:$0xff]
        %v1145 = vld [vmem:[#allocation2 + $0xaf] sm:$0xff]
        %v1146 = vld [vmem:[#allocation2 + $0xc7] sm:$0xff]
        %v1147 = vld [vmem:[#allocation2 + $0xcf] sm:$0xff]
        %v1148 = vld [vmem:[#allocation2 + $0xe7] sm:$0xff]
        %v1149 = vld [vmem:[#allocation2 + $0xef] sm:$0xff]
        %v1150 = vld [vmem:[#allocation2 + $0x107] sm:$0xff]
        %v1151 = vld [vmem:[#allocation2 + $0x10f] sm:$0xff]
        %v1152 = vld [vmem:[#allocation2 + $0x127] sm:$0xff]
        %v1153 = vld [vmem:[#allocation2 + $0x12f] sm:$0xff]
        %v1154 = vld [vmem:[#allocation2 + $0x147] sm:$0xff]
        %v1155 = vld [vmem:[#allocation2 + $0x14f] sm:$0xff]
        %v1156 = vld [vmem:[#allocation2 + $0x167] sm:$0xff]
        %v1157 = vld [vmem:[#allocation2 + $0x16f] sm:$0xff]
        %v1158 = vld [vmem:[#allocation2 + $0x187] sm:$0xff]
        %v1159 = vld [vmem:[#allocation2 + $0x18f] sm:$0xff]
        %v1160 = vld [vmem:[#allocation2 + $0x1a7] sm:$0xff]
        %v1161 = vld [vmem:[#allocation2 + $0x1af] sm:$0xff]
        %v1162 = vld [vmem:[#allocation2 + $0x1c7] sm:$0xff]
        %v1163 = vld [vmem:[#allocation2 + $0x1cf] sm:$0xff]
        %v1164 = vld [vmem:[#allocation2 + $0x1e7] sm:$0xff]
        %v1165 = vld [vmem:[#allocation2 + $0x1ef] sm:$0xff]
        %v1166 = vld [vmem:[#allocation2 + $0x8] sm:$0xff]
        %v1167 = vld [vmem:[#allocation2 + $0x10] sm:$0xff]
        %v1168 = vld [vmem:[#allocation2 + $0x28] sm:$0xff]
        %v1169 = vld [vmem:[#allocation2 + $0x30] sm:$0xff]
        %v1170 = vld [vmem:[#allocation2 + $0x48] sm:$0xff]
        %v1171 = vld [vmem:[#allocation2 + $0x50] sm:$0xff]
        %v1172 = vld [vmem:[#allocation2 + $0x68] sm:$0xff]
        %v1173 = vld [vmem:[#allocation2 + $0x70] sm:$0xff]
        %v1174 = vld [vmem:[#allocation2 + $0x88] sm:$0xff]
        %v1175 = vld [vmem:[#allocation2 + $0x90] sm:$0xff]
        %v1176 = vld [vmem:[#allocation2 + $0xa8] sm:$0xff]
        %v1177 = vld [vmem:[#allocation2 + $0xb0] sm:$0xff]
        %v1178 = vld [vmem:[#allocation2 + $0xc8] sm:$0xff]
        %v1179 = vld [vmem:[#allocation2 + $0xd0] sm:$0xff]
        %v1180 = vld [vmem:[#allocation2 + $0xe8] sm:$0xff]
        %v1181 = vld [vmem:[#allocation2 + $0xf0] sm:$0xff]
        %v1182 = vld [vmem:[#allocation2 + $0x108] sm:$0xff]
        %v1183 = vld [vmem:[#allocation2 + $0x110] sm:$0xff]
        %v1184 = vld [vmem:[#allocation2 + $0x128] sm:$0xff]
        %v1185 = vld [vmem:[#allocation2 + $0x130] sm:$0xff]
        %v1186 = vld [vmem:[#allocation2 + $0x148] sm:$0xff]
        %v1187 = vld [vmem:[#allocation2 + $0x150] sm:$0xff]
        %v1188 = vld [vmem:[#allocation2 + $0x168] sm:$0xff]
        %v1189 = vld [vmem:[#allocation2 + $0x170] sm:$0xff]
        %v1190 = vld [vmem:[#allocation2 + $0x188] sm:$0xff]
        %v1191 = vld [vmem:[#allocation2 + $0x190] sm:$0xff]
        %v1192 = vld [vmem:[#allocation2 + $0x1a8] sm:$0xff]
        %v1193 = vld [vmem:[#allocation2 + $0x1b0] sm:$0xff]
        %v1194 = vld [vmem:[#allocation2 + $0x1c8] sm:$0xff]
        %v1195 = vld [vmem:[#allocation2 + $0x1d0] sm:$0xff]
        %v1196 = vld [vmem:[#allocation2 + $0x1e8] sm:$0xff]
        %v1197 = vld [vmem:[#allocation2 + $0x1f0] sm:$0xff]
        %v1198 = vld [vmem:[#allocation2 + $0x9] sm:$0xff]
        %v1199 = vld [vmem:[#allocation2 + $0x11] sm:$0xff]
        %v1200 = vld [vmem:[#allocation2 + $0x29] sm:$0xff]
        %v1201 = vld [vmem:[#allocation2 + $0x31] sm:$0xff]
        %v1202 = vld [vmem:[#allocation2 + $0x49] sm:$0xff]
        %v1203 = vld [vmem:[#allocation2 + $0x51] sm:$0xff]
        %v1204 = vld [vmem:[#allocation2 + $0x69] sm:$0xff]
        %v1205 = vld [vmem:[#allocation2 + $0x71] sm:$0xff]
        %v1206 = vld [vmem:[#allocation2 + $0x89] sm:$0xff]
        %v1207 = vld [vmem:[#allocation2 + $0x91] sm:$0xff]
        %v1208 = vld [vmem:[#allocation2 + $0xa9] sm:$0xff]
        %v1209 = vld [vmem:[#allocation2 + $0xb1] sm:$0xff]
        %v1210 = vld [vmem:[#allocation2 + $0xc9] sm:$0xff]
        %v1211 = vld [vmem:[#allocation2 + $0xd1] sm:$0xff]
        %v1212 = vld [vmem:[#allocation2 + $0xe9] sm:$0xff]
        %v1213 = vld [vmem:[#allocation2 + $0xf1] sm:$0xff]
        %v1214 = vld [vmem:[#allocation2 + $0x109] sm:$0xff]
        %v1215 = vld [vmem:[#allocation2 + $0x111] sm:$0xff]
        %v1216 = vld [vmem:[#allocation2 + $0x129] sm:$0xff]
        %v1217 = vld [vmem:[#allocation2 + $0x131] sm:$0xff]
        %v1218 = vld [vmem:[#allocation2 + $0x149] sm:$0xff]
        %v1219 = vld [vmem:[#allocation2 + $0x151] sm:$0xff]
        %v1220 = vld [vmem:[#allocation2 + $0x169] sm:$0xff]
        %v1221 = vld [vmem:[#allocation2 + $0x171] sm:$0xff]
        %v1222 = vld [vmem:[#allocation2 + $0x189] sm:$0xff]
        %v1223 = vld [vmem:[#allocation2 + $0x191] sm:$0xff]
        %v1224 = vld [vmem:[#allocation2 + $0x1a9] sm:$0xff]
        %v1225 = vld [vmem:[#allocation2 + $0x1b1] sm:$0xff]
        %v1226 = vld [vmem:[#allocation2 + $0x1c9] sm:$0xff]
        %v1227 = vld [vmem:[#allocation2 + $0x1d1] sm:$0xff]
        %v1228 = vld [vmem:[#allocation2 + $0x1e9] sm:$0xff]
        %v1229 = vld [vmem:[#allocation2 + $0x1f1] sm:$0xff]
        %v1230 = vld [vmem:[%s1101 + $0x7] sm:$0xff]
        %v1231 = vld [vmem:[%s1101 + $0xf] sm:$0xff]
        %v1232 = vld [vmem:[%s1101 + $0x27] sm:$0xff]
        %v1233 = vld [vmem:[%s1101 + $0x2f] sm:$0xff]
        %v1234 = vld [vmem:[%s1101 + $0x47] sm:$0xff]
        %v1235 = vld [vmem:[%s1101 + $0x4f] sm:$0xff]
        %v1236 = vld [vmem:[%s1101 + $0x67] sm:$0xff]
        %v1237 = vld [vmem:[%s1101 + $0x6f] sm:$0xff]
        %v1238 = vld [vmem:[%s1101 + $0x87] sm:$0xff]
        %v1239 = vld [vmem:[%s1101 + $0x8f] sm:$0xff]
        %v1240 = vld [vmem:[%s1101 + $0xa7] sm:$0xff]
        %v1241 = vld [vmem:[%s1101 + $0xaf] sm:$0xff]
        %v1242 = vld [vmem:[%s1101 + $0xc7] sm:$0xff]
        %v1243 = vld [vmem:[%s1101 + $0xcf] sm:$0xff]
        %v1244 = vld [vmem:[%s1101 + $0xe7] sm:$0xff]
        %v1245 = vld [vmem:[%s1101 + $0xef] sm:$0xff]
        %v1246 = vld [vmem:[%s1101 + $0x107] sm:$0xff]
        %v1247 = vld [vmem:[%s1101 + $0x10f] sm:$0xff]
        %v1248 = vld [vmem:[%s1101 + $0x127] sm:$0xff]
        %v1249 = vld [vmem:[%s1101 + $0x12f] sm:$0xff]
        %v1250 = vld [vmem:[%s1101 + $0x147] sm:$0xff]
        %v1251 = vld [vmem:[%s1101 + $0x14f] sm:$0xff]
        %v1252 = vld [vmem:[%s1101 + $0x167] sm:$0xff]
        %v1253 = vld [vmem:[%s1101 + $0x16f] sm:$0xff]
        %v1254 = vld [vmem:[%s1101 + $0x187] sm:$0xff]
        %v1255 = vld [vmem:[%s1101 + $0x18f] sm:$0xff]
        %v1256 = vld [vmem:[%s1101 + $0x1a7] sm:$0xff]
        %v1257 = vld [vmem:[%s1101 + $0x1af] sm:$0xff]
        %v1258 = vld [vmem:[%s1101 + $0x1c7] sm:$0xff]
        %v1259 = vld [vmem:[%s1101 + $0x1cf] sm:$0xff]
        %v1260 = vld [vmem:[%s1101 + $0x1e7] sm:$0xff]
        %v1261 = vld [vmem:[%s1101 + $0x1ef] sm:$0xff]
        %v1262 = vld [vmem:[%s1101 + $0x8] sm:$0xff]
        %v1263 = vld [vmem:[%s1101 + $0x10] sm:$0xff]
        %v1264 = vld [vmem:[%s1101 + $0x28] sm:$0xff]
        %v1265 = vld [vmem:[%s1101 + $0x30] sm:$0xff]
        %v1266 = vld [vmem:[%s1101 + $0x48] sm:$0xff]
        %v1267 = vld [vmem:[%s1101 + $0x50] sm:$0xff]
        %v1268 = vld [vmem:[%s1101 + $0x68] sm:$0xff]
        %v1269 = vld [vmem:[%s1101 + $0x70] sm:$0xff]
        %v1270 = vld [vmem:[%s1101 + $0x88] sm:$0xff]
        %v1271 = vld [vmem:[%s1101 + $0x90] sm:$0xff]
        %v1272 = vld [vmem:[%s1101 + $0xa8] sm:$0xff]
        %v1273 = vld [vmem:[%s1101 + $0xb0] sm:$0xff]
        %v1274 = vld [vmem:[%s1101 + $0xc8] sm:$0xff]
        %v1275 = vld [vmem:[%s1101 + $0xd0] sm:$0xff]
        %v1276 = vld [vmem:[%s1101 + $0xe8] sm:$0xff]
        %v1277 = vld [vmem:[%s1101 + $0xf0] sm:$0xff]
        %v1278 = vld [vmem:[%s1101 + $0x108] sm:$0xff]
        %v1279 = vld [vmem:[%s1101 + $0x110] sm:$0xff]
        %v1280 = vld [vmem:[%s1101 + $0x128] sm:$0xff]
        %v1281 = vld [vmem:[%s1101 + $0x130] sm:$0xff]
        %v1282 = vld [vmem:[%s1101 + $0x148] sm:$0xff]
        %v1283 = vld [vmem:[%s1101 + $0x150] sm:$0xff]
        %v1284 = vld [vmem:[%s1101 + $0x168] sm:$0xff]
        %v1285 = vld [vmem:[%s1101 + $0x170] sm:$0xff]
        %v1286 = vld [vmem:[%s1101 + $0x188] sm:$0xff]
        %v1287 = vld [vmem:[%s1101 + $0x190] sm:$0xff]
        %v1288 = vld [vmem:[%s1101 + $0x1a8] sm:$0xff]
        %v1289 = vld [vmem:[%s1101 + $0x1b0] sm:$0xff]
        %v1290 = vld [vmem:[%s1101 + $0x1c8] sm:$0xff]
        %v1291 = vld [vmem:[%s1101 + $0x1d0] sm:$0xff]
        %v1292 = vld [vmem:[%s1101 + $0x1e8] sm:$0xff]
        %v1293 = vld [vmem:[%s1101 + $0x1f0] sm:$0xff]
        %v1294 = vld [vmem:[%s1101 + $0x9] sm:$0xff]
        %v1295 = vld [vmem:[%s1101 + $0x11] sm:$0xff]
        %v1296 = vld [vmem:[%s1101 + $0x29] sm:$0xff]
        %v1297 = vld [vmem:[%s1101 + $0x31] sm:$0xff]
        %v1298 = vld [vmem:[%s1101 + $0x49] sm:$0xff]
        %v1299 = vld [vmem:[%s1101 + $0x51] sm:$0xff]
        %v1300 = vld [vmem:[%s1101 + $0x69] sm:$0xff]
        %v1301 = vld [vmem:[%s1101 + $0x71] sm:$0xff]
        %v1302 = vld [vmem:[%s1101 + $0x89] sm:$0xff]
        %v1303 = vld [vmem:[%s1101 + $0x91] sm:$0xff]
        %v1304 = vld [vmem:[%s1101 + $0xa9] sm:$0xff]
        %v1305 = vld [vmem:[%s1101 + $0xb1] sm:$0xff]
        %v1306 = vld [vmem:[%s1101 + $0xc9] sm:$0xff]
        %v1307 = vld [vmem:[%s1101 + $0xd1] sm:$0xff]
        %v1308 = vld [vmem:[%s1101 + $0xe9] sm:$0xff]
        %v1309 = vld [vmem:[%s1101 + $0xf1] sm:$0xff]
        %v1310 = vld [vmem:[%s1101 + $0x109] sm:$0xff]
        %v1311 = vld [vmem:[%s1101 + $0x111] sm:$0xff]
        %v1312 = vld [vmem:[%s1101 + $0x129] sm:$0xff]
        %v1313 = vld [vmem:[%s1101 + $0x131] sm:$0xff]
        %v1314 = vld [vmem:[%s1101 + $0x149] sm:$0xff]
        %v1315 = vld [vmem:[%s1101 + $0x151] sm:$0xff]
        %v1316 = vld [vmem:[%s1101 + $0x169] sm:$0xff]
        %v1317 = vld [vmem:[%s1101 + $0x171] sm:$0xff]
        %v1318 = vld [vmem:[%s1101 + $0x189] sm:$0xff]
        %v1319 = vld [vmem:[%s1101 + $0x191] sm:$0xff]
        %v1320 = vld [vmem:[%s1101 + $0x1a9] sm:$0xff]
        %v1321 = vld [vmem:[%s1101 + $0x1b1] sm:$0xff]
        %v1322 = vld [vmem:[%s1101 + $0x1c9] sm:$0xff]
        %v1323 = vld [vmem:[%s1101 + $0x1d1] sm:$0xff]
        %v1324 = vld [vmem:[%s1101 + $0x1e9] sm:$0xff]
        %v1325 = vld [vmem:[%s1101 + $0x1f1] sm:$0xff]
        %s1326 = scalar_lea.vmem [#allocation2], 64
        %v1327 = vld [vmem:[%s1326 + $0x7] sm:$0xff]
        %v1328 = vld [vmem:[%s1326 + $0xf] sm:$0xff]
        %v1329 = vld [vmem:[%s1326 + $0x27] sm:$0xff]
        %v1330 = vld [vmem:[%s1326 + $0x2f] sm:$0xff]
        %v1331 = vld [vmem:[%s1326 + $0x47] sm:$0xff]
        %v1332 = vld [vmem:[%s1326 + $0x4f] sm:$0xff]
        %v1333 = vld [vmem:[%s1326 + $0x67] sm:$0xff]
        %v1334 = vld [vmem:[%s1326 + $0x6f] sm:$0xff]
        %v1335 = vld [vmem:[%s1326 + $0x87] sm:$0xff]
        %v1336 = vld [vmem:[%s1326 + $0x8f] sm:$0xff]
        %v1337 = vld [vmem:[%s1326 + $0xa7] sm:$0xff]
        %v1338 = vld [vmem:[%s1326 + $0xaf] sm:$0xff]
        %v1339 = vld [vmem:[%s1326 + $0xc7] sm:$0xff]
        %v1340 = vld [vmem:[%s1326 + $0xcf] sm:$0xff]
        %v1341 = vld [vmem:[%s1326 + $0xe7] sm:$0xff]
        %v1342 = vld [vmem:[%s1326 + $0xef] sm:$0xff]
        %v1343 = vld [vmem:[%s1326 + $0x107] sm:$0xff]
        %v1344 = vld [vmem:[%s1326 + $0x10f] sm:$0xff]
        %v1345 = vld [vmem:[%s1326 + $0x127] sm:$0xff]
        %v1346 = vld [vmem:[%s1326 + $0x12f] sm:$0xff]
        %v1347 = vld [vmem:[%s1326 + $0x147] sm:$0xff]
        %v1348 = vld [vmem:[%s1326 + $0x14f] sm:$0xff]
        %v1349 = vld [vmem:[%s1326 + $0x167] sm:$0xff]
        %v1350 = vld [vmem:[%s1326 + $0x16f] sm:$0xff]
        %v1351 = vld [vmem:[%s1326 + $0x187] sm:$0xff]
        %v1352 = vld [vmem:[%s1326 + $0x18f] sm:$0xff]
        %v1353 = vld [vmem:[%s1326 + $0x1a7] sm:$0xff]
        %v1354 = vld [vmem:[%s1326 + $0x1af] sm:$0xff]
        %v1355 = vld [vmem:[%s1326 + $0x1c7] sm:$0xff]
        %v1356 = vld [vmem:[%s1326 + $0x1cf] sm:$0xff]
        %v1357 = vld [vmem:[%s1326 + $0x1e7] sm:$0xff]
        %v1358 = vld [vmem:[%s1326 + $0x1ef] sm:$0xff]
        %v1359 = vld [vmem:[%s1326 + $0x8] sm:$0xff]
        %v1360 = vld [vmem:[%s1326 + $0x10] sm:$0xff]
        %v1361 = vld [vmem:[%s1326 + $0x28] sm:$0xff]
        %v1362 = vld [vmem:[%s1326 + $0x30] sm:$0xff]
        %v1363 = vld [vmem:[%s1326 + $0x48] sm:$0xff]
        %v1364 = vld [vmem:[%s1326 + $0x50] sm:$0xff]
        %v1365 = vld [vmem:[%s1326 + $0x68] sm:$0xff]
        %v1366 = vld [vmem:[%s1326 + $0x70] sm:$0xff]
        %v1367 = vld [vmem:[%s1326 + $0x88] sm:$0xff]
        %v1368 = vld [vmem:[%s1326 + $0x90] sm:$0xff]
        %v1369 = vld [vmem:[%s1326 + $0xa8] sm:$0xff]
        %v1370 = vld [vmem:[%s1326 + $0xb0] sm:$0xff]
        %v1371 = vld [vmem:[%s1326 + $0xc8] sm:$0xff]
        %v1372 = vld [vmem:[%s1326 + $0xd0] sm:$0xff]
        %v1373 = vld [vmem:[%s1326 + $0xe8] sm:$0xff]
        %v1374 = vld [vmem:[%s1326 + $0xf0] sm:$0xff]
        %v1375 = vld [vmem:[%s1326 + $0x108] sm:$0xff]
        %v1376 = vld [vmem:[%s1326 + $0x110] sm:$0xff]
        %v1377 = vld [vmem:[%s1326 + $0x128] sm:$0xff]
        %v1378 = vld [vmem:[%s1326 + $0x130] sm:$0xff]
        %v1379 = vld [vmem:[%s1326 + $0x148] sm:$0xff]
        %v1380 = vld [vmem:[%s1326 + $0x150] sm:$0xff]
        %v1381 = vld [vmem:[%s1326 + $0x168] sm:$0xff]
        %v1382 = vld [vmem:[%s1326 + $0x170] sm:$0xff]
        %v1383 = vld [vmem:[%s1326 + $0x188] sm:$0xff]
        %v1384 = vld [vmem:[%s1326 + $0x190] sm:$0xff]
        %v1385 = vld [vmem:[%s1326 + $0x1a8] sm:$0xff]
        %v1386 = vld [vmem:[%s1326 + $0x1b0] sm:$0xff]
        %v1387 = vld [vmem:[%s1326 + $0x1c8] sm:$0xff]
        %v1388 = vld [vmem:[%s1326 + $0x1d0] sm:$0xff]
        %v1389 = vld [vmem:[%s1326 + $0x1e8] sm:$0xff]
        %v1390 = vld [vmem:[%s1326 + $0x1f0] sm:$0xff]
        %v1391 = vld [vmem:[%s1326 + $0x9] sm:$0xff]
        %v1392 = vld [vmem:[%s1326 + $0x11] sm:$0xff]
        %v1393 = vld [vmem:[%s1326 + $0x29] sm:$0xff]
        %v1394 = vld [vmem:[%s1326 + $0x31] sm:$0xff]
        %v1395 = vld [vmem:[%s1326 + $0x49] sm:$0xff]
        %v1396 = vld [vmem:[%s1326 + $0x51] sm:$0xff]
        %v1397 = vld [vmem:[%s1326 + $0x69] sm:$0xff]
        %v1398 = vld [vmem:[%s1326 + $0x71] sm:$0xff]
        %v1399 = vld [vmem:[%s1326 + $0x89] sm:$0xff]
        %v1400 = vld [vmem:[%s1326 + $0x91] sm:$0xff]
        %v1401 = vld [vmem:[%s1326 + $0xa9] sm:$0xff]
        %v1402 = vld [vmem:[%s1326 + $0xb1] sm:$0xff]
        %v1403 = vld [vmem:[%s1326 + $0xc9] sm:$0xff]
        %v1404 = vld [vmem:[%s1326 + $0xd1] sm:$0xff]
        %v1405 = vld [vmem:[%s1326 + $0xe9] sm:$0xff]
        %v1406 = vld [vmem:[%s1326 + $0xf1] sm:$0xff]
        %v1407 = vld [vmem:[%s1326 + $0x109] sm:$0xff]
        %v1408 = vld [vmem:[%s1326 + $0x111] sm:$0xff]
        %v1409 = vld [vmem:[%s1326 + $0x129] sm:$0xff]
        %v1410 = vld [vmem:[%s1326 + $0x131] sm:$0xff]
        %v1411 = vld [vmem:[%s1326 + $0x149] sm:$0xff]
        %v1412 = vld [vmem:[%s1326 + $0x151] sm:$0xff]
        %v1413 = vld [vmem:[%s1326 + $0x169] sm:$0xff]
        %v1414 = vld [vmem:[%s1326 + $0x171] sm:$0xff]
        %v1415 = vld [vmem:[%s1326 + $0x189] sm:$0xff]
        %v1416 = vld [vmem:[%s1326 + $0x191] sm:$0xff]
        %v1417 = vld [vmem:[%s1326 + $0x1a9] sm:$0xff]
        %v1418 = vld [vmem:[%s1326 + $0x1b1] sm:$0xff]
        %v1419 = vld [vmem:[%s1326 + $0x1c9] sm:$0xff]
        %v1420 = vld [vmem:[%s1326 + $0x1d1] sm:$0xff]
        %v1421 = vld [vmem:[%s1326 + $0x1e9] sm:$0xff]
        %v1422 = vld [vmem:[%s1326 + $0x1f1] sm:$0xff]
        %v1423 = vld [vmem:[#allocation8] sm:$0xff]
        %v1424 = vld [vmem:[#allocation8 + $0x8] sm:$0xff]
        %v1425 = vld [vmem:[#allocation8 + $0x10] sm:$0xff]
        %v1426 = vld [vmem:[#allocation8 + $0x18] sm:$0xff]
        %v1427 = vld [vmem:[#allocation8 + $0x20] sm:$0xff]
        %v1428 = vld [vmem:[#allocation8 + $0x28] sm:$0xff]
        %v1429 = vld [vmem:[#allocation8 + $0x30] sm:$0xff]
        %v1430 = vld [vmem:[#allocation8 + $0x38] sm:$0xff]
        %v1431 = vld [vmem:[#allocation8 + $0x40] sm:$0xff]
        %v1432 = vld [vmem:[#allocation8 + $0x48] sm:$0xff]
        %v1433 = vld [vmem:[#allocation8 + $0x50] sm:$0xff]
        %v1434 = vld [vmem:[#allocation8 + $0x58] sm:$0xff]
        %v1435 = vld [vmem:[#allocation8 + $0x60] sm:$0xff]
        %v1436 = vld [vmem:[#allocation8 + $0x68] sm:$0xff]
        %v1437 = vld [vmem:[#allocation8 + $0x70] sm:$0xff]
        %v1438 = vld [vmem:[#allocation8 + $0x78] sm:$0xff]
        %v1439 = vld [vmem:[#allocation8 + $0x80] sm:$0xff]
        %v1440 = vld [vmem:[#allocation8 + $0x88] sm:$0xff]
        %v1441 = vld [vmem:[#allocation8 + $0x90] sm:$0xff]
        %v1442 = vld [vmem:[#allocation8 + $0x98] sm:$0xff]
        %v1443 = vld [vmem:[#allocation8 + $0xa0] sm:$0xff]
        %v1444 = vld [vmem:[#allocation8 + $0xa8] sm:$0xff]
        %v1445 = vld [vmem:[#allocation8 + $0xb0] sm:$0xff]
        %v1446 = vld [vmem:[#allocation8 + $0xb8] sm:$0xff]
        %v1447 = vld [vmem:[#allocation8 + $0xc0] sm:$0xff]
        %v1448 = vld [vmem:[#allocation8 + $0xc8] sm:$0xff]
        %v1449 = vld [vmem:[#allocation8 + $0xd0] sm:$0xff]
        %v1450 = vld [vmem:[#allocation8 + $0xd8] sm:$0xff]
        %v1451 = vld [vmem:[#allocation8 + $0xe0] sm:$0xff]
        %v1452 = vld [vmem:[#allocation8 + $0xe8] sm:$0xff]
        %v1453 = vld [vmem:[#allocation8 + $0xf0] sm:$0xff]
        %v1454 = vld [vmem:[#allocation8 + $0xf8] sm:$0xff]
        %v1455 = vld [vmem:[#allocation8 + $0x100] sm:$0xff]
        %v1456 = vld [vmem:[#allocation8 + $0x108] sm:$0xff]
        %v1457 = vld [vmem:[#allocation8 + $0x110] sm:$0xff]
        %v1458 = vld [vmem:[#allocation8 + $0x118] sm:$0xff]
        %v1459 = vld [vmem:[#allocation8 + $0x120] sm:$0xff]
        %v1460 = vld [vmem:[#allocation8 + $0x128] sm:$0xff]
        %v1461 = vld [vmem:[#allocation8 + $0x130] sm:$0xff]
        %v1462 = vld [vmem:[#allocation8 + $0x138] sm:$0xff]
        %v1463 = vld [vmem:[#allocation8 + $0x140] sm:$0xff]
        %v1464 = vld [vmem:[#allocation8 + $0x148] sm:$0xff]
        %v1465 = vld [vmem:[#allocation8 + $0x150] sm:$0xff]
        %v1466 = vld [vmem:[#allocation8 + $0x158] sm:$0xff]
        %v1467 = vld [vmem:[#allocation8 + $0x160] sm:$0xff]
        %v1468 = vld [vmem:[#allocation8 + $0x168] sm:$0xff]
        %v1469 = vld [vmem:[#allocation8 + $0x170] sm:$0xff]
        %v1470 = vld [vmem:[#allocation8 + $0x178] sm:$0xff]
        %v1471 = vld [vmem:[#allocation8 + $0x180] sm:$0xff]
        %v1472 = vld [vmem:[#allocation8 + $0x188] sm:$0xff]
        %v1473 = vld [vmem:[#allocation8 + $0x190] sm:$0xff]
        %v1474 = vld [vmem:[#allocation8 + $0x198] sm:$0xff]
        %v1475 = vld [vmem:[#allocation8 + $0x1a0] sm:$0xff]
        %v1476 = vld [vmem:[#allocation8 + $0x1a8] sm:$0xff]
        %v1477 = vld [vmem:[#allocation8 + $0x1b0] sm:$0xff]
        %v1478 = vld [vmem:[#allocation8 + $0x1b8] sm:$0xff]
        %v1479 = vld [vmem:[#allocation8 + $0x1c0] sm:$0xff]
        %v1480 = vld [vmem:[#allocation8 + $0x1c8] sm:$0xff]
        %v1481 = vld [vmem:[#allocation8 + $0x1d0] sm:$0xff]
        %v1482 = vld [vmem:[#allocation8 + $0x1d8] sm:$0xff]
        %v1483 = vld [vmem:[#allocation8 + $0x1e0] sm:$0xff]
        %v1484 = vld [vmem:[#allocation8 + $0x1e8] sm:$0xff]
        %v1485 = vld [vmem:[#allocation8 + $0x1f0] sm:$0xff]
        %v1486 = vld [vmem:[#allocation8 + $0x1f8] sm:$0xff]
        %v1487 = vld [vmem:[#allocation8 + $0x200] sm:$0xff]
        %v1488 = vld [vmem:[#allocation8 + $0x208] sm:$0xff]
        %v1489 = vld [vmem:[#allocation8 + $0x210] sm:$0xff]
        %v1490 = vld [vmem:[#allocation8 + $0x218] sm:$0xff]
        %v1491 = vld [vmem:[#allocation8 + $0x220] sm:$0xff]
        %v1492 = vld [vmem:[#allocation8 + $0x228] sm:$0xff]
        %v1493 = vld [vmem:[#allocation8 + $0x230] sm:$0xff]
        %v1494 = vld [vmem:[#allocation8 + $0x238] sm:$0xff]
        %v1495 = vld [vmem:[#allocation8 + $0x240] sm:$0xff]
        %v1496 = vld [vmem:[#allocation8 + $0x248] sm:$0xff]
        %v1497 = vld [vmem:[#allocation8 + $0x250] sm:$0xff]
        %v1498 = vld [vmem:[#allocation8 + $0x258] sm:$0xff]
        %v1499 = vld [vmem:[#allocation8 + $0x260] sm:$0xff]
        %v1500 = vld [vmem:[#allocation8 + $0x268] sm:$0xff]
        %v1501 = vld [vmem:[#allocation8 + $0x270] sm:$0xff]
        %v1502 = vld [vmem:[#allocation8 + $0x278] sm:$0xff]
        %v1503 = vld [vmem:[#allocation8 + $0x280] sm:$0xff]
        %v1504 = vld [vmem:[#allocation8 + $0x288] sm:$0xff]
        %v1505 = vld [vmem:[#allocation8 + $0x290] sm:$0xff]
        %v1506 = vld [vmem:[#allocation8 + $0x298] sm:$0xff]
        %v1507 = vld [vmem:[#allocation8 + $0x2a0] sm:$0xff]
        %v1508 = vld [vmem:[#allocation8 + $0x2a8] sm:$0xff]
        %v1509 = vld [vmem:[#allocation8 + $0x2b0] sm:$0xff]
        %v1510 = vld [vmem:[#allocation8 + $0x2b8] sm:$0xff]
        %v1511 = vld [vmem:[#allocation8 + $0x2c0] sm:$0xff]
        %v1512 = vld [vmem:[#allocation8 + $0x2c8] sm:$0xff]
        %v1513 = vld [vmem:[#allocation8 + $0x2d0] sm:$0xff]
        %v1514 = vld [vmem:[#allocation8 + $0x2d8] sm:$0xff]
        %v1515 = vld [vmem:[#allocation8 + $0x2e0] sm:$0xff]
        %v1516 = vld [vmem:[#allocation8 + $0x2e8] sm:$0xff]
        %v1517 = vld [vmem:[#allocation8 + $0x2f0] sm:$0xff]
        %v1518 = vld [vmem:[#allocation8 + $0x2f8] sm:$0xff]
        %v1519 = vld [vmem:[#allocation8 + $0x300] sm:$0xff]
        %v1520 = vld [vmem:[#allocation8 + $0x308] sm:$0xff]
        %v1521 = vld [vmem:[#allocation8 + $0x310] sm:$0xff]
        %v1522 = vld [vmem:[#allocation8 + $0x318] sm:$0xff]
        %v1523 = vld [vmem:[#allocation8 + $0x320] sm:$0xff]
        %v1524 = vld [vmem:[#allocation8 + $0x328] sm:$0xff]
        %v1525 = vld [vmem:[#allocation8 + $0x330] sm:$0xff]
        %v1526 = vld [vmem:[#allocation8 + $0x338] sm:$0xff]
        %v1527 = vld [vmem:[#allocation8 + $0x340] sm:$0xff]
        %v1528 = vld [vmem:[#allocation8 + $0x348] sm:$0xff]
        %v1529 = vld [vmem:[#allocation8 + $0x350] sm:$0xff]
        %v1530 = vld [vmem:[#allocation8 + $0x358] sm:$0xff]
        %v1531 = vld [vmem:[#allocation8 + $0x360] sm:$0xff]
        %v1532 = vld [vmem:[#allocation8 + $0x368] sm:$0xff]
        %v1533 = vld [vmem:[#allocation8 + $0x370] sm:$0xff]
        %v1534 = vld [vmem:[#allocation8 + $0x378] sm:$0xff]
        %v1535 = vld [vmem:[#allocation8 + $0x380] sm:$0xff]
        %v1536 = vld [vmem:[#allocation8 + $0x388] sm:$0xff]
        %v1537 = vld [vmem:[#allocation8 + $0x390] sm:$0xff]
        %v1538 = vld [vmem:[#allocation8 + $0x398] sm:$0xff]
        %v1539 = vld [vmem:[#allocation8 + $0x3a0] sm:$0xff]
        %v1540 = vld [vmem:[#allocation8 + $0x3a8] sm:$0xff]
        %v1541 = vld [vmem:[#allocation8 + $0x3b0] sm:$0xff]
        %v1542 = vld [vmem:[#allocation8 + $0x3b8] sm:$0xff]
        %v1543 = vld [vmem:[#allocation8 + $0x3c0] sm:$0xff]
        %v1544 = vld [vmem:[#allocation8 + $0x3c8] sm:$0xff]
        %v1545 = vld [vmem:[#allocation8 + $0x3d0] sm:$0xff]
        %v1546 = vld [vmem:[#allocation8 + $0x3d8] sm:$0xff]
        %v1547 = vld [vmem:[#allocation8 + $0x3e0] sm:$0xff]
        %v1548 = vld [vmem:[#allocation8 + $0x3e8] sm:$0xff]
        %v1549 = vld [vmem:[#allocation8 + $0x3f0] sm:$0xff]
        %v1550 = vld [vmem:[#allocation8 + $0x3f8] sm:$0xff]
        %v1551 = vld [vmem:[#allocation8 + $0x400] sm:$0xff]
        %v1552 = vld [vmem:[#allocation8 + $0x408] sm:$0xff]
        %v1553 = vld [vmem:[#allocation8 + $0x410] sm:$0xff]
        %v1554 = vld [vmem:[#allocation8 + $0x418] sm:$0xff]
        %v1555 = vld [vmem:[#allocation8 + $0x420] sm:$0xff]
        %v1556 = vld [vmem:[#allocation8 + $0x428] sm:$0xff]
        %v1557 = vld [vmem:[#allocation8 + $0x430] sm:$0xff]
        %v1558 = vld [vmem:[#allocation8 + $0x438] sm:$0xff]
        %v1559 = vld [vmem:[#allocation8 + $0x440] sm:$0xff]
        %v1560 = vld [vmem:[#allocation8 + $0x448] sm:$0xff]
        %v1561 = vld [vmem:[#allocation8 + $0x450] sm:$0xff]
        %v1562 = vld [vmem:[#allocation8 + $0x458] sm:$0xff]
        %v1563 = vld [vmem:[#allocation8 + $0x460] sm:$0xff]
        %v1564 = vld [vmem:[#allocation8 + $0x468] sm:$0xff]
        %v1565 = vld [vmem:[#allocation8 + $0x470] sm:$0xff]
        %v1566 = vld [vmem:[#allocation8 + $0x478] sm:$0xff]
        %1567 = vmatprep.subr.mxu0 0.0
        %1568 = vmatpush1.msra.mxu0 %v1438
        %1569 = vmatprep.subr.mxu0 0.0
        %1570 = vmatpush1.msra.mxu0 %v1437
        %1571 = vmatprep.subr.mxu0 0.0
        %1572 = vmatpush1.msra.mxu0 %v1436
        %1573 = vmatprep.subr.mxu0 0.0
        %1574 = vmatpush1.msra.mxu0 %v1435
        %1575 = vmatprep.subr.mxu0 0.0
        %1576 = vmatpush1.msra.mxu0 %v1434
        %1577 = vmatprep.subr.mxu0 0.0
        %1578 = vmatpush1.msra.mxu0 %v1433
        %1579 = vmatprep.subr.mxu0 0.0
        %1580 = vmatpush1.msra.mxu0 %v1432
        %1581 = vmatprep.subr.mxu0 0.0
        %1582 = vmatpush1.msra.mxu0 %v1431
        %1583 = vmatprep.subr.mxu0 0.0
        %1584 = vmatpush1.msra.mxu0 %v1430
        %1585 = vmatprep.subr.mxu0 0.0
        %1586 = vmatpush1.msra.mxu0 %v1429
        %1587 = vmatprep.subr.mxu0 0.0
        %1588 = vmatpush1.msra.mxu0 %v1428
        %1589 = vmatprep.subr.mxu0 0.0
        %1590 = vmatpush1.msra.mxu0 %v1427
        %1591 = vmatprep.subr.mxu0 0.0
        %1592 = vmatpush1.msra.mxu0 %v1426
        %1593 = vmatprep.subr.mxu0 0.0
        %1594 = vmatpush1.msra.mxu0 %v1425
        %1595 = vmatprep.subr.mxu0 0.0
        %1596 = vmatpush1.msra.mxu0 %v1424
        %1597 = vmatprep.subr.mxu0 0.0
        %1598 = vmatpush1.msra.mxu0 %v1423
        %1599 = vmatprep.subr.mxu0 0.0
        %1600 = vmatpush2.msra.mxu0 %v1454
        %1601 = vmatprep.subr.mxu0 0.0
        %1602 = vmatpush2.msra.mxu0 %v1453
        %1603 = vmatprep.subr.mxu0 0.0
        %1604 = vmatpush2.msra.mxu0 %v1452
        %1605 = vmatprep.subr.mxu0 0.0
        %1606 = vmatpush2.msra.mxu0 %v1451
        %1607 = vmatprep.subr.mxu0 0.0
        %1608 = vmatpush2.msra.mxu0 %v1450
        %1609 = vmatprep.subr.mxu0 0.0
        %1610 = vmatpush2.msra.mxu0 %v1449
        %1611 = vmatprep.subr.mxu0 0.0
        %1612 = vmatpush2.msra.mxu0 %v1448
        %1613 = vmatprep.subr.mxu0 0.0
        %1614 = vmatpush2.msra.mxu0 %v1447
        %1615 = vmatprep.subr.mxu0 0.0
        %1616 = vmatpush2.msra.mxu0 %v1446
        %1617 = vmatprep.subr.mxu0 0.0
        %1618 = vmatpush2.msra.mxu0 %v1445
        %1619 = vmatprep.subr.mxu0 0.0
        %1620 = vmatpush2.msra.mxu0 %v1444
        %1621 = vmatprep.subr.mxu0 0.0
        %1622 = vmatpush2.msra.mxu0 %v1443
        %1623 = vmatprep.subr.mxu0 0.0
        %1624 = vmatpush2.msra.mxu0 %v1442
        %1625 = vmatprep.subr.mxu0 0.0
        %1626 = vmatpush2.msra.mxu0 %v1441
        %1627 = vmatprep.subr.mxu0 0.0
        %1628 = vmatpush2.msra.mxu0 %v1440
        %1629 = vmatprep.subr.mxu0 0.0
        %1630 = vmatpush2.msra.mxu0 %v1439
        %1631 = vmatprep.mubr.f32.mxu0 %v1166
        %1632 = vmatmul.mubr.f32.gmra.mxu0 %v1134
        %v1633 = vpop.f32.mrf.mxu0
        %v1634 = vadd.f32 0.0, %v1633
        %v1635 = vpop.f32.mrf.mxu0
        %1636 = vmatprep.mubr.f32.mxu0 %v1167
        %1637 = vmatmul.mubr.f32.gmra.mxu0 %v1135
        %v1638 = vpop.f32.mrf.mxu0
        %v1639 = vadd.f32 0.0, %v1638
        %v1640 = vpop.f32.mrf.mxu0
        %1641 = vmatprep.mubr.f32.mxu0 %v1168
        %1642 = vmatmul.mubr.f32.gmra.mxu0 %v1136
        %v1643 = vpop.f32.mrf.mxu0
        %v1644 = vadd.f32 0.0, %v1643
        %v1645 = vpop.f32.mrf.mxu0
        %1646 = vmatprep.mubr.f32.mxu0 %v1169
        %1647 = vmatmul.mubr.f32.gmra.mxu0 %v1137
        %v1648 = vpop.f32.mrf.mxu0
        %v1649 = vadd.f32 0.0, %v1648
        %v1650 = vpop.f32.mrf.mxu0
        %1651 = vmatprep.mubr.f32.mxu0 %v1170
        %1652 = vmatmul.mubr.f32.gmra.mxu0 %v1138
        %v1653 = vpop.f32.mrf.mxu0
        %v1654 = vadd.f32 0.0, %v1653
        %v1655 = vpop.f32.mrf.mxu0
        %1656 = vmatprep.mubr.f32.mxu0 %v1171
        %1657 = vmatmul.mubr.f32.gmra.mxu0 %v1139
        %v1658 = vpop.f32.mrf.mxu0
        %v1659 = vadd.f32 0.0, %v1658
        %v1660 = vpop.f32.mrf.mxu0
        %1661 = vmatprep.mubr.f32.mxu0 %v1172
        %1662 = vmatmul.mubr.f32.gmra.mxu0 %v1140
        %v1663 = vpop.f32.mrf.mxu0
        %v1664 = vadd.f32 0.0, %v1663
        %v1665 = vpop.f32.mrf.mxu0
        %1666 = vmatprep.mubr.f32.mxu0 %v1173
        %1667 = vmatmul.mubr.f32.gmra.mxu0 %v1141
        %v1668 = vpop.f32.mrf.mxu0
        %v1669 = vadd.f32 0.0, %v1668
        %v1670 = vpop.f32.mrf.mxu0
        %1671 = vmatprep.mubr.f32.mxu0 %v1174
        %1672 = vmatmul.mubr.f32.gmra.mxu0 %v1142
        %v1673 = vpop.f32.mrf.mxu0
        %v1674 = vadd.f32 0.0, %v1673
        %v1675 = vpop.f32.mrf.mxu0
        %1676 = vmatprep.mubr.f32.mxu0 %v1175
        %1677 = vmatmul.mubr.f32.gmra.mxu0 %v1143
        %v1678 = vpop.f32.mrf.mxu0
        %v1679 = vadd.f32 0.0, %v1678
        %v1680 = vpop.f32.mrf.mxu0
        %1681 = vmatprep.mubr.f32.mxu0 %v1176
        %1682 = vmatmul.mubr.f32.gmra.mxu0 %v1144
        %v1683 = vpop.f32.mrf.mxu0
        %v1684 = vadd.f32 0.0, %v1683
        %v1685 = vpop.f32.mrf.mxu0
        %1686 = vmatprep.mubr.f32.mxu0 %v1177
        %1687 = vmatmul.mubr.f32.gmra.mxu0 %v1145
        %v1688 = vpop.f32.mrf.mxu0
        %v1689 = vadd.f32 0.0, %v1688
        %v1690 = vpop.f32.mrf.mxu0
        %1691 = vmatprep.mubr.f32.mxu0 %v1178
        %1692 = vmatmul.mubr.f32.gmra.mxu0 %v1146
        %v1693 = vpop.f32.mrf.mxu0
        %v1694 = vadd.f32 0.0, %v1693
        %v1695 = vpop.f32.mrf.mxu0
        %1696 = vmatprep.mubr.f32.mxu0 %v1179
        %1697 = vmatmul.mubr.f32.gmra.mxu0 %v1147
        %v1698 = vpop.f32.mrf.mxu0
        %v1699 = vadd.f32 0.0, %v1698
        %v1700 = vpop.f32.mrf.mxu0
        %1701 = vmatprep.mubr.f32.mxu0 %v1180
        %1702 = vmatmul.mubr.f32.gmra.mxu0 %v1148
        %v1703 = vpop.f32.mrf.mxu0
        %v1704 = vadd.f32 0.0, %v1703
        %v1705 = vpop.f32.mrf.mxu0
        %1706 = vmatprep.mubr.f32.mxu0 %v1181
        %1707 = vmatmul.mubr.f32.gmra.mxu0 %v1149
        %v1708 = vpop.f32.mrf.mxu0
        %v1709 = vadd.f32 0.0, %v1708
        %v1710 = vpop.f32.mrf.mxu0
        %1711 = vmatprep.mubr.f32.mxu0 %v1182
        %1712 = vmatmul.mubr.f32.gmra.mxu0 %v1150
        %v1713 = vpop.f32.mrf.mxu0
        %v1714 = vadd.f32 0.0, %v1713
        %v1715 = vpop.f32.mrf.mxu0
        %1716 = vmatprep.mubr.f32.mxu0 %v1183
        %1717 = vmatmul.mubr.f32.gmra.mxu0 %v1151
        %v1718 = vpop.f32.mrf.mxu0
        %v1719 = vadd.f32 0.0, %v1718
        %v1720 = vpop.f32.mrf.mxu0
        %1721 = vmatprep.mubr.f32.mxu0 %v1184
        %1722 = vmatmul.mubr.f32.gmra.mxu0 %v1152
        %v1723 = vpop.f32.mrf.mxu0
        %v1724 = vadd.f32 0.0, %v1723
        %v1725 = vpop.f32.mrf.mxu0
        %1726 = vmatprep.mubr.f32.mxu0 %v1185
        %1727 = vmatmul.mubr.f32.gmra.mxu0 %v1153
        %v1728 = vpop.f32.mrf.mxu0
        %v1729 = vadd.f32 0.0, %v1728
        %v1730 = vpop.f32.mrf.mxu0
        %1731 = vmatprep.mubr.f32.mxu0 %v1186
        %1732 = vmatmul.mubr.f32.gmra.mxu0 %v1154
        %v1733 = vpop.f32.mrf.mxu0
        %v1734 = vadd.f32 0.0, %v1733
        %v1735 = vpop.f32.mrf.mxu0
        %1736 = vmatprep.mubr.f32.mxu0 %v1187
        %1737 = vmatmul.mubr.f32.gmra.mxu0 %v1155
        %v1738 = vpop.f32.mrf.mxu0
        %v1739 = vadd.f32 0.0, %v1738
        %v1740 = vpop.f32.mrf.mxu0
        %1741 = vmatprep.mubr.f32.mxu0 %v1188
        %1742 = vmatmul.mubr.f32.gmra.mxu0 %v1156
        %v1743 = vpop.f32.mrf.mxu0
        %v1744 = vadd.f32 0.0, %v1743
        %v1745 = vpop.f32.mrf.mxu0
        %1746 = vmatprep.mubr.f32.mxu0 %v1189
        %1747 = vmatmul.mubr.f32.gmra.mxu0 %v1157
        %v1748 = vpop.f32.mrf.mxu0
        %v1749 = vadd.f32 0.0, %v1748
        %v1750 = vpop.f32.mrf.mxu0
        %1751 = vmatprep.mubr.f32.mxu0 %v1190
        %1752 = vmatmul.mubr.f32.gmra.mxu0 %v1158
        %v1753 = vpop.f32.mrf.mxu0
        %v1754 = vadd.f32 0.0, %v1753
        %v1755 = vpop.f32.mrf.mxu0
        %1756 = vmatprep.mubr.f32.mxu0 %v1191
        %1757 = vmatmul.mubr.f32.gmra.mxu0 %v1159
        %v1758 = vpop.f32.mrf.mxu0
        %v1759 = vadd.f32 0.0, %v1758
        %v1760 = vpop.f32.mrf.mxu0
        %1761 = vmatprep.mubr.f32.mxu0 %v1192
        %1762 = vmatmul.mubr.f32.gmra.mxu0 %v1160
        %v1763 = vpop.f32.mrf.mxu0
        %v1764 = vadd.f32 0.0, %v1763
        %v1765 = vpop.f32.mrf.mxu0
        %1766 = vmatprep.mubr.f32.mxu0 %v1193
        %1767 = vmatmul.mubr.f32.gmra.mxu0 %v1161
        %v1768 = vpop.f32.mrf.mxu0
        %v1769 = vadd.f32 0.0, %v1768
        %v1770 = vpop.f32.mrf.mxu0
        %1771 = vmatprep.mubr.f32.mxu0 %v1194
        %1772 = vmatmul.mubr.f32.gmra.mxu0 %v1162
        %v1773 = vpop.f32.mrf.mxu0
        %v1774 = vadd.f32 0.0, %v1773
        %v1775 = vpop.f32.mrf.mxu0
        %1776 = vmatprep.mubr.f32.mxu0 %v1195
        %1777 = vmatmul.mubr.f32.gmra.mxu0 %v1163
        %v1778 = vpop.f32.mrf.mxu0
        %v1779 = vadd.f32 0.0, %v1778
        %v1780 = vpop.f32.mrf.mxu0
        %1781 = vmatprep.mubr.f32.mxu0 %v1196
        %1782 = vmatmul.mubr.f32.gmra.mxu0 %v1164
        %v1783 = vpop.f32.mrf.mxu0
        %v1784 = vadd.f32 0.0, %v1783
        %v1785 = vpop.f32.mrf.mxu0
        %1786 = vmatprep.mubr.f32.mxu0 %v1197
        %1787 = vmatmul.mubr.f32.gmra.mxu0 %v1165
        %v1788 = vpop.f32.mrf.mxu0
        %v1789 = vadd.f32 0.0, %v1788
        %v1790 = vpop.f32.mrf.mxu0
        %1791 = vdwg.mxu0
        %1792 = vmatprep.subr.mxu0 0.0
        %1793 = vmatpush1.msra.mxu0 %v1470
        %1794 = vmatprep.subr.mxu0 0.0
        %1795 = vmatpush1.msra.mxu0 %v1469
        %1796 = vmatprep.subr.mxu0 0.0
        %1797 = vmatpush1.msra.mxu0 %v1468
        %1798 = vmatprep.subr.mxu0 0.0
        %1799 = vmatpush1.msra.mxu0 %v1467
        %1800 = vmatprep.subr.mxu0 0.0
        %1801 = vmatpush1.msra.mxu0 %v1466
        %1802 = vmatprep.subr.mxu0 0.0
        %1803 = vmatpush1.msra.mxu0 %v1465
        %1804 = vmatprep.subr.mxu0 0.0
        %1805 = vmatpush1.msra.mxu0 %v1464
        %1806 = vmatprep.subr.mxu0 0.0
        %1807 = vmatpush1.msra.mxu0 %v1463
        %1808 = vmatprep.subr.mxu0 0.0
        %1809 = vmatpush1.msra.mxu0 %v1462
        %1810 = vmatprep.subr.mxu0 0.0
        %1811 = vmatpush1.msra.mxu0 %v1461
        %1812 = vmatprep.subr.mxu0 0.0
        %1813 = vmatpush1.msra.mxu0 %v1460
        %1814 = vmatprep.subr.mxu0 0.0
        %1815 = vmatpush1.msra.mxu0 %v1459
        %1816 = vmatprep.subr.mxu0 0.0
        %1817 = vmatpush1.msra.mxu0 %v1458
        %1818 = vmatprep.subr.mxu0 0.0
        %1819 = vmatpush1.msra.mxu0 %v1457
        %1820 = vmatprep.subr.mxu0 0.0
        %1821 = vmatpush1.msra.mxu0 %v1456
        %1822 = vmatprep.subr.mxu0 0.0
        %1823 = vmatpush1.msra.mxu0 %v1455
        %1824 = vmatprep.subr.mxu0 0.0
        %1825 = vmatpush2.msra.mxu0 %v1486
        %1826 = vmatprep.subr.mxu0 0.0
        %1827 = vmatpush2.msra.mxu0 %v1485
        %1828 = vmatprep.subr.mxu0 0.0
        %1829 = vmatpush2.msra.mxu0 %v1484
        %1830 = vmatprep.subr.mxu0 0.0
        %1831 = vmatpush2.msra.mxu0 %v1483
        %1832 = vmatprep.subr.mxu0 0.0
        %1833 = vmatpush2.msra.mxu0 %v1482
        %1834 = vmatprep.subr.mxu0 0.0
        %1835 = vmatpush2.msra.mxu0 %v1481
        %1836 = vmatprep.subr.mxu0 0.0
        %1837 = vmatpush2.msra.mxu0 %v1480
        %1838 = vmatprep.subr.mxu0 0.0
        %1839 = vmatpush2.msra.mxu0 %v1479
        %1840 = vmatprep.subr.mxu0 0.0
        %1841 = vmatpush2.msra.mxu0 %v1478
        %1842 = vmatprep.subr.mxu0 0.0
        %1843 = vmatpush2.msra.mxu0 %v1477
        %1844 = vmatprep.subr.mxu0 0.0
        %1845 = vmatpush2.msra.mxu0 %v1476
        %1846 = vmatprep.subr.mxu0 0.0
        %1847 = vmatpush2.msra.mxu0 %v1475
        %1848 = vmatprep.subr.mxu0 0.0
        %1849 = vmatpush2.msra.mxu0 %v1474
        %1850 = vmatprep.subr.mxu0 0.0
        %1851 = vmatpush2.msra.mxu0 %v1473
        %1852 = vmatprep.subr.mxu0 0.0
        %1853 = vmatpush2.msra.mxu0 %v1472
        %1854 = vmatprep.subr.mxu0 0.0
        %1855 = vmatpush2.msra.mxu0 %v1471
        %1856 = vmatprep.mubr.f32.mxu0 %v1230
        %1857 = vmatmul.mubr.f32.gmra.mxu0 %v1198
        %v1858 = vpop.f32.mrf.mxu0
        %v1859 = vadd.f32 %v1634, %v1858
        %v1860 = vpop.f32.mrf.mxu0
        %1861 = vmatprep.mubr.f32.mxu0 %v1231
        %1862 = vmatmul.mubr.f32.gmra.mxu0 %v1199
        %v1863 = vpop.f32.mrf.mxu0
        %v1864 = vadd.f32 %v1639, %v1863
        %v1865 = vpop.f32.mrf.mxu0
        %1866 = vmatprep.mubr.f32.mxu0 %v1232
        %1867 = vmatmul.mubr.f32.gmra.mxu0 %v1200
        %v1868 = vpop.f32.mrf.mxu0
        %v1869 = vadd.f32 %v1644, %v1868
        %v1870 = vpop.f32.mrf.mxu0
        %1871 = vmatprep.mubr.f32.mxu0 %v1233
        %1872 = vmatmul.mubr.f32.gmra.mxu0 %v1201
        %v1873 = vpop.f32.mrf.mxu0
        %v1874 = vadd.f32 %v1649, %v1873
        %v1875 = vpop.f32.mrf.mxu0
        %1876 = vmatprep.mubr.f32.mxu0 %v1234
        %1877 = vmatmul.mubr.f32.gmra.mxu0 %v1202
        %v1878 = vpop.f32.mrf.mxu0
        %v1879 = vadd.f32 %v1654, %v1878
        %v1880 = vpop.f32.mrf.mxu0
        %1881 = vmatprep.mubr.f32.mxu0 %v1235
        %1882 = vmatmul.mubr.f32.gmra.mxu0 %v1203
        %v1883 = vpop.f32.mrf.mxu0
        %v1884 = vadd.f32 %v1659, %v1883
        %v1885 = vpop.f32.mrf.mxu0
        %1886 = vmatprep.mubr.f32.mxu0 %v1236
        %1887 = vmatmul.mubr.f32.gmra.mxu0 %v1204
        %v1888 = vpop.f32.mrf.mxu0
        %v1889 = vadd.f32 %v1664, %v1888
        %v1890 = vpop.f32.mrf.mxu0
        %1891 = vmatprep.mubr.f32.mxu0 %v1237
        %1892 = vmatmul.mubr.f32.gmra.mxu0 %v1205
        %v1893 = vpop.f32.mrf.mxu0
        %v1894 = vadd.f32 %v1669, %v1893
        %v1895 = vpop.f32.mrf.mxu0
        %1896 = vmatprep.mubr.f32.mxu0 %v1238
        %1897 = vmatmul.mubr.f32.gmra.mxu0 %v1206
        %v1898 = vpop.f32.mrf.mxu0
        %v1899 = vadd.f32 %v1674, %v1898
        %v1900 = vpop.f32.mrf.mxu0
        %1901 = vmatprep.mubr.f32.mxu0 %v1239
        %1902 = vmatmul.mubr.f32.gmra.mxu0 %v1207
        %v1903 = vpop.f32.mrf.mxu0
        %v1904 = vadd.f32 %v1679, %v1903
        %v1905 = vpop.f32.mrf.mxu0
        %1906 = vmatprep.mubr.f32.mxu0 %v1240
        %1907 = vmatmul.mubr.f32.gmra.mxu0 %v1208
        %v1908 = vpop.f32.mrf.mxu0
        %v1909 = vadd.f32 %v1684, %v1908
        %v1910 = vpop.f32.mrf.mxu0
        %1911 = vmatprep.mubr.f32.mxu0 %v1241
        %1912 = vmatmul.mubr.f32.gmra.mxu0 %v1209
        %v1913 = vpop.f32.mrf.mxu0
        %v1914 = vadd.f32 %v1689, %v1913
        %v1915 = vpop.f32.mrf.mxu0
        %1916 = vmatprep.mubr.f32.mxu0 %v1242
        %1917 = vmatmul.mubr.f32.gmra.mxu0 %v1210
        %v1918 = vpop.f32.mrf.mxu0
        %v1919 = vadd.f32 %v1694, %v1918
        %v1920 = vpop.f32.mrf.mxu0
        %1921 = vmatprep.mubr.f32.mxu0 %v1243
        %1922 = vmatmul.mubr.f32.gmra.mxu0 %v1211
        %v1923 = vpop.f32.mrf.mxu0
        %v1924 = vadd.f32 %v1699, %v1923
        %v1925 = vpop.f32.mrf.mxu0
        %1926 = vmatprep.mubr.f32.mxu0 %v1244
        %1927 = vmatmul.mubr.f32.gmra.mxu0 %v1212
        %v1928 = vpop.f32.mrf.mxu0
        %v1929 = vadd.f32 %v1704, %v1928
        %v1930 = vpop.f32.mrf.mxu0
        %1931 = vmatprep.mubr.f32.mxu0 %v1245
        %1932 = vmatmul.mubr.f32.gmra.mxu0 %v1213
        %v1933 = vpop.f32.mrf.mxu0
        %v1934 = vadd.f32 %v1709, %v1933
        %v1935 = vpop.f32.mrf.mxu0
        %1936 = vmatprep.mubr.f32.mxu0 %v1246
        %1937 = vmatmul.mubr.f32.gmra.mxu0 %v1214
        %v1938 = vpop.f32.mrf.mxu0
        %v1939 = vadd.f32 %v1714, %v1938
        %v1940 = vpop.f32.mrf.mxu0
        %1941 = vmatprep.mubr.f32.mxu0 %v1247
        %1942 = vmatmul.mubr.f32.gmra.mxu0 %v1215
        %v1943 = vpop.f32.mrf.mxu0
        %v1944 = vadd.f32 %v1719, %v1943
        %v1945 = vpop.f32.mrf.mxu0
        %1946 = vmatprep.mubr.f32.mxu0 %v1248
        %1947 = vmatmul.mubr.f32.gmra.mxu0 %v1216
        %v1948 = vpop.f32.mrf.mxu0
        %v1949 = vadd.f32 %v1724, %v1948
        %v1950 = vpop.f32.mrf.mxu0
        %1951 = vmatprep.mubr.f32.mxu0 %v1249
        %1952 = vmatmul.mubr.f32.gmra.mxu0 %v1217
        %v1953 = vpop.f32.mrf.mxu0
        %v1954 = vadd.f32 %v1729, %v1953
        %v1955 = vpop.f32.mrf.mxu0
        %1956 = vmatprep.mubr.f32.mxu0 %v1250
        %1957 = vmatmul.mubr.f32.gmra.mxu0 %v1218
        %v1958 = vpop.f32.mrf.mxu0
        %v1959 = vadd.f32 %v1734, %v1958
        %v1960 = vpop.f32.mrf.mxu0
        %1961 = vmatprep.mubr.f32.mxu0 %v1251
        %1962 = vmatmul.mubr.f32.gmra.mxu0 %v1219
        %v1963 = vpop.f32.mrf.mxu0
        %v1964 = vadd.f32 %v1739, %v1963
        %v1965 = vpop.f32.mrf.mxu0
        %1966 = vmatprep.mubr.f32.mxu0 %v1252
        %1967 = vmatmul.mubr.f32.gmra.mxu0 %v1220
        %v1968 = vpop.f32.mrf.mxu0
        %v1969 = vadd.f32 %v1744, %v1968
        %v1970 = vpop.f32.mrf.mxu0
        %1971 = vmatprep.mubr.f32.mxu0 %v1253
        %1972 = vmatmul.mubr.f32.gmra.mxu0 %v1221
        %v1973 = vpop.f32.mrf.mxu0
        %v1974 = vadd.f32 %v1749, %v1973
        %v1975 = vpop.f32.mrf.mxu0
        %1976 = vmatprep.mubr.f32.mxu0 %v1254
        %1977 = vmatmul.mubr.f32.gmra.mxu0 %v1222
        %v1978 = vpop.f32.mrf.mxu0
        %v1979 = vadd.f32 %v1754, %v1978
        %v1980 = vpop.f32.mrf.mxu0
        %1981 = vmatprep.mubr.f32.mxu0 %v1255
        %1982 = vmatmul.mubr.f32.gmra.mxu0 %v1223
        %v1983 = vpop.f32.mrf.mxu0
        %v1984 = vadd.f32 %v1759, %v1983
        %v1985 = vpop.f32.mrf.mxu0
        %1986 = vmatprep.mubr.f32.mxu0 %v1256
        %1987 = vmatmul.mubr.f32.gmra.mxu0 %v1224
        %v1988 = vpop.f32.mrf.mxu0
        %v1989 = vadd.f32 %v1764, %v1988
        %v1990 = vpop.f32.mrf.mxu0
        %1991 = vmatprep.mubr.f32.mxu0 %v1257
        %1992 = vmatmul.mubr.f32.gmra.mxu0 %v1225
        %v1993 = vpop.f32.mrf.mxu0
        %v1994 = vadd.f32 %v1769, %v1993
        %v1995 = vpop.f32.mrf.mxu0
        %1996 = vmatprep.mubr.f32.mxu0 %v1258
        %1997 = vmatmul.mubr.f32.gmra.mxu0 %v1226
        %v1998 = vpop.f32.mrf.mxu0
        %v1999 = vadd.f32 %v1774, %v1998
        %v2000 = vpop.f32.mrf.mxu0
        %2001 = vmatprep.mubr.f32.mxu0 %v1259
        %2002 = vmatmul.mubr.f32.gmra.mxu0 %v1227
        %v2003 = vpop.f32.mrf.mxu0
        %v2004 = vadd.f32 %v1779, %v2003
        %v2005 = vpop.f32.mrf.mxu0
        %2006 = vmatprep.mubr.f32.mxu0 %v1260
        %2007 = vmatmul.mubr.f32.gmra.mxu0 %v1228
        %v2008 = vpop.f32.mrf.mxu0
        %v2009 = vadd.f32 %v1784, %v2008
        %v2010 = vpop.f32.mrf.mxu0
        %2011 = vmatprep.mubr.f32.mxu0 %v1261
        %2012 = vmatmul.mubr.f32.gmra.mxu0 %v1229
        %v2013 = vpop.f32.mrf.mxu0
        %v2014 = vadd.f32 %v1789, %v2013
        %v2015 = vpop.f32.mrf.mxu0
        %2016 = vdwg.mxu0
        %2017 = vmatprep.subr.mxu0 0.0
        %2018 = vmatpush1.msra.mxu0 %v1502
        %2019 = vmatprep.subr.mxu0 0.0
        %2020 = vmatpush1.msra.mxu0 %v1501
        %2021 = vmatprep.subr.mxu0 0.0
        %2022 = vmatpush1.msra.mxu0 %v1500
        %2023 = vmatprep.subr.mxu0 0.0
        %2024 = vmatpush1.msra.mxu0 %v1499
        %2025 = vmatprep.subr.mxu0 0.0
        %2026 = vmatpush1.msra.mxu0 %v1498
        %2027 = vmatprep.subr.mxu0 0.0
        %2028 = vmatpush1.msra.mxu0 %v1497
        %2029 = vmatprep.subr.mxu0 0.0
        %2030 = vmatpush1.msra.mxu0 %v1496
        %2031 = vmatprep.subr.mxu0 0.0
        %2032 = vmatpush1.msra.mxu0 %v1495
        %2033 = vmatprep.subr.mxu0 0.0
        %2034 = vmatpush1.msra.mxu0 %v1494
        %2035 = vmatprep.subr.mxu0 0.0
        %2036 = vmatpush1.msra.mxu0 %v1493
        %2037 = vmatprep.subr.mxu0 0.0
        %2038 = vmatpush1.msra.mxu0 %v1492
        %2039 = vmatprep.subr.mxu0 0.0
        %2040 = vmatpush1.msra.mxu0 %v1491
        %2041 = vmatprep.subr.mxu0 0.0
        %2042 = vmatpush1.msra.mxu0 %v1490
        %2043 = vmatprep.subr.mxu0 0.0
        %2044 = vmatpush1.msra.mxu0 %v1489
        %2045 = vmatprep.subr.mxu0 0.0
        %2046 = vmatpush1.msra.mxu0 %v1488
        %2047 = vmatprep.subr.mxu0 0.0
        %2048 = vmatpush1.msra.mxu0 %v1487
        %2049 = vmatprep.subr.mxu0 0.0
        %2050 = vmatpush2.msra.mxu0 %v1518
        %2051 = vmatprep.subr.mxu0 0.0
        %2052 = vmatpush2.msra.mxu0 %v1517
        %2053 = vmatprep.subr.mxu0 0.0
        %2054 = vmatpush2.msra.mxu0 %v1516
        %2055 = vmatprep.subr.mxu0 0.0
        %2056 = vmatpush2.msra.mxu0 %v1515
        %2057 = vmatprep.subr.mxu0 0.0
        %2058 = vmatpush2.msra.mxu0 %v1514
        %2059 = vmatprep.subr.mxu0 0.0
        %2060 = vmatpush2.msra.mxu0 %v1513
        %2061 = vmatprep.subr.mxu0 0.0
        %2062 = vmatpush2.msra.mxu0 %v1512
        %2063 = vmatprep.subr.mxu0 0.0
        %2064 = vmatpush2.msra.mxu0 %v1511
        %2065 = vmatprep.subr.mxu0 0.0
        %2066 = vmatpush2.msra.mxu0 %v1510
        %2067 = vmatprep.subr.mxu0 0.0
        %2068 = vmatpush2.msra.mxu0 %v1509
        %2069 = vmatprep.subr.mxu0 0.0
        %2070 = vmatpush2.msra.mxu0 %v1508
        %2071 = vmatprep.subr.mxu0 0.0
        %2072 = vmatpush2.msra.mxu0 %v1507
        %2073 = vmatprep.subr.mxu0 0.0
        %2074 = vmatpush2.msra.mxu0 %v1506
        %2075 = vmatprep.subr.mxu0 0.0
        %2076 = vmatpush2.msra.mxu0 %v1505
        %2077 = vmatprep.subr.mxu0 0.0
        %2078 = vmatpush2.msra.mxu0 %v1504
        %2079 = vmatprep.subr.mxu0 0.0
        %2080 = vmatpush2.msra.mxu0 %v1503
        %2081 = vmatprep.mubr.f32.mxu0 %v1294
        %2082 = vmatmul.mubr.f32.gmra.mxu0 %v1262
        %v2083 = vpop.f32.mrf.mxu0
        %v2084 = vadd.f32 %v1859, %v2083
        %v2085 = vpop.f32.mrf.mxu0
        %2086 = vmatprep.mubr.f32.mxu0 %v1295
        %2087 = vmatmul.mubr.f32.gmra.mxu0 %v1263
        %v2088 = vpop.f32.mrf.mxu0
        %v2089 = vadd.f32 %v1864, %v2088
        %v2090 = vpop.f32.mrf.mxu0
        %2091 = vmatprep.mubr.f32.mxu0 %v1296
        %2092 = vmatmul.mubr.f32.gmra.mxu0 %v1264
        %v2093 = vpop.f32.mrf.mxu0
        %v2094 = vadd.f32 %v1869, %v2093
        %v2095 = vpop.f32.mrf.mxu0
        %2096 = vmatprep.mubr.f32.mxu0 %v1297
        %2097 = vmatmul.mubr.f32.gmra.mxu0 %v1265
        %v2098 = vpop.f32.mrf.mxu0
        %v2099 = vadd.f32 %v1874, %v2098
        %v2100 = vpop.f32.mrf.mxu0
        %2101 = vmatprep.mubr.f32.mxu0 %v1298
        %2102 = vmatmul.mubr.f32.gmra.mxu0 %v1266
        %v2103 = vpop.f32.mrf.mxu0
        %v2104 = vadd.f32 %v1879, %v2103
        %v2105 = vpop.f32.mrf.mxu0
        %2106 = vmatprep.mubr.f32.mxu0 %v1299
        %2107 = vmatmul.mubr.f32.gmra.mxu0 %v1267
        %v2108 = vpop.f32.mrf.mxu0
        %v2109 = vadd.f32 %v1884, %v2108
        %v2110 = vpop.f32.mrf.mxu0
        %2111 = vmatprep.mubr.f32.mxu0 %v1300
        %2112 = vmatmul.mubr.f32.gmra.mxu0 %v1268
        %v2113 = vpop.f32.mrf.mxu0
        %v2114 = vadd.f32 %v1889, %v2113
        %v2115 = vpop.f32.mrf.mxu0
        %2116 = vmatprep.mubr.f32.mxu0 %v1301
        %2117 = vmatmul.mubr.f32.gmra.mxu0 %v1269
        %v2118 = vpop.f32.mrf.mxu0
        %v2119 = vadd.f32 %v1894, %v2118
        %v2120 = vpop.f32.mrf.mxu0
        %2121 = vmatprep.mubr.f32.mxu0 %v1302
        %2122 = vmatmul.mubr.f32.gmra.mxu0 %v1270
        %v2123 = vpop.f32.mrf.mxu0
        %v2124 = vadd.f32 %v1899, %v2123
        %v2125 = vpop.f32.mrf.mxu0
        %2126 = vmatprep.mubr.f32.mxu0 %v1303
        %2127 = vmatmul.mubr.f32.gmra.mxu0 %v1271
        %v2128 = vpop.f32.mrf.mxu0
        %v2129 = vadd.f32 %v1904, %v2128
        %v2130 = vpop.f32.mrf.mxu0
        %2131 = vmatprep.mubr.f32.mxu0 %v1304
        %2132 = vmatmul.mubr.f32.gmra.mxu0 %v1272
        %v2133 = vpop.f32.mrf.mxu0
        %v2134 = vadd.f32 %v1909, %v2133
        %v2135 = vpop.f32.mrf.mxu0
        %2136 = vmatprep.mubr.f32.mxu0 %v1305
        %2137 = vmatmul.mubr.f32.gmra.mxu0 %v1273
        %v2138 = vpop.f32.mrf.mxu0
        %v2139 = vadd.f32 %v1914, %v2138
        %v2140 = vpop.f32.mrf.mxu0
        %2141 = vmatprep.mubr.f32.mxu0 %v1306
        %2142 = vmatmul.mubr.f32.gmra.mxu0 %v1274
        %v2143 = vpop.f32.mrf.mxu0
        %v2144 = vadd.f32 %v1919, %v2143
        %v2145 = vpop.f32.mrf.mxu0
        %2146 = vmatprep.mubr.f32.mxu0 %v1307
        %2147 = vmatmul.mubr.f32.gmra.mxu0 %v1275
        %v2148 = vpop.f32.mrf.mxu0
        %v2149 = vadd.f32 %v1924, %v2148
        %v2150 = vpop.f32.mrf.mxu0
        %2151 = vmatprep.mubr.f32.mxu0 %v1308
        %2152 = vmatmul.mubr.f32.gmra.mxu0 %v1276
        %v2153 = vpop.f32.mrf.mxu0
        %v2154 = vadd.f32 %v1929, %v2153
        %v2155 = vpop.f32.mrf.mxu0
        %2156 = vmatprep.mubr.f32.mxu0 %v1309
        %2157 = vmatmul.mubr.f32.gmra.mxu0 %v1277
        %v2158 = vpop.f32.mrf.mxu0
        %v2159 = vadd.f32 %v1934, %v2158
        %v2160 = vpop.f32.mrf.mxu0
        %2161 = vmatprep.mubr.f32.mxu0 %v1310
        %2162 = vmatmul.mubr.f32.gmra.mxu0 %v1278
        %v2163 = vpop.f32.mrf.mxu0
        %v2164 = vadd.f32 %v1939, %v2163
        %v2165 = vpop.f32.mrf.mxu0
        %2166 = vmatprep.mubr.f32.mxu0 %v1311
        %2167 = vmatmul.mubr.f32.gmra.mxu0 %v1279
        %v2168 = vpop.f32.mrf.mxu0
        %v2169 = vadd.f32 %v1944, %v2168
        %v2170 = vpop.f32.mrf.mxu0
        %2171 = vmatprep.mubr.f32.mxu0 %v1312
        %2172 = vmatmul.mubr.f32.gmra.mxu0 %v1280
        %v2173 = vpop.f32.mrf.mxu0
        %v2174 = vadd.f32 %v1949, %v2173
        %v2175 = vpop.f32.mrf.mxu0
        %2176 = vmatprep.mubr.f32.mxu0 %v1313
        %2177 = vmatmul.mubr.f32.gmra.mxu0 %v1281
        %v2178 = vpop.f32.mrf.mxu0
        %v2179 = vadd.f32 %v1954, %v2178
        %v2180 = vpop.f32.mrf.mxu0
        %2181 = vmatprep.mubr.f32.mxu0 %v1314
        %2182 = vmatmul.mubr.f32.gmra.mxu0 %v1282
        %v2183 = vpop.f32.mrf.mxu0
        %v2184 = vadd.f32 %v1959, %v2183
        %v2185 = vpop.f32.mrf.mxu0
        %2186 = vmatprep.mubr.f32.mxu0 %v1315
        %2187 = vmatmul.mubr.f32.gmra.mxu0 %v1283
        %v2188 = vpop.f32.mrf.mxu0
        %v2189 = vadd.f32 %v1964, %v2188
        %v2190 = vpop.f32.mrf.mxu0
        %2191 = vmatprep.mubr.f32.mxu0 %v1316
        %2192 = vmatmul.mubr.f32.gmra.mxu0 %v1284
        %v2193 = vpop.f32.mrf.mxu0
        %v2194 = vadd.f32 %v1969, %v2193
        %v2195 = vpop.f32.mrf.mxu0
        %2196 = vmatprep.mubr.f32.mxu0 %v1317
        %2197 = vmatmul.mubr.f32.gmra.mxu0 %v1285
        %v2198 = vpop.f32.mrf.mxu0
        %v2199 = vadd.f32 %v1974, %v2198
        %v2200 = vpop.f32.mrf.mxu0
        %2201 = vmatprep.mubr.f32.mxu0 %v1318
        %2202 = vmatmul.mubr.f32.gmra.mxu0 %v1286
        %v2203 = vpop.f32.mrf.mxu0
        %v2204 = vadd.f32 %v1979, %v2203
        %v2205 = vpop.f32.mrf.mxu0
        %2206 = vmatprep.mubr.f32.mxu0 %v1319
        %2207 = vmatmul.mubr.f32.gmra.mxu0 %v1287
        %v2208 = vpop.f32.mrf.mxu0
        %v2209 = vadd.f32 %v1984, %v2208
        %v2210 = vpop.f32.mrf.mxu0
        %2211 = vmatprep.mubr.f32.mxu0 %v1320
        %2212 = vmatmul.mubr.f32.gmra.mxu0 %v1288
        %v2213 = vpop.f32.mrf.mxu0
        %v2214 = vadd.f32 %v1989, %v2213
        %v2215 = vpop.f32.mrf.mxu0
        %2216 = vmatprep.mubr.f32.mxu0 %v1321
        %2217 = vmatmul.mubr.f32.gmra.mxu0 %v1289
        %v2218 = vpop.f32.mrf.mxu0
        %v2219 = vadd.f32 %v1994, %v2218
        %v2220 = vpop.f32.mrf.mxu0
        %2221 = vmatprep.mubr.f32.mxu0 %v1322
        %2222 = vmatmul.mubr.f32.gmra.mxu0 %v1290
        %v2223 = vpop.f32.mrf.mxu0
        %v2224 = vadd.f32 %v1999, %v2223
        %v2225 = vpop.f32.mrf.mxu0
        %2226 = vmatprep.mubr.f32.mxu0 %v1323
        %2227 = vmatmul.mubr.f32.gmra.mxu0 %v1291
        %v2228 = vpop.f32.mrf.mxu0
        %v2229 = vadd.f32 %v2004, %v2228
        %v2230 = vpop.f32.mrf.mxu0
        %2231 = vmatprep.mubr.f32.mxu0 %v1324
        %2232 = vmatmul.mubr.f32.gmra.mxu0 %v1292
        %v2233 = vpop.f32.mrf.mxu0
        %v2234 = vadd.f32 %v2009, %v2233
        %v2235 = vpop.f32.mrf.mxu0
        %2236 = vmatprep.mubr.f32.mxu0 %v1325
        %2237 = vmatmul.mubr.f32.gmra.mxu0 %v1293
        %v2238 = vpop.f32.mrf.mxu0
        %v2239 = vadd.f32 %v2014, %v2238
        %v2240 = vpop.f32.mrf.mxu0
        %2241 = vdwg.mxu0
        %2242 = vmatprep.subr.mxu0 0.0
        %2243 = vmatpush1.msra.mxu0 %v1534
        %2244 = vmatprep.subr.mxu0 0.0
        %2245 = vmatpush1.msra.mxu0 %v1533
        %2246 = vmatprep.subr.mxu0 0.0
        %2247 = vmatpush1.msra.mxu0 %v1532
        %2248 = vmatprep.subr.mxu0 0.0
        %2249 = vmatpush1.msra.mxu0 %v1531
        %2250 = vmatprep.subr.mxu0 0.0
        %2251 = vmatpush1.msra.mxu0 %v1530
        %2252 = vmatprep.subr.mxu0 0.0
        %2253 = vmatpush1.msra.mxu0 %v1529
        %2254 = vmatprep.subr.mxu0 0.0
        %2255 = vmatpush1.msra.mxu0 %v1528
        %2256 = vmatprep.subr.mxu0 0.0
        %2257 = vmatpush1.msra.mxu0 %v1527
        %2258 = vmatprep.subr.mxu0 0.0
        %2259 = vmatpush1.msra.mxu0 %v1526
        %2260 = vmatprep.subr.mxu0 0.0
        %2261 = vmatpush1.msra.mxu0 %v1525
        %2262 = vmatprep.subr.mxu0 0.0
        %2263 = vmatpush1.msra.mxu0 %v1524
        %2264 = vmatprep.subr.mxu0 0.0
        %2265 = vmatpush1.msra.mxu0 %v1523
        %2266 = vmatprep.subr.mxu0 0.0
        %2267 = vmatpush1.msra.mxu0 %v1522
        %2268 = vmatprep.subr.mxu0 0.0
        %2269 = vmatpush1.msra.mxu0 %v1521
        %2270 = vmatprep.subr.mxu0 0.0
        %2271 = vmatpush1.msra.mxu0 %v1520
        %2272 = vmatprep.subr.mxu0 0.0
        %2273 = vmatpush1.msra.mxu0 %v1519
        %2274 = vmatprep.subr.mxu0 0.0
        %2275 = vmatpush2.msra.mxu0 %v1550
        %2276 = vmatprep.subr.mxu0 0.0
        %2277 = vmatpush2.msra.mxu0 %v1549
        %2278 = vmatprep.subr.mxu0 0.0
        %2279 = vmatpush2.msra.mxu0 %v1548
        %2280 = vmatprep.subr.mxu0 0.0
        %2281 = vmatpush2.msra.mxu0 %v1547
        %2282 = vmatprep.subr.mxu0 0.0
        %2283 = vmatpush2.msra.mxu0 %v1546
        %2284 = vmatprep.subr.mxu0 0.0
        %2285 = vmatpush2.msra.mxu0 %v1545
        %2286 = vmatprep.subr.mxu0 0.0
        %2287 = vmatpush2.msra.mxu0 %v1544
        %2288 = vmatprep.subr.mxu0 0.0
        %2289 = vmatpush2.msra.mxu0 %v1543
        %2290 = vmatprep.subr.mxu0 0.0
        %2291 = vmatpush2.msra.mxu0 %v1542
        %2292 = vmatprep.subr.mxu0 0.0
        %2293 = vmatpush2.msra.mxu0 %v1541
        %2294 = vmatprep.subr.mxu0 0.0
        %2295 = vmatpush2.msra.mxu0 %v1540
        %2296 = vmatprep.subr.mxu0 0.0
        %2297 = vmatpush2.msra.mxu0 %v1539
        %2298 = vmatprep.subr.mxu0 0.0
        %2299 = vmatpush2.msra.mxu0 %v1538
        %2300 = vmatprep.subr.mxu0 0.0
        %2301 = vmatpush2.msra.mxu0 %v1537
        %2302 = vmatprep.subr.mxu0 0.0
        %2303 = vmatpush2.msra.mxu0 %v1536
        %2304 = vmatprep.subr.mxu0 0.0
        %2305 = vmatpush2.msra.mxu0 %v1535
        %2306 = vmatprep.mubr.f32.mxu0 %v1359
        %2307 = vmatmul.mubr.f32.gmra.mxu0 %v1327
        %v2308 = vpop.f32.mrf.mxu0
        %v2309 = vadd.f32 %v2084, %v2308
        %v2310 = vpop.f32.mrf.mxu0
        %2311 = vmatprep.mubr.f32.mxu0 %v1360
        %2312 = vmatmul.mubr.f32.gmra.mxu0 %v1328
        %v2313 = vpop.f32.mrf.mxu0
        %v2314 = vadd.f32 %v2089, %v2313
        %v2315 = vpop.f32.mrf.mxu0
        %2316 = vmatprep.mubr.f32.mxu0 %v1361
        %2317 = vmatmul.mubr.f32.gmra.mxu0 %v1329
        %v2318 = vpop.f32.mrf.mxu0
        %v2319 = vadd.f32 %v2094, %v2318
        %v2320 = vpop.f32.mrf.mxu0
        %2321 = vmatprep.mubr.f32.mxu0 %v1362
        %2322 = vmatmul.mubr.f32.gmra.mxu0 %v1330
        %v2323 = vpop.f32.mrf.mxu0
        %v2324 = vadd.f32 %v2099, %v2323
        %v2325 = vpop.f32.mrf.mxu0
        %2326 = vmatprep.mubr.f32.mxu0 %v1363
        %2327 = vmatmul.mubr.f32.gmra.mxu0 %v1331
        %v2328 = vpop.f32.mrf.mxu0
        %v2329 = vadd.f32 %v2104, %v2328
        %v2330 = vpop.f32.mrf.mxu0
        %2331 = vmatprep.mubr.f32.mxu0 %v1364
        %2332 = vmatmul.mubr.f32.gmra.mxu0 %v1332
        %v2333 = vpop.f32.mrf.mxu0
        %v2334 = vadd.f32 %v2109, %v2333
        %v2335 = vpop.f32.mrf.mxu0
        %2336 = vmatprep.mubr.f32.mxu0 %v1365
        %2337 = vmatmul.mubr.f32.gmra.mxu0 %v1333
        %v2338 = vpop.f32.mrf.mxu0
        %v2339 = vadd.f32 %v2114, %v2338
        %v2340 = vpop.f32.mrf.mxu0
        %2341 = vmatprep.mubr.f32.mxu0 %v1366
        %2342 = vmatmul.mubr.f32.gmra.mxu0 %v1334
        %v2343 = vpop.f32.mrf.mxu0
        %v2344 = vadd.f32 %v2119, %v2343
        %v2345 = vpop.f32.mrf.mxu0
        %2346 = vmatprep.mubr.f32.mxu0 %v1367
        %2347 = vmatmul.mubr.f32.gmra.mxu0 %v1335
        %v2348 = vpop.f32.mrf.mxu0
        %v2349 = vadd.f32 %v2124, %v2348
        %v2350 = vpop.f32.mrf.mxu0
        %2351 = vmatprep.mubr.f32.mxu0 %v1368
        %2352 = vmatmul.mubr.f32.gmra.mxu0 %v1336
        %v2353 = vpop.f32.mrf.mxu0
        %v2354 = vadd.f32 %v2129, %v2353
        %v2355 = vpop.f32.mrf.mxu0
        %2356 = vmatprep.mubr.f32.mxu0 %v1369
        %2357 = vmatmul.mubr.f32.gmra.mxu0 %v1337
        %v2358 = vpop.f32.mrf.mxu0
        %v2359 = vadd.f32 %v2134, %v2358
        %v2360 = vpop.f32.mrf.mxu0
        %2361 = vmatprep.mubr.f32.mxu0 %v1370
        %2362 = vmatmul.mubr.f32.gmra.mxu0 %v1338
        %v2363 = vpop.f32.mrf.mxu0
        %v2364 = vadd.f32 %v2139, %v2363
        %v2365 = vpop.f32.mrf.mxu0
        %2366 = vmatprep.mubr.f32.mxu0 %v1371
        %2367 = vmatmul.mubr.f32.gmra.mxu0 %v1339
        %v2368 = vpop.f32.mrf.mxu0
        %v2369 = vadd.f32 %v2144, %v2368
        %v2370 = vpop.f32.mrf.mxu0
        %2371 = vmatprep.mubr.f32.mxu0 %v1372
        %2372 = vmatmul.mubr.f32.gmra.mxu0 %v1340
        %v2373 = vpop.f32.mrf.mxu0
        %v2374 = vadd.f32 %v2149, %v2373
        %v2375 = vpop.f32.mrf.mxu0
        %2376 = vmatprep.mubr.f32.mxu0 %v1373
        %2377 = vmatmul.mubr.f32.gmra.mxu0 %v1341
        %v2378 = vpop.f32.mrf.mxu0
        %v2379 = vadd.f32 %v2154, %v2378
        %v2380 = vpop.f32.mrf.mxu0
        %2381 = vmatprep.mubr.f32.mxu0 %v1374
        %2382 = vmatmul.mubr.f32.gmra.mxu0 %v1342
        %v2383 = vpop.f32.mrf.mxu0
        %v2384 = vadd.f32 %v2159, %v2383
        %v2385 = vpop.f32.mrf.mxu0
        %2386 = vmatprep.mubr.f32.mxu0 %v1375
        %2387 = vmatmul.mubr.f32.gmra.mxu0 %v1343
        %v2388 = vpop.f32.mrf.mxu0
        %v2389 = vadd.f32 %v2164, %v2388
        %v2390 = vpop.f32.mrf.mxu0
        %2391 = vmatprep.mubr.f32.mxu0 %v1376
        %2392 = vmatmul.mubr.f32.gmra.mxu0 %v1344
        %v2393 = vpop.f32.mrf.mxu0
        %v2394 = vadd.f32 %v2169, %v2393
        %v2395 = vpop.f32.mrf.mxu0
        %2396 = vmatprep.mubr.f32.mxu0 %v1377
        %2397 = vmatmul.mubr.f32.gmra.mxu0 %v1345
        %v2398 = vpop.f32.mrf.mxu0
        %v2399 = vadd.f32 %v2174, %v2398
        %v2400 = vpop.f32.mrf.mxu0
        %2401 = vmatprep.mubr.f32.mxu0 %v1378
        %2402 = vmatmul.mubr.f32.gmra.mxu0 %v1346
        %v2403 = vpop.f32.mrf.mxu0
        %v2404 = vadd.f32 %v2179, %v2403
        %v2405 = vpop.f32.mrf.mxu0
        %2406 = vmatprep.mubr.f32.mxu0 %v1379
        %2407 = vmatmul.mubr.f32.gmra.mxu0 %v1347
        %v2408 = vpop.f32.mrf.mxu0
        %v2409 = vadd.f32 %v2184, %v2408
        %v2410 = vpop.f32.mrf.mxu0
        %2411 = vmatprep.mubr.f32.mxu0 %v1380
        %2412 = vmatmul.mubr.f32.gmra.mxu0 %v1348
        %v2413 = vpop.f32.mrf.mxu0
        %v2414 = vadd.f32 %v2189, %v2413
        %v2415 = vpop.f32.mrf.mxu0
        %2416 = vmatprep.mubr.f32.mxu0 %v1381
        %2417 = vmatmul.mubr.f32.gmra.mxu0 %v1349
        %v2418 = vpop.f32.mrf.mxu0
        %v2419 = vadd.f32 %v2194, %v2418
        %v2420 = vpop.f32.mrf.mxu0
        %2421 = vmatprep.mubr.f32.mxu0 %v1382
        %2422 = vmatmul.mubr.f32.gmra.mxu0 %v1350
        %v2423 = vpop.f32.mrf.mxu0
        %v2424 = vadd.f32 %v2199, %v2423
        %v2425 = vpop.f32.mrf.mxu0
        %2426 = vmatprep.mubr.f32.mxu0 %v1383
        %2427 = vmatmul.mubr.f32.gmra.mxu0 %v1351
        %v2428 = vpop.f32.mrf.mxu0
        %v2429 = vadd.f32 %v2204, %v2428
        %v2430 = vpop.f32.mrf.mxu0
        %2431 = vmatprep.mubr.f32.mxu0 %v1384
        %2432 = vmatmul.mubr.f32.gmra.mxu0 %v1352
        %v2433 = vpop.f32.mrf.mxu0
        %v2434 = vadd.f32 %v2209, %v2433
        %v2435 = vpop.f32.mrf.mxu0
        %2436 = vmatprep.mubr.f32.mxu0 %v1385
        %2437 = vmatmul.mubr.f32.gmra.mxu0 %v1353
        %v2438 = vpop.f32.mrf.mxu0
        %v2439 = vadd.f32 %v2214, %v2438
        %v2440 = vpop.f32.mrf.mxu0
        %2441 = vmatprep.mubr.f32.mxu0 %v1386
        %2442 = vmatmul.mubr.f32.gmra.mxu0 %v1354
        %v2443 = vpop.f32.mrf.mxu0
        %v2444 = vadd.f32 %v2219, %v2443
        %v2445 = vpop.f32.mrf.mxu0
        %2446 = vmatprep.mubr.f32.mxu0 %v1387
        %2447 = vmatmul.mubr.f32.gmra.mxu0 %v1355
        %v2448 = vpop.f32.mrf.mxu0
        %v2449 = vadd.f32 %v2224, %v2448
        %v2450 = vpop.f32.mrf.mxu0
        %2451 = vmatprep.mubr.f32.mxu0 %v1388
        %2452 = vmatmul.mubr.f32.gmra.mxu0 %v1356
        %v2453 = vpop.f32.mrf.mxu0
        %v2454 = vadd.f32 %v2229, %v2453
        %v2455 = vpop.f32.mrf.mxu0
        %2456 = vmatprep.mubr.f32.mxu0 %v1389
        %2457 = vmatmul.mubr.f32.gmra.mxu0 %v1357
        %v2458 = vpop.f32.mrf.mxu0
        %v2459 = vadd.f32 %v2234, %v2458
        %v2460 = vpop.f32.mrf.mxu0
        %2461 = vmatprep.mubr.f32.mxu0 %v1390
        %2462 = vmatmul.mubr.f32.gmra.mxu0 %v1358
        %v2463 = vpop.f32.mrf.mxu0
        %v2464 = vadd.f32 %v2239, %v2463
        %v2465 = vpop.f32.mrf.mxu0
        %2466 = vdwg.mxu0
        %2467 = vmatprep.subr.mxu0 0.0
        %2468 = vmatpush1.msra.mxu0 %v1566
        %2469 = vmatprep.subr.mxu0 0.0
        %2470 = vmatpush1.msra.mxu0 %v1565
        %2471 = vmatprep.subr.mxu0 0.0
        %2472 = vmatpush1.msra.mxu0 %v1564
        %2473 = vmatprep.subr.mxu0 0.0
        %2474 = vmatpush1.msra.mxu0 %v1563
        %2475 = vmatprep.subr.mxu0 0.0
        %2476 = vmatpush1.msra.mxu0 %v1562
        %2477 = vmatprep.subr.mxu0 0.0
        %2478 = vmatpush1.msra.mxu0 %v1561
        %2479 = vmatprep.subr.mxu0 0.0
        %2480 = vmatpush1.msra.mxu0 %v1560
        %2481 = vmatprep.subr.mxu0 0.0
        %2482 = vmatpush1.msra.mxu0 %v1559
        %2483 = vmatprep.subr.mxu0 0.0
        %2484 = vmatpush1.msra.mxu0 %v1558
        %2485 = vmatprep.subr.mxu0 0.0
        %2486 = vmatpush1.msra.mxu0 %v1557
        %2487 = vmatprep.subr.mxu0 0.0
        %2488 = vmatpush1.msra.mxu0 %v1556
        %2489 = vmatprep.subr.mxu0 0.0
        %2490 = vmatpush1.msra.mxu0 %v1555
        %2491 = vmatprep.subr.mxu0 0.0
        %2492 = vmatpush1.msra.mxu0 %v1554
        %2493 = vmatprep.subr.mxu0 0.0
        %2494 = vmatpush1.msra.mxu0 %v1553
        %2495 = vmatprep.subr.mxu0 0.0
        %2496 = vmatpush1.msra.mxu0 %v1552
        %2497 = vmatprep.subr.mxu0 0.0
        %2498 = vmatpush1.msra.mxu0 %v1551
        %2499 = vmatprep.subr.mxu0 0.0
        %2500 = vmatpush2.msra.mxu0 0.0
        %2501 = vmatprep.subr.mxu0 0.0
        %2502 = vmatpush2.msra.mxu0 0.0
        %2503 = vmatprep.subr.mxu0 0.0
        %2504 = vmatpush2.msra.mxu0 0.0
        %2505 = vmatprep.subr.mxu0 0.0
        %2506 = vmatpush2.msra.mxu0 0.0
        %2507 = vmatprep.subr.mxu0 0.0
        %2508 = vmatpush2.msra.mxu0 0.0
        %2509 = vmatprep.subr.mxu0 0.0
        %2510 = vmatpush2.msra.mxu0 0.0
        %2511 = vmatprep.subr.mxu0 0.0
        %2512 = vmatpush2.msra.mxu0 0.0
        %2513 = vmatprep.subr.mxu0 0.0
        %2514 = vmatpush2.msra.mxu0 0.0
        %2515 = vmatprep.subr.mxu0 0.0
        %2516 = vmatpush2.msra.mxu0 0.0
        %2517 = vmatprep.subr.mxu0 0.0
        %2518 = vmatpush2.msra.mxu0 0.0
        %2519 = vmatprep.subr.mxu0 0.0
        %2520 = vmatpush2.msra.mxu0 0.0
        %2521 = vmatprep.subr.mxu0 0.0
        %2522 = vmatpush2.msra.mxu0 0.0
        %2523 = vmatprep.subr.mxu0 0.0
        %2524 = vmatpush2.msra.mxu0 0.0
        %2525 = vmatprep.subr.mxu0 0.0
        %2526 = vmatpush2.msra.mxu0 0.0
        %2527 = vmatprep.subr.mxu0 0.0
        %2528 = vmatpush2.msra.mxu0 0.0
        %2529 = vmatprep.subr.mxu0 0.0
        %2530 = vmatpush2.msra.mxu0 0.0
        %2531 = vmatprep.mubr.f32.mxu0 0.0
        %2532 = vmatmul.mubr.f32.gmra.mxu0 %v1391
        %v2533 = vpop.f32.mrf.mxu0
        %v2534 = vadd.f32 %v2309, %v2533
        %v2535 = vpop.f32.mrf.mxu0
        %2536 = vmatprep.mubr.f32.mxu0 0.0
        %2537 = vmatmul.mubr.f32.gmra.mxu0 %v1392
        %v2538 = vpop.f32.mrf.mxu0
        %v2539 = vadd.f32 %v2314, %v2538
        %v2540 = vpop.f32.mrf.mxu0
        %2541 = vmatprep.mubr.f32.mxu0 0.0
        %2542 = vmatmul.mubr.f32.gmra.mxu0 %v1393
        %v2543 = vpop.f32.mrf.mxu0
        %v2544 = vadd.f32 %v2319, %v2543
        %v2545 = vpop.f32.mrf.mxu0
        %2546 = vmatprep.mubr.f32.mxu0 0.0
        %2547 = vmatmul.mubr.f32.gmra.mxu0 %v1394
        %v2548 = vpop.f32.mrf.mxu0
        %v2549 = vadd.f32 %v2324, %v2548
        %v2550 = vpop.f32.mrf.mxu0
        %2551 = vmatprep.mubr.f32.mxu0 0.0
        %2552 = vmatmul.mubr.f32.gmra.mxu0 %v1395
        %v2553 = vpop.f32.mrf.mxu0
        %v2554 = vadd.f32 %v2329, %v2553
        %v2555 = vpop.f32.mrf.mxu0
        %2556 = vmatprep.mubr.f32.mxu0 0.0
        %2557 = vmatmul.mubr.f32.gmra.mxu0 %v1396
        %v2558 = vpop.f32.mrf.mxu0
        %v2559 = vadd.f32 %v2334, %v2558
        %v2560 = vpop.f32.mrf.mxu0
        %2561 = vmatprep.mubr.f32.mxu0 0.0
        %2562 = vmatmul.mubr.f32.gmra.mxu0 %v1397
        %v2563 = vpop.f32.mrf.mxu0
        %v2564 = vadd.f32 %v2339, %v2563
        %v2565 = vpop.f32.mrf.mxu0
        %2566 = vmatprep.mubr.f32.mxu0 0.0
        %2567 = vmatmul.mubr.f32.gmra.mxu0 %v1398
        %v2568 = vpop.f32.mrf.mxu0
        %v2569 = vadd.f32 %v2344, %v2568
        %v2570 = vpop.f32.mrf.mxu0
        %2571 = vmatprep.mubr.f32.mxu0 0.0
        %2572 = vmatmul.mubr.f32.gmra.mxu0 %v1399
        %v2573 = vpop.f32.mrf.mxu0
        %v2574 = vadd.f32 %v2349, %v2573
        %v2575 = vpop.f32.mrf.mxu0
        %2576 = vmatprep.mubr.f32.mxu0 0.0
        %2577 = vmatmul.mubr.f32.gmra.mxu0 %v1400
        %v2578 = vpop.f32.mrf.mxu0
        %v2579 = vadd.f32 %v2354, %v2578
        %v2580 = vpop.f32.mrf.mxu0
        %2581 = vmatprep.mubr.f32.mxu0 0.0
        %2582 = vmatmul.mubr.f32.gmra.mxu0 %v1401
        %v2583 = vpop.f32.mrf.mxu0
        %v2584 = vadd.f32 %v2359, %v2583
        %v2585 = vpop.f32.mrf.mxu0
        %2586 = vmatprep.mubr.f32.mxu0 0.0
        %2587 = vmatmul.mubr.f32.gmra.mxu0 %v1402
        %v2588 = vpop.f32.mrf.mxu0
        %v2589 = vadd.f32 %v2364, %v2588
        %v2590 = vpop.f32.mrf.mxu0
        %2591 = vmatprep.mubr.f32.mxu0 0.0
        %2592 = vmatmul.mubr.f32.gmra.mxu0 %v1403
        %v2593 = vpop.f32.mrf.mxu0
        %v2594 = vadd.f32 %v2369, %v2593
        %v2595 = vpop.f32.mrf.mxu0
        %2596 = vmatprep.mubr.f32.mxu0 0.0
        %2597 = vmatmul.mubr.f32.gmra.mxu0 %v1404
        %v2598 = vpop.f32.mrf.mxu0
        %v2599 = vadd.f32 %v2374, %v2598
        %v2600 = vpop.f32.mrf.mxu0
        %2601 = vmatprep.mubr.f32.mxu0 0.0
        %2602 = vmatmul.mubr.f32.gmra.mxu0 %v1405
        %v2603 = vpop.f32.mrf.mxu0
        %v2604 = vadd.f32 %v2379, %v2603
        %v2605 = vpop.f32.mrf.mxu0
        %2606 = vmatprep.mubr.f32.mxu0 0.0
        %2607 = vmatmul.mubr.f32.gmra.mxu0 %v1406
        %v2608 = vpop.f32.mrf.mxu0
        %v2609 = vadd.f32 %v2384, %v2608
        %v2610 = vpop.f32.mrf.mxu0
        %2611 = vmatprep.mubr.f32.mxu0 0.0
        %2612 = vmatmul.mubr.f32.gmra.mxu0 %v1407
        %v2613 = vpop.f32.mrf.mxu0
        %v2614 = vadd.f32 %v2389, %v2613
        %v2615 = vpop.f32.mrf.mxu0
        %2616 = vmatprep.mubr.f32.mxu0 0.0
        %2617 = vmatmul.mubr.f32.gmra.mxu0 %v1408
        %v2618 = vpop.f32.mrf.mxu0
        %v2619 = vadd.f32 %v2394, %v2618
        %v2620 = vpop.f32.mrf.mxu0
        %2621 = vmatprep.mubr.f32.mxu0 0.0
        %2622 = vmatmul.mubr.f32.gmra.mxu0 %v1409
        %v2623 = vpop.f32.mrf.mxu0
        %v2624 = vadd.f32 %v2399, %v2623
        %v2625 = vpop.f32.mrf.mxu0
        %2626 = vmatprep.mubr.f32.mxu0 0.0
        %2627 = vmatmul.mubr.f32.gmra.mxu0 %v1410
        %v2628 = vpop.f32.mrf.mxu0
        %v2629 = vadd.f32 %v2404, %v2628
        %v2630 = vpop.f32.mrf.mxu0
        %2631 = vmatprep.mubr.f32.mxu0 0.0
        %2632 = vmatmul.mubr.f32.gmra.mxu0 %v1411
        %v2633 = vpop.f32.mrf.mxu0
        %v2634 = vadd.f32 %v2409, %v2633
        %v2635 = vpop.f32.mrf.mxu0
        %2636 = vmatprep.mubr.f32.mxu0 0.0
        %2637 = vmatmul.mubr.f32.gmra.mxu0 %v1412
        %v2638 = vpop.f32.mrf.mxu0
        %v2639 = vadd.f32 %v2414, %v2638
        %v2640 = vpop.f32.mrf.mxu0
        %2641 = vmatprep.mubr.f32.mxu0 0.0
        %2642 = vmatmul.mubr.f32.gmra.mxu0 %v1413
        %v2643 = vpop.f32.mrf.mxu0
        %v2644 = vadd.f32 %v2419, %v2643
        %v2645 = vpop.f32.mrf.mxu0
        %2646 = vmatprep.mubr.f32.mxu0 0.0
        %2647 = vmatmul.mubr.f32.gmra.mxu0 %v1414
        %v2648 = vpop.f32.mrf.mxu0
        %v2649 = vadd.f32 %v2424, %v2648
        %v2650 = vpop.f32.mrf.mxu0
        %2651 = vmatprep.mubr.f32.mxu0 0.0
        %2652 = vmatmul.mubr.f32.gmra.mxu0 %v1415
        %v2653 = vpop.f32.mrf.mxu0
        %v2654 = vadd.f32 %v2429, %v2653
        %v2655 = vpop.f32.mrf.mxu0
        %2656 = vmatprep.mubr.f32.mxu0 0.0
        %2657 = vmatmul.mubr.f32.gmra.mxu0 %v1416
        %v2658 = vpop.f32.mrf.mxu0
        %v2659 = vadd.f32 %v2434, %v2658
        %v2660 = vpop.f32.mrf.mxu0
        %2661 = vmatprep.mubr.f32.mxu0 0.0
        %2662 = vmatmul.mubr.f32.gmra.mxu0 %v1417
        %v2663 = vpop.f32.mrf.mxu0
        %v2664 = vadd.f32 %v2439, %v2663
        %v2665 = vpop.f32.mrf.mxu0
        %2666 = vmatprep.mubr.f32.mxu0 0.0
        %2667 = vmatmul.mubr.f32.gmra.mxu0 %v1418
        %v2668 = vpop.f32.mrf.mxu0
        %v2669 = vadd.f32 %v2444, %v2668
        %v2670 = vpop.f32.mrf.mxu0
        %2671 = vmatprep.mubr.f32.mxu0 0.0
        %2672 = vmatmul.mubr.f32.gmra.mxu0 %v1419
        %v2673 = vpop.f32.mrf.mxu0
        %v2674 = vadd.f32 %v2449, %v2673
        %v2675 = vpop.f32.mrf.mxu0
        %2676 = vmatprep.mubr.f32.mxu0 0.0
        %2677 = vmatmul.mubr.f32.gmra.mxu0 %v1420
        %v2678 = vpop.f32.mrf.mxu0
        %v2679 = vadd.f32 %v2454, %v2678
        %v2680 = vpop.f32.mrf.mxu0
        %2681 = vmatprep.mubr.f32.mxu0 0.0
        %2682 = vmatmul.mubr.f32.gmra.mxu0 %v1421
        %v2683 = vpop.f32.mrf.mxu0
        %v2684 = vadd.f32 %v2459, %v2683
        %v2685 = vpop.f32.mrf.mxu0
        %2686 = vmatprep.mubr.f32.mxu0 0.0
        %2687 = vmatmul.mubr.f32.gmra.mxu0 %v1422
        %v2688 = vpop.f32.mrf.mxu0
        %v2689 = vadd.f32 %v2464, %v2688
        %v2690 = vpop.f32.mrf.mxu0
        %2691 = vdwg.mxu0
        %v2692 = vld [vmem:[%s5] sm:$0x1]
        %v2693 = vld [vmem:[%s6] sm:$0x1]
        %v2694 = vadd.f32 %v2534, %v2539
        %v2695 = vadd.f32 %v2694, %v2544
        %v2696 = vadd.f32 %v2695, %v2549
        %v2697 = vadd.f32 %v2696, %v2554
        %v2698 = vadd.f32 %v2697, %v2559
        %v2699 = vadd.f32 %v2698, %v2564
        %v2700 = vadd.f32 %v2699, %v2569
        %v2701 = vadd.f32 %v2700, %v2574
        %v2702 = vadd.f32 %v2701, %v2579
        %v2703 = vadd.f32 %v2702, %v2584
        %v2704 = vadd.f32 %v2703, %v2589
        %v2705 = vadd.f32 %v2704, %v2594
        %v2706 = vadd.f32 %v2705, %v2599
        %v2707 = vadd.f32 %v2706, %v2604
        %v2708 = vadd.f32 %v2707, %v2609
        %v2709 = vadd.f32 %v2708, %v2614
        %v2710 = vadd.f32 %v2709, %v2619
        %v2711 = vadd.f32 %v2710, %v2624
        %v2712 = vadd.f32 %v2711, %v2629
        %v2713 = vadd.f32 %v2712, %v2634
        %v2714 = vadd.f32 %v2713, %v2639
        %v2715 = vadd.f32 %v2714, %v2644
        %v2716 = vadd.f32 %v2715, %v2649
        %v2717 = vadd.f32 %v2716, %v2654
        %v2718 = vadd.f32 %v2717, %v2659
        %v2719 = vadd.f32 %v2718, %v2664
        %v2720 = vadd.f32 %v2719, %v2669
        %v2721 = vadd.f32 %v2720, %v2674
        %v2722 = vadd.f32 %v2721, %v2679
        %v2723 = vadd.f32 %v2722, %v2684
        %v2724 = vadd.f32 %v2723, %v2689
        %2725 = vadd.xlane.f32.xlu0 %v2724
        %v2726 = vpop.xlane.xlu0 %2725
        %v2727 = vrot.slane %v2726, 4
        %v2728 = vadd.f32 %v2726, %v2727
        %v2729 = vrot.slane %v2728, 2
        %v2730 = vadd.f32 %v2728, %v2729
        %v2731 = vrot.slane %v2730, 1
        %v2732 = vadd.f32 %v2730, %v2731
        %s2733 = vtos %v2732
        %v2734 = vmul.f32 %v2534, %v2534
        %v2735 = vmul.f32 %v2539, %v2539
        %v2736 = vmul.f32 %v2544, %v2544
        %v2737 = vmul.f32 %v2549, %v2549
        %v2738 = vmul.f32 %v2554, %v2554
        %v2739 = vmul.f32 %v2559, %v2559
        %v2740 = vmul.f32 %v2564, %v2564
        %v2741 = vmul.f32 %v2569, %v2569
        %v2742 = vmul.f32 %v2574, %v2574
        %v2743 = vmul.f32 %v2579, %v2579
        %v2744 = vmul.f32 %v2584, %v2584
        %v2745 = vmul.f32 %v2589, %v2589
        %v2746 = vmul.f32 %v2594, %v2594
        %v2747 = vmul.f32 %v2599, %v2599
        %v2748 = vmul.f32 %v2604, %v2604
        %v2749 = vmul.f32 %v2609, %v2609
        %v2750 = vmul.f32 %v2614, %v2614
        %v2751 = vmul.f32 %v2619, %v2619
        %v2752 = vmul.f32 %v2624, %v2624
        %v2753 = vmul.f32 %v2629, %v2629
        %v2754 = vmul.f32 %v2634, %v2634
        %v2755 = vmul.f32 %v2639, %v2639
        %v2756 = vmul.f32 %v2644, %v2644
        %v2757 = vmul.f32 %v2649, %v2649
        %v2758 = vmul.f32 %v2654, %v2654
        %v2759 = vmul.f32 %v2659, %v2659
        %v2760 = vmul.f32 %v2664, %v2664
        %v2761 = vmul.f32 %v2669, %v2669
        %v2762 = vmul.f32 %v2674, %v2674
        %v2763 = vmul.f32 %v2679, %v2679
        %v2764 = vmul.f32 %v2684, %v2684
        %v2765 = vmul.f32 %v2689, %v2689
        %v2766 = vadd.f32 %v2734, %v2735
        %v2767 = vadd.f32 %v2766, %v2736
        %v2768 = vadd.f32 %v2767, %v2737
        %v2769 = vadd.f32 %v2768, %v2738
        %v2770 = vadd.f32 %v2769, %v2739
        %v2771 = vadd.f32 %v2770, %v2740
        %v2772 = vadd.f32 %v2771, %v2741
        %v2773 = vadd.f32 %v2772, %v2742
        %v2774 = vadd.f32 %v2773, %v2743
        %v2775 = vadd.f32 %v2774, %v2744
        %v2776 = vadd.f32 %v2775, %v2745
        %v2777 = vadd.f32 %v2776, %v2746
        %v2778 = vadd.f32 %v2777, %v2747
        %v2779 = vadd.f32 %v2778, %v2748
        %v2780 = vadd.f32 %v2779, %v2749
        %v2781 = vadd.f32 %v2780, %v2750
        %v2782 = vadd.f32 %v2781, %v2751
        %v2783 = vadd.f32 %v2782, %v2752
        %v2784 = vadd.f32 %v2783, %v2753
        %v2785 = vadd.f32 %v2784, %v2754
        %v2786 = vadd.f32 %v2785, %v2755
        %v2787 = vadd.f32 %v2786, %v2756
        %v2788 = vadd.f32 %v2787, %v2757
        %v2789 = vadd.f32 %v2788, %v2758
        %v2790 = vadd.f32 %v2789, %v2759
        %v2791 = vadd.f32 %v2790, %v2760
        %v2792 = vadd.f32 %v2791, %v2761
        %v2793 = vadd.f32 %v2792, %v2762
        %v2794 = vadd.f32 %v2793, %v2763
        %v2795 = vadd.f32 %v2794, %v2764
        %v2796 = vadd.f32 %v2795, %v2765
        %2797 = vadd.xlane.f32.xlu0 %v2796
        %v2798 = vpop.xlane.xlu0 %2797
        %v2799 = vrot.slane %v2798, 4
        %v2800 = vadd.f32 %v2798, %v2799
        %v2801 = vrot.slane %v2800, 2
        %v2802 = vadd.f32 %v2800, %v2801
        %v2803 = vrot.slane %v2802, 1
        %v2804 = vadd.f32 %v2802, %v2803
        %s2805 = vtos %v2804
        %v2806 = vrcp.pop 1024.0
        %s2807 = vtos %v2806
        %s2808 = smul.f32 %s2733, %s2807
        %v2809 = vrcp.pop 1024.0
        %s2810 = vtos %v2809
        %s2811 = smul.f32 %s2805, %s2810
        %s2812 = smul.f32 %s2808, %s2808
        %s2813 = ssub.f32 %s2811, %s2812
        %s2814 = sadd.f32 %s2813, 1e-05
        %v2815 = vstv %s2814
        %v2816 = vrsqrt.pop %v2815
        %s2817 = vtos %v2816
        %v2818 = vstv %s2817
        %v2819 = vmul.f32 %v2692, %v2818
        %v2820 = vstv %s2808
        %v2821 = vmul.f32 %v2820, %v2819
        %v2822 = vsub.f32 %v2693, %v2821
        %v2824 = vlaneseq
        %v2825 = vshrl.u32 %v2824, 7
        %v2826 = vsub.s32 0, %v2825
        %v2827 = vrot.slane %v2819, %v2826
        %v2829 = vmul.f32 %v2534, %v2827
        %v2830 = vmul.f32 %v2539, %v2827
        %v2831 = vmul.f32 %v2544, %v2827
        %v2832 = vmul.f32 %v2549, %v2827
        %v2833 = vmul.f32 %v2554, %v2827
        %v2834 = vmul.f32 %v2559, %v2827
        %v2835 = vmul.f32 %v2564, %v2827
        %v2836 = vmul.f32 %v2569, %v2827
        %v2837 = vmul.f32 %v2574, %v2827
        %v2838 = vmul.f32 %v2579, %v2827
        %v2839 = vmul.f32 %v2584, %v2827
        %v2840 = vmul.f32 %v2589, %v2827
        %v2841 = vmul.f32 %v2594, %v2827
        %v2842 = vmul.f32 %v2599, %v2827
        %v2843 = vmul.f32 %v2604, %v2827
        %v2844 = vmul.f32 %v2609, %v2827
        %v2845 = vmul.f32 %v2614, %v2827
        %v2846 = vmul.f32 %v2619, %v2827
        %v2847 = vmul.f32 %v2624, %v2827
        %v2848 = vmul.f32 %v2629, %v2827
        %v2849 = vmul.f32 %v2634, %v2827
        %v2850 = vmul.f32 %v2639, %v2827
        %v2851 = vmul.f32 %v2644, %v2827
        %v2852 = vmul.f32 %v2649, %v2827
        %v2853 = vmul.f32 %v2654, %v2827
        %v2854 = vmul.f32 %v2659, %v2827
        %v2855 = vmul.f32 %v2664, %v2827
        %v2856 = vmul.f32 %v2669, %v2827
        %v2857 = vmul.f32 %v2674, %v2827
        %v2858 = vmul.f32 %v2679, %v2827
        %v2859 = vmul.f32 %v2684, %v2827
        %v2860 = vmul.f32 %v2689, %v2827
        %v2862 = vlaneseq
        %v2863 = vshrl.u32 %v2862, 7
        %v2864 = vsub.s32 0, %v2863
        %v2865 = vrot.slane %v2822, %v2864
        %v2867 = vadd.f32 %v2829, %v2865
        %v2868 = vadd.f32 %v2830, %v2865
        %v2869 = vadd.f32 %v2831, %v2865
        %v2870 = vadd.f32 %v2832, %v2865
        %v2871 = vadd.f32 %v2833, %v2865
        %v2872 = vadd.f32 %v2834, %v2865
        %v2873 = vadd.f32 %v2835, %v2865
        %v2874 = vadd.f32 %v2836, %v2865
        %v2875 = vadd.f32 %v2837, %v2865
        %v2876 = vadd.f32 %v2838, %v2865
        %v2877 = vadd.f32 %v2839, %v2865
        %v2878 = vadd.f32 %v2840, %v2865
        %v2879 = vadd.f32 %v2841, %v2865
        %v2880 = vadd.f32 %v2842, %v2865
        %v2881 = vadd.f32 %v2843, %v2865
        %v2882 = vadd.f32 %v2844, %v2865
        %v2883 = vadd.f32 %v2845, %v2865
        %v2884 = vadd.f32 %v2846, %v2865
        %v2885 = vadd.f32 %v2847, %v2865
        %v2886 = vadd.f32 %v2848, %v2865
        %v2887 = vadd.f32 %v2849, %v2865
        %v2888 = vadd.f32 %v2850, %v2865
        %v2889 = vadd.f32 %v2851, %v2865
        %v2890 = vadd.f32 %v2852, %v2865
        %v2891 = vadd.f32 %v2853, %v2865
        %v2892 = vadd.f32 %v2854, %v2865
        %v2893 = vadd.f32 %v2855, %v2865
        %v2894 = vadd.f32 %v2856, %v2865
        %v2895 = vadd.f32 %v2857, %v2865
        %v2896 = vadd.f32 %v2858, %v2865
        %v2897 = vadd.f32 %v2859, %v2865
        %v2898 = vadd.f32 %v2860, %v2865
        %v2899 = vmax.f32 %v2867, 0.0
        %v2900 = vmax.f32 %v2868, 0.0
        %v2901 = vmax.f32 %v2869, 0.0
        %v2902 = vmax.f32 %v2870, 0.0
        %v2903 = vmax.f32 %v2871, 0.0
        %v2904 = vmax.f32 %v2872, 0.0
        %v2905 = vmax.f32 %v2873, 0.0
        %v2906 = vmax.f32 %v2874, 0.0
        %v2907 = vmax.f32 %v2875, 0.0
        %v2908 = vmax.f32 %v2876, 0.0
        %v2909 = vmax.f32 %v2877, 0.0
        %v2910 = vmax.f32 %v2878, 0.0
        %v2911 = vmax.f32 %v2879, 0.0
        %v2912 = vmax.f32 %v2880, 0.0
        %v2913 = vmax.f32 %v2881, 0.0
        %v2914 = vmax.f32 %v2882, 0.0
        %v2915 = vmax.f32 %v2883, 0.0
        %v2916 = vmax.f32 %v2884, 0.0
        %v2917 = vmax.f32 %v2885, 0.0
        %v2918 = vmax.f32 %v2886, 0.0
        %v2919 = vmax.f32 %v2887, 0.0
        %v2920 = vmax.f32 %v2888, 0.0
        %v2921 = vmax.f32 %v2889, 0.0
        %v2922 = vmax.f32 %v2890, 0.0
        %v2923 = vmax.f32 %v2891, 0.0
        %v2924 = vmax.f32 %v2892, 0.0
        %v2925 = vmax.f32 %v2893, 0.0
        %v2926 = vmax.f32 %v2894, 0.0
        %v2927 = vmax.f32 %v2895, 0.0
        %v2928 = vmax.f32 %v2896, 0.0
        %v2929 = vmax.f32 %v2897, 0.0
        %v2930 = vmax.f32 %v2898, 0.0
        %v2931 = vld [vmem:[#allocation9] sm:$0xff]
        %v2932 = vld [vmem:[#allocation9 + $0x8] sm:$0xff]
        %v2933 = vld [vmem:[#allocation9 + $0x10] sm:$0xff]
        %v2934 = vld [vmem:[#allocation9 + $0x18] sm:$0xff]
        %v2935 = vld [vmem:[#allocation9 + $0x20] sm:$0xff]
        %v2936 = vld [vmem:[#allocation9 + $0x28] sm:$0xff]
        %v2937 = vld [vmem:[#allocation9 + $0x30] sm:$0xff]
        %v2938 = vld [vmem:[#allocation9 + $0x38] sm:$0xff]
        %v2939 = vld [vmem:[#allocation9 + $0x40] sm:$0xff]
        %v2940 = vld [vmem:[#allocation9 + $0x48] sm:$0xff]
        %v2941 = vld [vmem:[#allocation9 + $0x50] sm:$0xff]
        %v2942 = vld [vmem:[#allocation9 + $0x58] sm:$0xff]
        %v2943 = vld [vmem:[#allocation9 + $0x60] sm:$0xff]
        %v2944 = vld [vmem:[#allocation9 + $0x68] sm:$0xff]
        %v2945 = vld [vmem:[#allocation9 + $0x70] sm:$0xff]
        %v2946 = vld [vmem:[#allocation9 + $0x78] sm:$0xff]
        %2947 = vmatprep.subr.mxu0 0.0
        %2948 = vmatpush1.msra.mxu0 %v2946
        %2949 = vmatprep.subr.mxu0 0.0
        %2950 = vmatpush1.msra.mxu0 %v2945
        %2951 = vmatprep.subr.mxu0 0.0
        %2952 = vmatpush1.msra.mxu0 %v2944
        %2953 = vmatprep.subr.mxu0 0.0
        %2954 = vmatpush1.msra.mxu0 %v2943
        %2955 = vmatprep.subr.mxu0 0.0
        %2956 = vmatpush1.msra.mxu0 %v2942
        %2957 = vmatprep.subr.mxu0 0.0
        %2958 = vmatpush1.msra.mxu0 %v2941
        %2959 = vmatprep.subr.mxu0 0.0
        %2960 = vmatpush1.msra.mxu0 %v2940
        %2961 = vmatprep.subr.mxu0 0.0
        %2962 = vmatpush1.msra.mxu0 %v2939
        %2963 = vmatprep.subr.mxu0 0.0
        %2964 = vmatpush1.msra.mxu0 %v2938
        %2965 = vmatprep.subr.mxu0 0.0
        %2966 = vmatpush1.msra.mxu0 %v2937
        %2967 = vmatprep.subr.mxu0 0.0
        %2968 = vmatpush1.msra.mxu0 %v2936
        %2969 = vmatprep.subr.mxu0 0.0
        %2970 = vmatpush1.msra.mxu0 %v2935
        %2971 = vmatprep.subr.mxu0 0.0
        %2972 = vmatpush1.msra.mxu0 %v2934
        %2973 = vmatprep.subr.mxu0 0.0
        %2974 = vmatpush1.msra.mxu0 %v2933
        %2975 = vmatprep.subr.mxu0 0.0
        %2976 = vmatpush1.msra.mxu0 %v2932
        %2977 = vmatprep.subr.mxu0 0.0
        %2978 = vmatpush1.msra.mxu0 %v2931
        %2979 = vmatprep.subr.mxu0 0.0
        %2980 = vmatpush2.msra.mxu0 0.0
        %2981 = vmatprep.subr.mxu0 0.0
        %2982 = vmatpush2.msra.mxu0 0.0
        %2983 = vmatprep.subr.mxu0 0.0
        %2984 = vmatpush2.msra.mxu0 0.0
        %2985 = vmatprep.subr.mxu0 0.0
        %2986 = vmatpush2.msra.mxu0 0.0
        %2987 = vmatprep.subr.mxu0 0.0
        %2988 = vmatpush2.msra.mxu0 0.0
        %2989 = vmatprep.subr.mxu0 0.0
        %2990 = vmatpush2.msra.mxu0 0.0
        %2991 = vmatprep.subr.mxu0 0.0
        %2992 = vmatpush2.msra.mxu0 0.0
        %2993 = vmatprep.subr.mxu0 0.0
        %2994 = vmatpush2.msra.mxu0 0.0
        %2995 = vmatprep.subr.mxu0 0.0
        %2996 = vmatpush2.msra.mxu0 0.0
        %2997 = vmatprep.subr.mxu0 0.0
        %2998 = vmatpush2.msra.mxu0 0.0
        %2999 = vmatprep.subr.mxu0 0.0
        %3000 = vmatpush2.msra.mxu0 0.0
        %3001 = vmatprep.subr.mxu0 0.0
        %3002 = vmatpush2.msra.mxu0 0.0
        %3003 = vmatprep.subr.mxu0 0.0
        %3004 = vmatpush2.msra.mxu0 0.0
        %3005 = vmatprep.subr.mxu0 0.0
        %3006 = vmatpush2.msra.mxu0 0.0
        %3007 = vmatprep.subr.mxu0 0.0
        %3008 = vmatpush2.msra.mxu0 0.0
        %3009 = vmatprep.subr.mxu0 0.0
        %3010 = vmatpush2.msra.mxu0 0.0
        %3011 = vmatprep.mubr.f32.mxu0 0.0
        %3012 = vmatmul.mubr.f32.gmra.mxu0 %v2899
        %v3013 = vpop.f32.mrf.mxu0
        %v3014 = vadd.f32 0.0, %v3013
        %v3015 = vpop.f32.mrf.mxu0
        %3016 = vmatprep.mubr.f32.mxu0 0.0
        %3017 = vmatmul.mubr.f32.gmra.mxu0 %v2900
        %v3018 = vpop.f32.mrf.mxu0
        %v3019 = vadd.f32 0.0, %v3018
        %v3020 = vpop.f32.mrf.mxu0
        %3021 = vmatprep.mubr.f32.mxu0 0.0
        %3022 = vmatmul.mubr.f32.gmra.mxu0 %v2901
        %v3023 = vpop.f32.mrf.mxu0
        %v3024 = vadd.f32 0.0, %v3023
        %v3025 = vpop.f32.mrf.mxu0
        %3026 = vmatprep.mubr.f32.mxu0 0.0
        %3027 = vmatmul.mubr.f32.gmra.mxu0 %v2902
        %v3028 = vpop.f32.mrf.mxu0
        %v3029 = vadd.f32 0.0, %v3028
        %v3030 = vpop.f32.mrf.mxu0
        %3031 = vmatprep.mubr.f32.mxu0 0.0
        %3032 = vmatmul.mubr.f32.gmra.mxu0 %v2903
        %v3033 = vpop.f32.mrf.mxu0
        %v3034 = vadd.f32 0.0, %v3033
        %v3035 = vpop.f32.mrf.mxu0
        %3036 = vmatprep.mubr.f32.mxu0 0.0
        %3037 = vmatmul.mubr.f32.gmra.mxu0 %v2904
        %v3038 = vpop.f32.mrf.mxu0
        %v3039 = vadd.f32 0.0, %v3038
        %v3040 = vpop.f32.mrf.mxu0
        %3041 = vmatprep.mubr.f32.mxu0 0.0
        %3042 = vmatmul.mubr.f32.gmra.mxu0 %v2905
        %v3043 = vpop.f32.mrf.mxu0
        %v3044 = vadd.f32 0.0, %v3043
        %v3045 = vpop.f32.mrf.mxu0
        %3046 = vmatprep.mubr.f32.mxu0 0.0
        %3047 = vmatmul.mubr.f32.gmra.mxu0 %v2906
        %v3048 = vpop.f32.mrf.mxu0
        %v3049 = vadd.f32 0.0, %v3048
        %v3050 = vpop.f32.mrf.mxu0
        %3051 = vmatprep.mubr.f32.mxu0 0.0
        %3052 = vmatmul.mubr.f32.gmra.mxu0 %v2907
        %v3053 = vpop.f32.mrf.mxu0
        %v3054 = vadd.f32 0.0, %v3053
        %v3055 = vpop.f32.mrf.mxu0
        %3056 = vmatprep.mubr.f32.mxu0 0.0
        %3057 = vmatmul.mubr.f32.gmra.mxu0 %v2908
        %v3058 = vpop.f32.mrf.mxu0
        %v3059 = vadd.f32 0.0, %v3058
        %v3060 = vpop.f32.mrf.mxu0
        %3061 = vmatprep.mubr.f32.mxu0 0.0
        %3062 = vmatmul.mubr.f32.gmra.mxu0 %v2909
        %v3063 = vpop.f32.mrf.mxu0
        %v3064 = vadd.f32 0.0, %v3063
        %v3065 = vpop.f32.mrf.mxu0
        %3066 = vmatprep.mubr.f32.mxu0 0.0
        %3067 = vmatmul.mubr.f32.gmra.mxu0 %v2910
        %v3068 = vpop.f32.mrf.mxu0
        %v3069 = vadd.f32 0.0, %v3068
        %v3070 = vpop.f32.mrf.mxu0
        %3071 = vmatprep.mubr.f32.mxu0 0.0
        %3072 = vmatmul.mubr.f32.gmra.mxu0 %v2911
        %v3073 = vpop.f32.mrf.mxu0
        %v3074 = vadd.f32 0.0, %v3073
        %v3075 = vpop.f32.mrf.mxu0
        %3076 = vmatprep.mubr.f32.mxu0 0.0
        %3077 = vmatmul.mubr.f32.gmra.mxu0 %v2912
        %v3078 = vpop.f32.mrf.mxu0
        %v3079 = vadd.f32 0.0, %v3078
        %v3080 = vpop.f32.mrf.mxu0
        %3081 = vmatprep.mubr.f32.mxu0 0.0
        %3082 = vmatmul.mubr.f32.gmra.mxu0 %v2913
        %v3083 = vpop.f32.mrf.mxu0
        %v3084 = vadd.f32 0.0, %v3083
        %v3085 = vpop.f32.mrf.mxu0
        %3086 = vmatprep.mubr.f32.mxu0 0.0
        %3087 = vmatmul.mubr.f32.gmra.mxu0 %v2914
        %v3088 = vpop.f32.mrf.mxu0
        %v3089 = vadd.f32 0.0, %v3088
        %v3090 = vpop.f32.mrf.mxu0
        %3091 = vmatprep.mubr.f32.mxu0 0.0
        %3092 = vmatmul.mubr.f32.gmra.mxu0 %v2915
        %v3093 = vpop.f32.mrf.mxu0
        %v3094 = vadd.f32 0.0, %v3093
        %v3095 = vpop.f32.mrf.mxu0
        %3096 = vmatprep.mubr.f32.mxu0 0.0
        %3097 = vmatmul.mubr.f32.gmra.mxu0 %v2916
        %v3098 = vpop.f32.mrf.mxu0
        %v3099 = vadd.f32 0.0, %v3098
        %v3100 = vpop.f32.mrf.mxu0
        %3101 = vmatprep.mubr.f32.mxu0 0.0
        %3102 = vmatmul.mubr.f32.gmra.mxu0 %v2917
        %v3103 = vpop.f32.mrf.mxu0
        %v3104 = vadd.f32 0.0, %v3103
        %v3105 = vpop.f32.mrf.mxu0
        %3106 = vmatprep.mubr.f32.mxu0 0.0
        %3107 = vmatmul.mubr.f32.gmra.mxu0 %v2918
        %v3108 = vpop.f32.mrf.mxu0
        %v3109 = vadd.f32 0.0, %v3108
        %v3110 = vpop.f32.mrf.mxu0
        %3111 = vmatprep.mubr.f32.mxu0 0.0
        %3112 = vmatmul.mubr.f32.gmra.mxu0 %v2919
        %v3113 = vpop.f32.mrf.mxu0
        %v3114 = vadd.f32 0.0, %v3113
        %v3115 = vpop.f32.mrf.mxu0
        %3116 = vmatprep.mubr.f32.mxu0 0.0
        %3117 = vmatmul.mubr.f32.gmra.mxu0 %v2920
        %v3118 = vpop.f32.mrf.mxu0
        %v3119 = vadd.f32 0.0, %v3118
        %v3120 = vpop.f32.mrf.mxu0
        %3121 = vmatprep.mubr.f32.mxu0 0.0
        %3122 = vmatmul.mubr.f32.gmra.mxu0 %v2921
        %v3123 = vpop.f32.mrf.mxu0
        %v3124 = vadd.f32 0.0, %v3123
        %v3125 = vpop.f32.mrf.mxu0
        %3126 = vmatprep.mubr.f32.mxu0 0.0
        %3127 = vmatmul.mubr.f32.gmra.mxu0 %v2922
        %v3128 = vpop.f32.mrf.mxu0
        %v3129 = vadd.f32 0.0, %v3128
        %v3130 = vpop.f32.mrf.mxu0
        %3131 = vmatprep.mubr.f32.mxu0 0.0
        %3132 = vmatmul.mubr.f32.gmra.mxu0 %v2923
        %v3133 = vpop.f32.mrf.mxu0
        %v3134 = vadd.f32 0.0, %v3133
        %v3135 = vpop.f32.mrf.mxu0
        %3136 = vmatprep.mubr.f32.mxu0 0.0
        %3137 = vmatmul.mubr.f32.gmra.mxu0 %v2924
        %v3138 = vpop.f32.mrf.mxu0
        %v3139 = vadd.f32 0.0, %v3138
        %v3140 = vpop.f32.mrf.mxu0
        %3141 = vmatprep.mubr.f32.mxu0 0.0
        %3142 = vmatmul.mubr.f32.gmra.mxu0 %v2925
        %v3143 = vpop.f32.mrf.mxu0
        %v3144 = vadd.f32 0.0, %v3143
        %v3145 = vpop.f32.mrf.mxu0
        %3146 = vmatprep.mubr.f32.mxu0 0.0
        %3147 = vmatmul.mubr.f32.gmra.mxu0 %v2926
        %v3148 = vpop.f32.mrf.mxu0
        %v3149 = vadd.f32 0.0, %v3148
        %v3150 = vpop.f32.mrf.mxu0
        %3151 = vmatprep.mubr.f32.mxu0 0.0
        %3152 = vmatmul.mubr.f32.gmra.mxu0 %v2927
        %v3153 = vpop.f32.mrf.mxu0
        %v3154 = vadd.f32 0.0, %v3153
        %v3155 = vpop.f32.mrf.mxu0
        %3156 = vmatprep.mubr.f32.mxu0 0.0
        %3157 = vmatmul.mubr.f32.gmra.mxu0 %v2928
        %v3158 = vpop.f32.mrf.mxu0
        %v3159 = vadd.f32 0.0, %v3158
        %v3160 = vpop.f32.mrf.mxu0
        %3161 = vmatprep.mubr.f32.mxu0 0.0
        %3162 = vmatmul.mubr.f32.gmra.mxu0 %v2929
        %v3163 = vpop.f32.mrf.mxu0
        %v3164 = vadd.f32 0.0, %v3163
        %v3165 = vpop.f32.mrf.mxu0
        %3166 = vmatprep.mubr.f32.mxu0 0.0
        %3167 = vmatmul.mubr.f32.gmra.mxu0 %v2930
        %v3168 = vpop.f32.mrf.mxu0
        %v3169 = vadd.f32 0.0, %v3168
        %v3170 = vpop.f32.mrf.mxu0
        %3171 = vdwg.mxu0
        %v3172 = vld [vmem:[%s8] sm:$0x1]
        %v3173 = vld [vmem:[%s9] sm:$0x1]
        %v3174 = vadd.f32 %v3014, %v3019
        %v3175 = vadd.f32 %v3174, %v3024
        %v3176 = vadd.f32 %v3175, %v3029
        %v3177 = vadd.f32 %v3176, %v3034
        %v3178 = vadd.f32 %v3177, %v3039
        %v3179 = vadd.f32 %v3178, %v3044
        %v3180 = vadd.f32 %v3179, %v3049
        %v3181 = vadd.f32 %v3180, %v3054
        %v3182 = vadd.f32 %v3181, %v3059
        %v3183 = vadd.f32 %v3182, %v3064
        %v3184 = vadd.f32 %v3183, %v3069
        %v3185 = vadd.f32 %v3184, %v3074
        %v3186 = vadd.f32 %v3185, %v3079
        %v3187 = vadd.f32 %v3186, %v3084
        %v3188 = vadd.f32 %v3187, %v3089
        %v3189 = vadd.f32 %v3188, %v3094
        %v3190 = vadd.f32 %v3189, %v3099
        %v3191 = vadd.f32 %v3190, %v3104
        %v3192 = vadd.f32 %v3191, %v3109
        %v3193 = vadd.f32 %v3192, %v3114
        %v3194 = vadd.f32 %v3193, %v3119
        %v3195 = vadd.f32 %v3194, %v3124
        %v3196 = vadd.f32 %v3195, %v3129
        %v3197 = vadd.f32 %v3196, %v3134
        %v3198 = vadd.f32 %v3197, %v3139
        %v3199 = vadd.f32 %v3198, %v3144
        %v3200 = vadd.f32 %v3199, %v3149
        %v3201 = vadd.f32 %v3200, %v3154
        %v3202 = vadd.f32 %v3201, %v3159
        %v3203 = vadd.f32 %v3202, %v3164
        %v3204 = vadd.f32 %v3203, %v3169
        %3205 = vadd.xlane.f32.xlu0 %v3204
        %v3206 = vpop.xlane.xlu0 %3205
        %v3207 = vrot.slane %v3206, 4
        %v3208 = vadd.f32 %v3206, %v3207
        %v3209 = vrot.slane %v3208, 2
        %v3210 = vadd.f32 %v3208, %v3209
        %v3211 = vrot.slane %v3210, 1
        %v3212 = vadd.f32 %v3210, %v3211
        %s3213 = vtos %v3212
        %v3214 = vmul.f32 %v3014, %v3014
        %v3215 = vmul.f32 %v3019, %v3019
        %v3216 = vmul.f32 %v3024, %v3024
        %v3217 = vmul.f32 %v3029, %v3029
        %v3218 = vmul.f32 %v3034, %v3034
        %v3219 = vmul.f32 %v3039, %v3039
        %v3220 = vmul.f32 %v3044, %v3044
        %v3221 = vmul.f32 %v3049, %v3049
        %v3222 = vmul.f32 %v3054, %v3054
        %v3223 = vmul.f32 %v3059, %v3059
        %v3224 = vmul.f32 %v3064, %v3064
        %v3225 = vmul.f32 %v3069, %v3069
        %v3226 = vmul.f32 %v3074, %v3074
        %v3227 = vmul.f32 %v3079, %v3079
        %v3228 = vmul.f32 %v3084, %v3084
        %v3229 = vmul.f32 %v3089, %v3089
        %v3230 = vmul.f32 %v3094, %v3094
        %v3231 = vmul.f32 %v3099, %v3099
        %v3232 = vmul.f32 %v3104, %v3104
        %v3233 = vmul.f32 %v3109, %v3109
        %v3234 = vmul.f32 %v3114, %v3114
        %v3235 = vmul.f32 %v3119, %v3119
        %v3236 = vmul.f32 %v3124, %v3124
        %v3237 = vmul.f32 %v3129, %v3129
        %v3238 = vmul.f32 %v3134, %v3134
        %v3239 = vmul.f32 %v3139, %v3139
        %v3240 = vmul.f32 %v3144, %v3144
        %v3241 = vmul.f32 %v3149, %v3149
        %v3242 = vmul.f32 %v3154, %v3154
        %v3243 = vmul.f32 %v3159, %v3159
        %v3244 = vmul.f32 %v3164, %v3164
        %v3245 = vmul.f32 %v3169, %v3169
        %v3246 = vadd.f32 %v3214, %v3215
        %v3247 = vadd.f32 %v3246, %v3216
        %v3248 = vadd.f32 %v3247, %v3217
        %v3249 = vadd.f32 %v3248, %v3218
        %v3250 = vadd.f32 %v3249, %v3219
        %v3251 = vadd.f32 %v3250, %v3220
        %v3252 = vadd.f32 %v3251, %v3221
        %v3253 = vadd.f32 %v3252, %v3222
        %v3254 = vadd.f32 %v3253, %v3223
        %v3255 = vadd.f32 %v3254, %v3224
        %v3256 = vadd.f32 %v3255, %v3225
        %v3257 = vadd.f32 %v3256, %v3226
        %v3258 = vadd.f32 %v3257, %v3227
        %v3259 = vadd.f32 %v3258, %v3228
        %v3260 = vadd.f32 %v3259, %v3229
        %v3261 = vadd.f32 %v3260, %v3230
        %v3262 = vadd.f32 %v3261, %v3231
        %v3263 = vadd.f32 %v3262, %v3232
        %v3264 = vadd.f32 %v3263, %v3233
        %v3265 = vadd.f32 %v3264, %v3234
        %v3266 = vadd.f32 %v3265, %v3235
        %v3267 = vadd.f32 %v3266, %v3236
        %v3268 = vadd.f32 %v3267, %v3237
        %v3269 = vadd.f32 %v3268, %v3238
        %v3270 = vadd.f32 %v3269, %v3239
        %v3271 = vadd.f32 %v3270, %v3240
        %v3272 = vadd.f32 %v3271, %v3241
        %v3273 = vadd.f32 %v3272, %v3242
        %v3274 = vadd.f32 %v3273, %v3243
        %v3275 = vadd.f32 %v3274, %v3244
        %v3276 = vadd.f32 %v3275, %v3245
        %3277 = vadd.xlane.f32.xlu0 %v3276
        %v3278 = vpop.xlane.xlu0 %3277
        %v3279 = vrot.slane %v3278, 4
        %v3280 = vadd.f32 %v3278, %v3279
        %v3281 = vrot.slane %v3280, 2
        %v3282 = vadd.f32 %v3280, %v3281
        %v3283 = vrot.slane %v3282, 1
        %v3284 = vadd.f32 %v3282, %v3283
        %s3285 = vtos %v3284
        %v3286 = vrcp.pop 4096.0
        %s3287 = vtos %v3286
        %s3288 = smul.f32 %s3213, %s3287
        %v3289 = vrcp.pop 4096.0
        %s3290 = vtos %v3289
        %s3291 = smul.f32 %s3285, %s3290
        %s3292 = smul.f32 %s3288, %s3288
        %s3293 = ssub.f32 %s3291, %s3292
        %s3294 = sadd.f32 %s3293, 1e-05
        %v3295 = vstv %s3294
        %v3296 = vrsqrt.pop %v3295
        %s3297 = vtos %v3296
        %v3298 = vstv %s3297
        %v3299 = vmul.f32 %v3172, %v3298
        %v3300 = vstv %s3288
        %v3301 = vmul.f32 %v3300, %v3299
        %v3302 = vsub.f32 %v3173, %v3301
        %v3304 = vlaneseq
        %v3305 = vshrl.u32 %v3304, 7
        %v3306 = vsub.s32 0, %v3305
        %v3307 = vrot.slane %v3299, %v3306
        %v3309 = vmul.f32 %v3014, %v3307
        %v3310 = vmul.f32 %v3019, %v3307
        %v3311 = vmul.f32 %v3024, %v3307
        %v3312 = vmul.f32 %v3029, %v3307
        %v3313 = vmul.f32 %v3034, %v3307
        %v3314 = vmul.f32 %v3039, %v3307
        %v3315 = vmul.f32 %v3044, %v3307
        %v3316 = vmul.f32 %v3049, %v3307
        %v3317 = vmul.f32 %v3054, %v3307
        %v3318 = vmul.f32 %v3059, %v3307
        %v3319 = vmul.f32 %v3064, %v3307
        %v3320 = vmul.f32 %v3069, %v3307
        %v3321 = vmul.f32 %v3074, %v3307
        %v3322 = vmul.f32 %v3079, %v3307
        %v3323 = vmul.f32 %v3084, %v3307
        %v3324 = vmul.f32 %v3089, %v3307
        %v3325 = vmul.f32 %v3094, %v3307
        %v3326 = vmul.f32 %v3099, %v3307
        %v3327 = vmul.f32 %v3104, %v3307
        %v3328 = vmul.f32 %v3109, %v3307
        %v3329 = vmul.f32 %v3114, %v3307
        %v3330 = vmul.f32 %v3119, %v3307
        %v3331 = vmul.f32 %v3124, %v3307
        %v3332 = vmul.f32 %v3129, %v3307
        %v3333 = vmul.f32 %v3134, %v3307
        %v3334 = vmul.f32 %v3139, %v3307
        %v3335 = vmul.f32 %v3144, %v3307
        %v3336 = vmul.f32 %v3149, %v3307
        %v3337 = vmul.f32 %v3154, %v3307
        %v3338 = vmul.f32 %v3159, %v3307
        %v3339 = vmul.f32 %v3164, %v3307
        %v3340 = vmul.f32 %v3169, %v3307
        %v3342 = vlaneseq
        %v3343 = vshrl.u32 %v3342, 7
        %v3344 = vsub.s32 0, %v3343
        %v3345 = vrot.slane %v3302, %v3344
        %v3347 = vadd.f32 %v3309, %v3345
        %v3348 = vadd.f32 %v3310, %v3345
        %v3349 = vadd.f32 %v3311, %v3345
        %v3350 = vadd.f32 %v3312, %v3345
        %v3351 = vadd.f32 %v3313, %v3345
        %v3352 = vadd.f32 %v3314, %v3345
        %v3353 = vadd.f32 %v3315, %v3345
        %v3354 = vadd.f32 %v3316, %v3345
        %v3355 = vadd.f32 %v3317, %v3345
        %v3356 = vadd.f32 %v3318, %v3345
        %v3357 = vadd.f32 %v3319, %v3345
        %v3358 = vadd.f32 %v3320, %v3345
        %v3359 = vadd.f32 %v3321, %v3345
        %v3360 = vadd.f32 %v3322, %v3345
        %v3361 = vadd.f32 %v3323, %v3345
        %v3362 = vadd.f32 %v3324, %v3345
        %v3363 = vadd.f32 %v3325, %v3345
        %v3364 = vadd.f32 %v3326, %v3345
        %v3365 = vadd.f32 %v3327, %v3345
        %v3366 = vadd.f32 %v3328, %v3345
        %v3367 = vadd.f32 %v3329, %v3345
        %v3368 = vadd.f32 %v3330, %v3345
        %v3369 = vadd.f32 %v3331, %v3345
        %v3370 = vadd.f32 %v3332, %v3345
        %v3371 = vadd.f32 %v3333, %v3345
        %v3372 = vadd.f32 %v3334, %v3345
        %v3373 = vadd.f32 %v3335, %v3345
        %v3374 = vadd.f32 %v3336, %v3345
        %v3375 = vadd.f32 %v3337, %v3345
        %v3376 = vadd.f32 %v3338, %v3345
        %v3377 = vadd.f32 %v3339, %v3345
        %v3378 = vadd.f32 %v3340, %v3345
        %v3379 = vld [vmem:[#allocation11] sm:$0xff]
        %v3380 = vld [vmem:[#allocation11 + $0x8] sm:$0xff]
        %v3381 = vld [vmem:[#allocation11 + $0x10] sm:$0xff]
        %v3382 = vld [vmem:[#allocation11 + $0x18] sm:$0xff]
        %v3383 = vld [vmem:[#allocation11 + $0x20] sm:$0xff]
        %v3384 = vld [vmem:[#allocation11 + $0x28] sm:$0xff]
        %v3385 = vld [vmem:[#allocation11 + $0x30] sm:$0xff]
        %v3386 = vld [vmem:[#allocation11 + $0x38] sm:$0xff]
        %v3387 = vld [vmem:[#allocation11 + $0x40] sm:$0xff]
        %v3388 = vld [vmem:[#allocation11 + $0x48] sm:$0xff]
        %v3389 = vld [vmem:[#allocation11 + $0x50] sm:$0xff]
        %v3390 = vld [vmem:[#allocation11 + $0x58] sm:$0xff]
        %v3391 = vld [vmem:[#allocation11 + $0x60] sm:$0xff]
        %v3392 = vld [vmem:[#allocation11 + $0x68] sm:$0xff]
        %v3393 = vld [vmem:[#allocation11 + $0x70] sm:$0xff]
        %v3394 = vld [vmem:[#allocation11 + $0x78] sm:$0xff]
        %3395 = vmatprep.subr.mxu0 0.0
        %3396 = vmatpush1.msra.mxu0 %v3394
        %3397 = vmatprep.subr.mxu0 0.0
        %3398 = vmatpush1.msra.mxu0 %v3393
        %3399 = vmatprep.subr.mxu0 0.0
        %3400 = vmatpush1.msra.mxu0 %v3392
        %3401 = vmatprep.subr.mxu0 0.0
        %3402 = vmatpush1.msra.mxu0 %v3391
        %3403 = vmatprep.subr.mxu0 0.0
        %3404 = vmatpush1.msra.mxu0 %v3390
        %3405 = vmatprep.subr.mxu0 0.0
        %3406 = vmatpush1.msra.mxu0 %v3389
        %3407 = vmatprep.subr.mxu0 0.0
        %3408 = vmatpush1.msra.mxu0 %v3388
        %3409 = vmatprep.subr.mxu0 0.0
        %3410 = vmatpush1.msra.mxu0 %v3387
        %3411 = vmatprep.subr.mxu0 0.0
        %3412 = vmatpush1.msra.mxu0 %v3386
        %3413 = vmatprep.subr.mxu0 0.0
        %3414 = vmatpush1.msra.mxu0 %v3385
        %3415 = vmatprep.subr.mxu0 0.0
        %3416 = vmatpush1.msra.mxu0 %v3384
        %3417 = vmatprep.subr.mxu0 0.0
        %3418 = vmatpush1.msra.mxu0 %v3383
        %3419 = vmatprep.subr.mxu0 0.0
        %3420 = vmatpush1.msra.mxu0 %v3382
        %3421 = vmatprep.subr.mxu0 0.0
        %3422 = vmatpush1.msra.mxu0 %v3381
        %3423 = vmatprep.subr.mxu0 0.0
        %3424 = vmatpush1.msra.mxu0 %v3380
        %3425 = vmatprep.subr.mxu0 0.0
        %3426 = vmatpush1.msra.mxu0 %v3379
        %3427 = vmatprep.subr.mxu0 0.0
        %3428 = vmatpush2.msra.mxu0 0.0
        %3429 = vmatprep.subr.mxu0 0.0
        %3430 = vmatpush2.msra.mxu0 0.0
        %3431 = vmatprep.subr.mxu0 0.0
        %3432 = vmatpush2.msra.mxu0 0.0
        %3433 = vmatprep.subr.mxu0 0.0
        %3434 = vmatpush2.msra.mxu0 0.0
        %3435 = vmatprep.subr.mxu0 0.0
        %3436 = vmatpush2.msra.mxu0 0.0
        %3437 = vmatprep.subr.mxu0 0.0
        %3438 = vmatpush2.msra.mxu0 0.0
        %3439 = vmatprep.subr.mxu0 0.0
        %3440 = vmatpush2.msra.mxu0 0.0
        %3441 = vmatprep.subr.mxu0 0.0
        %3442 = vmatpush2.msra.mxu0 0.0
        %3443 = vmatprep.subr.mxu0 0.0
        %3444 = vmatpush2.msra.mxu0 0.0
        %3445 = vmatprep.subr.mxu0 0.0
        %3446 = vmatpush2.msra.mxu0 0.0
        %3447 = vmatprep.subr.mxu0 0.0
        %3448 = vmatpush2.msra.mxu0 0.0
        %3449 = vmatprep.subr.mxu0 0.0
        %3450 = vmatpush2.msra.mxu0 0.0
        %3451 = vmatprep.subr.mxu0 0.0
        %3452 = vmatpush2.msra.mxu0 0.0
        %3453 = vmatprep.subr.mxu0 0.0
        %3454 = vmatpush2.msra.mxu0 0.0
        %3455 = vmatprep.subr.mxu0 0.0
        %3456 = vmatpush2.msra.mxu0 0.0
        %3457 = vmatprep.subr.mxu0 0.0
        %3458 = vmatpush2.msra.mxu0 0.0
        %3459 = vmatprep.mubr.f32.mxu0 0.0
        %3460 = vmatmul.mubr.f32.gmra.mxu0 %v517
        %v3461 = vpop.f32.mrf.mxu0
        %v3462 = vadd.f32 0.0, %v3461
        %v3463 = vpop.f32.mrf.mxu0
        %3464 = vmatprep.mubr.f32.mxu0 0.0
        %3465 = vmatmul.mubr.f32.gmra.mxu0 %v518
        %v3466 = vpop.f32.mrf.mxu0
        %v3467 = vadd.f32 0.0, %v3466
        %v3468 = vpop.f32.mrf.mxu0
        %3469 = vmatprep.mubr.f32.mxu0 0.0
        %3470 = vmatmul.mubr.f32.gmra.mxu0 %v519
        %v3471 = vpop.f32.mrf.mxu0
        %v3472 = vadd.f32 0.0, %v3471
        %v3473 = vpop.f32.mrf.mxu0
        %3474 = vmatprep.mubr.f32.mxu0 0.0
        %3475 = vmatmul.mubr.f32.gmra.mxu0 %v520
        %v3476 = vpop.f32.mrf.mxu0
        %v3477 = vadd.f32 0.0, %v3476
        %v3478 = vpop.f32.mrf.mxu0
        %3479 = vmatprep.mubr.f32.mxu0 0.0
        %3480 = vmatmul.mubr.f32.gmra.mxu0 %v521
        %v3481 = vpop.f32.mrf.mxu0
        %v3482 = vadd.f32 0.0, %v3481
        %v3483 = vpop.f32.mrf.mxu0
        %3484 = vmatprep.mubr.f32.mxu0 0.0
        %3485 = vmatmul.mubr.f32.gmra.mxu0 %v522
        %v3486 = vpop.f32.mrf.mxu0
        %v3487 = vadd.f32 0.0, %v3486
        %v3488 = vpop.f32.mrf.mxu0
        %3489 = vmatprep.mubr.f32.mxu0 0.0
        %3490 = vmatmul.mubr.f32.gmra.mxu0 %v523
        %v3491 = vpop.f32.mrf.mxu0
        %v3492 = vadd.f32 0.0, %v3491
        %v3493 = vpop.f32.mrf.mxu0
        %3494 = vmatprep.mubr.f32.mxu0 0.0
        %3495 = vmatmul.mubr.f32.gmra.mxu0 %v524
        %v3496 = vpop.f32.mrf.mxu0
        %v3497 = vadd.f32 0.0, %v3496
        %v3498 = vpop.f32.mrf.mxu0
        %3499 = vmatprep.mubr.f32.mxu0 0.0
        %3500 = vmatmul.mubr.f32.gmra.mxu0 %v525
        %v3501 = vpop.f32.mrf.mxu0
        %v3502 = vadd.f32 0.0, %v3501
        %v3503 = vpop.f32.mrf.mxu0
        %3504 = vmatprep.mubr.f32.mxu0 0.0
        %3505 = vmatmul.mubr.f32.gmra.mxu0 %v526
        %v3506 = vpop.f32.mrf.mxu0
        %v3507 = vadd.f32 0.0, %v3506
        %v3508 = vpop.f32.mrf.mxu0
        %3509 = vmatprep.mubr.f32.mxu0 0.0
        %3510 = vmatmul.mubr.f32.gmra.mxu0 %v527
        %v3511 = vpop.f32.mrf.mxu0
        %v3512 = vadd.f32 0.0, %v3511
        %v3513 = vpop.f32.mrf.mxu0
        %3514 = vmatprep.mubr.f32.mxu0 0.0
        %3515 = vmatmul.mubr.f32.gmra.mxu0 %v528
        %v3516 = vpop.f32.mrf.mxu0
        %v3517 = vadd.f32 0.0, %v3516
        %v3518 = vpop.f32.mrf.mxu0
        %3519 = vmatprep.mubr.f32.mxu0 0.0
        %3520 = vmatmul.mubr.f32.gmra.mxu0 %v529
        %v3521 = vpop.f32.mrf.mxu0
        %v3522 = vadd.f32 0.0, %v3521
        %v3523 = vpop.f32.mrf.mxu0
        %3524 = vmatprep.mubr.f32.mxu0 0.0
        %3525 = vmatmul.mubr.f32.gmra.mxu0 %v530
        %v3526 = vpop.f32.mrf.mxu0
        %v3527 = vadd.f32 0.0, %v3526
        %v3528 = vpop.f32.mrf.mxu0
        %3529 = vmatprep.mubr.f32.mxu0 0.0
        %3530 = vmatmul.mubr.f32.gmra.mxu0 %v531
        %v3531 = vpop.f32.mrf.mxu0
        %v3532 = vadd.f32 0.0, %v3531
        %v3533 = vpop.f32.mrf.mxu0
        %3534 = vmatprep.mubr.f32.mxu0 0.0
        %3535 = vmatmul.mubr.f32.gmra.mxu0 %v532
        %v3536 = vpop.f32.mrf.mxu0
        %v3537 = vadd.f32 0.0, %v3536
        %v3538 = vpop.f32.mrf.mxu0
        %3539 = vmatprep.mubr.f32.mxu0 0.0
        %3540 = vmatmul.mubr.f32.gmra.mxu0 %v533
        %v3541 = vpop.f32.mrf.mxu0
        %v3542 = vadd.f32 0.0, %v3541
        %v3543 = vpop.f32.mrf.mxu0
        %3544 = vmatprep.mubr.f32.mxu0 0.0
        %3545 = vmatmul.mubr.f32.gmra.mxu0 %v534
        %v3546 = vpop.f32.mrf.mxu0
        %v3547 = vadd.f32 0.0, %v3546
        %v3548 = vpop.f32.mrf.mxu0
        %3549 = vmatprep.mubr.f32.mxu0 0.0
        %3550 = vmatmul.mubr.f32.gmra.mxu0 %v535
        %v3551 = vpop.f32.mrf.mxu0
        %v3552 = vadd.f32 0.0, %v3551
        %v3553 = vpop.f32.mrf.mxu0
        %3554 = vmatprep.mubr.f32.mxu0 0.0
        %3555 = vmatmul.mubr.f32.gmra.mxu0 %v536
        %v3556 = vpop.f32.mrf.mxu0
        %v3557 = vadd.f32 0.0, %v3556
        %v3558 = vpop.f32.mrf.mxu0
        %3559 = vmatprep.mubr.f32.mxu0 0.0
        %3560 = vmatmul.mubr.f32.gmra.mxu0 %v537
        %v3561 = vpop.f32.mrf.mxu0
        %v3562 = vadd.f32 0.0, %v3561
        %v3563 = vpop.f32.mrf.mxu0
        %3564 = vmatprep.mubr.f32.mxu0 0.0
        %3565 = vmatmul.mubr.f32.gmra.mxu0 %v538
        %v3566 = vpop.f32.mrf.mxu0
        %v3567 = vadd.f32 0.0, %v3566
        %v3568 = vpop.f32.mrf.mxu0
        %3569 = vmatprep.mubr.f32.mxu0 0.0
        %3570 = vmatmul.mubr.f32.gmra.mxu0 %v539
        %v3571 = vpop.f32.mrf.mxu0
        %v3572 = vadd.f32 0.0, %v3571
        %v3573 = vpop.f32.mrf.mxu0
        %3574 = vmatprep.mubr.f32.mxu0 0.0
        %3575 = vmatmul.mubr.f32.gmra.mxu0 %v540
        %v3576 = vpop.f32.mrf.mxu0
        %v3577 = vadd.f32 0.0, %v3576
        %v3578 = vpop.f32.mrf.mxu0
        %3579 = vmatprep.mubr.f32.mxu0 0.0
        %3580 = vmatmul.mubr.f32.gmra.mxu0 %v541
        %v3581 = vpop.f32.mrf.mxu0
        %v3582 = vadd.f32 0.0, %v3581
        %v3583 = vpop.f32.mrf.mxu0
        %3584 = vmatprep.mubr.f32.mxu0 0.0
        %3585 = vmatmul.mubr.f32.gmra.mxu0 %v542
        %v3586 = vpop.f32.mrf.mxu0
        %v3587 = vadd.f32 0.0, %v3586
        %v3588 = vpop.f32.mrf.mxu0
        %3589 = vmatprep.mubr.f32.mxu0 0.0
        %3590 = vmatmul.mubr.f32.gmra.mxu0 %v543
        %v3591 = vpop.f32.mrf.mxu0
        %v3592 = vadd.f32 0.0, %v3591
        %v3593 = vpop.f32.mrf.mxu0
        %3594 = vmatprep.mubr.f32.mxu0 0.0
        %3595 = vmatmul.mubr.f32.gmra.mxu0 %v544
        %v3596 = vpop.f32.mrf.mxu0
        %v3597 = vadd.f32 0.0, %v3596
        %v3598 = vpop.f32.mrf.mxu0
        %3599 = vmatprep.mubr.f32.mxu0 0.0
        %3600 = vmatmul.mubr.f32.gmra.mxu0 %v545
        %v3601 = vpop.f32.mrf.mxu0
        %v3602 = vadd.f32 0.0, %v3601
        %v3603 = vpop.f32.mrf.mxu0
        %3604 = vmatprep.mubr.f32.mxu0 0.0
        %3605 = vmatmul.mubr.f32.gmra.mxu0 %v546
        %v3606 = vpop.f32.mrf.mxu0
        %v3607 = vadd.f32 0.0, %v3606
        %v3608 = vpop.f32.mrf.mxu0
        %3609 = vmatprep.mubr.f32.mxu0 0.0
        %3610 = vmatmul.mubr.f32.gmra.mxu0 %v547
        %v3611 = vpop.f32.mrf.mxu0
        %v3612 = vadd.f32 0.0, %v3611
        %v3613 = vpop.f32.mrf.mxu0
        %3614 = vmatprep.mubr.f32.mxu0 0.0
        %3615 = vmatmul.mubr.f32.gmra.mxu0 %v548
        %v3616 = vpop.f32.mrf.mxu0
        %v3617 = vadd.f32 0.0, %v3616
        %v3618 = vpop.f32.mrf.mxu0
        %3619 = vdwg.mxu0
        %v3620 = vld [vmem:[%s11] sm:$0x1]
        %v3621 = vld [vmem:[%s12] sm:$0x1]
        %v3622 = vadd.f32 %v3462, %v3467
        %v3623 = vadd.f32 %v3622, %v3472
        %v3624 = vadd.f32 %v3623, %v3477
        %v3625 = vadd.f32 %v3624, %v3482
        %v3626 = vadd.f32 %v3625, %v3487
        %v3627 = vadd.f32 %v3626, %v3492
        %v3628 = vadd.f32 %v3627, %v3497
        %v3629 = vadd.f32 %v3628, %v3502
        %v3630 = vadd.f32 %v3629, %v3507
        %v3631 = vadd.f32 %v3630, %v3512
        %v3632 = vadd.f32 %v3631, %v3517
        %v3633 = vadd.f32 %v3632, %v3522
        %v3634 = vadd.f32 %v3633, %v3527
        %v3635 = vadd.f32 %v3634, %v3532
        %v3636 = vadd.f32 %v3635, %v3537
        %v3637 = vadd.f32 %v3636, %v3542
        %v3638 = vadd.f32 %v3637, %v3547
        %v3639 = vadd.f32 %v3638, %v3552
        %v3640 = vadd.f32 %v3639, %v3557
        %v3641 = vadd.f32 %v3640, %v3562
        %v3642 = vadd.f32 %v3641, %v3567
        %v3643 = vadd.f32 %v3642, %v3572
        %v3644 = vadd.f32 %v3643, %v3577
        %v3645 = vadd.f32 %v3644, %v3582
        %v3646 = vadd.f32 %v3645, %v3587
        %v3647 = vadd.f32 %v3646, %v3592
        %v3648 = vadd.f32 %v3647, %v3597
        %v3649 = vadd.f32 %v3648, %v3602
        %v3650 = vadd.f32 %v3649, %v3607
        %v3651 = vadd.f32 %v3650, %v3612
        %v3652 = vadd.f32 %v3651, %v3617
        %3653 = vadd.xlane.f32.xlu0 %v3652
        %v3654 = vpop.xlane.xlu0 %3653
        %v3655 = vrot.slane %v3654, 4
        %v3656 = vadd.f32 %v3654, %v3655
        %v3657 = vrot.slane %v3656, 2
        %v3658 = vadd.f32 %v3656, %v3657
        %v3659 = vrot.slane %v3658, 1
        %v3660 = vadd.f32 %v3658, %v3659
        %s3661 = vtos %v3660
        %v3662 = vmul.f32 %v3462, %v3462
        %v3663 = vmul.f32 %v3467, %v3467
        %v3664 = vmul.f32 %v3472, %v3472
        %v3665 = vmul.f32 %v3477, %v3477
        %v3666 = vmul.f32 %v3482, %v3482
        %v3667 = vmul.f32 %v3487, %v3487
        %v3668 = vmul.f32 %v3492, %v3492
        %v3669 = vmul.f32 %v3497, %v3497
        %v3670 = vmul.f32 %v3502, %v3502
        %v3671 = vmul.f32 %v3507, %v3507
        %v3672 = vmul.f32 %v3512, %v3512
        %v3673 = vmul.f32 %v3517, %v3517
        %v3674 = vmul.f32 %v3522, %v3522
        %v3675 = vmul.f32 %v3527, %v3527
        %v3676 = vmul.f32 %v3532, %v3532
        %v3677 = vmul.f32 %v3537, %v3537
        %v3678 = vmul.f32 %v3542, %v3542
        %v3679 = vmul.f32 %v3547, %v3547
        %v3680 = vmul.f32 %v3552, %v3552
        %v3681 = vmul.f32 %v3557, %v3557
        %v3682 = vmul.f32 %v3562, %v3562
        %v3683 = vmul.f32 %v3567, %v3567
        %v3684 = vmul.f32 %v3572, %v3572
        %v3685 = vmul.f32 %v3577, %v3577
        %v3686 = vmul.f32 %v3582, %v3582
        %v3687 = vmul.f32 %v3587, %v3587
        %v3688 = vmul.f32 %v3592, %v3592
        %v3689 = vmul.f32 %v3597, %v3597
        %v3690 = vmul.f32 %v3602, %v3602
        %v3691 = vmul.f32 %v3607, %v3607
        %v3692 = vmul.f32 %v3612, %v3612
        %v3693 = vmul.f32 %v3617, %v3617
        %v3694 = vadd.f32 %v3662, %v3663
        %v3695 = vadd.f32 %v3694, %v3664
        %v3696 = vadd.f32 %v3695, %v3665
        %v3697 = vadd.f32 %v3696, %v3666
        %v3698 = vadd.f32 %v3697, %v3667
        %v3699 = vadd.f32 %v3698, %v3668
        %v3700 = vadd.f32 %v3699, %v3669
        %v3701 = vadd.f32 %v3700, %v3670
        %v3702 = vadd.f32 %v3701, %v3671
        %v3703 = vadd.f32 %v3702, %v3672
        %v3704 = vadd.f32 %v3703, %v3673
        %v3705 = vadd.f32 %v3704, %v3674
        %v3706 = vadd.f32 %v3705, %v3675
        %v3707 = vadd.f32 %v3706, %v3676
        %v3708 = vadd.f32 %v3707, %v3677
        %v3709 = vadd.f32 %v3708, %v3678
        %v3710 = vadd.f32 %v3709, %v3679
        %v3711 = vadd.f32 %v3710, %v3680
        %v3712 = vadd.f32 %v3711, %v3681
        %v3713 = vadd.f32 %v3712, %v3682
        %v3714 = vadd.f32 %v3713, %v3683
        %v3715 = vadd.f32 %v3714, %v3684
        %v3716 = vadd.f32 %v3715, %v3685
        %v3717 = vadd.f32 %v3716, %v3686
        %v3718 = vadd.f32 %v3717, %v3687
        %v3719 = vadd.f32 %v3718, %v3688
        %v3720 = vadd.f32 %v3719, %v3689
        %v3721 = vadd.f32 %v3720, %v3690
        %v3722 = vadd.f32 %v3721, %v3691
        %v3723 = vadd.f32 %v3722, %v3692
        %v3724 = vadd.f32 %v3723, %v3693
        %3725 = vadd.xlane.f32.xlu0 %v3724
        %v3726 = vpop.xlane.xlu0 %3725
        %v3727 = vrot.slane %v3726, 4
        %v3728 = vadd.f32 %v3726, %v3727
        %v3729 = vrot.slane %v3728, 2
        %v3730 = vadd.f32 %v3728, %v3729
        %v3731 = vrot.slane %v3730, 1
        %v3732 = vadd.f32 %v3730, %v3731
        %s3733 = vtos %v3732
        %v3734 = vrcp.pop 4096.0
        %s3735 = vtos %v3734
        %s3736 = smul.f32 %s3661, %s3735
        %v3737 = vrcp.pop 4096.0
        %s3738 = vtos %v3737
        %s3739 = smul.f32 %s3733, %s3738
        %s3740 = smul.f32 %s3736, %s3736
        %s3741 = ssub.f32 %s3739, %s3740
        %s3742 = sadd.f32 %s3741, 1e-05
        %v3743 = vstv %s3742
        %v3744 = vrsqrt.pop %v3743
        %s3745 = vtos %v3744
        %v3746 = vstv %s3745
        %v3747 = vmul.f32 %v3620, %v3746
        %v3748 = vstv %s3736
        %v3749 = vmul.f32 %v3748, %v3747
        %v3750 = vsub.f32 %v3621, %v3749
        %v3752 = vlaneseq
        %v3753 = vshrl.u32 %v3752, 7
        %v3754 = vsub.s32 0, %v3753
        %v3755 = vrot.slane %v3747, %v3754
        %v3757 = vmul.f32 %v3462, %v3755
        %v3758 = vmul.f32 %v3467, %v3755
        %v3759 = vmul.f32 %v3472, %v3755
        %v3760 = vmul.f32 %v3477, %v3755
        %v3761 = vmul.f32 %v3482, %v3755
        %v3762 = vmul.f32 %v3487, %v3755
        %v3763 = vmul.f32 %v3492, %v3755
        %v3764 = vmul.f32 %v3497, %v3755
        %v3765 = vmul.f32 %v3502, %v3755
        %v3766 = vmul.f32 %v3507, %v3755
        %v3767 = vmul.f32 %v3512, %v3755
        %v3768 = vmul.f32 %v3517, %v3755
        %v3769 = vmul.f32 %v3522, %v3755
        %v3770 = vmul.f32 %v3527, %v3755
        %v3771 = vmul.f32 %v3532, %v3755
        %v3772 = vmul.f32 %v3537, %v3755
        %v3773 = vmul.f32 %v3542, %v3755
        %v3774 = vmul.f32 %v3547, %v3755
        %v3775 = vmul.f32 %v3552, %v3755
        %v3776 = vmul.f32 %v3557, %v3755
        %v3777 = vmul.f32 %v3562, %v3755
        %v3778 = vmul.f32 %v3567, %v3755
        %v3779 = vmul.f32 %v3572, %v3755
        %v3780 = vmul.f32 %v3577, %v3755
        %v3781 = vmul.f32 %v3582, %v3755
        %v3782 = vmul.f32 %v3587, %v3755
        %v3783 = vmul.f32 %v3592, %v3755
        %v3784 = vmul.f32 %v3597, %v3755
        %v3785 = vmul.f32 %v3602, %v3755
        %v3786 = vmul.f32 %v3607, %v3755
        %v3787 = vmul.f32 %v3612, %v3755
        %v3788 = vmul.f32 %v3617, %v3755
        %v3790 = vlaneseq
        %v3791 = vshrl.u32 %v3790, 7
        %v3792 = vsub.s32 0, %v3791
        %v3793 = vrot.slane %v3750, %v3792
        %v3795 = vadd.f32 %v3757, %v3793
        %v3796 = vadd.f32 %v3758, %v3793
        %v3797 = vadd.f32 %v3759, %v3793
        %v3798 = vadd.f32 %v3760, %v3793
        %v3799 = vadd.f32 %v3761, %v3793
        %v3800 = vadd.f32 %v3762, %v3793
        %v3801 = vadd.f32 %v3763, %v3793
        %v3802 = vadd.f32 %v3764, %v3793
        %v3803 = vadd.f32 %v3765, %v3793
        %v3804 = vadd.f32 %v3766, %v3793
        %v3805 = vadd.f32 %v3767, %v3793
        %v3806 = vadd.f32 %v3768, %v3793
        %v3807 = vadd.f32 %v3769, %v3793
        %v3808 = vadd.f32 %v3770, %v3793
        %v3809 = vadd.f32 %v3771, %v3793
        %v3810 = vadd.f32 %v3772, %v3793
        %v3811 = vadd.f32 %v3773, %v3793
        %v3812 = vadd.f32 %v3774, %v3793
        %v3813 = vadd.f32 %v3775, %v3793
        %v3814 = vadd.f32 %v3776, %v3793
        %v3815 = vadd.f32 %v3777, %v3793
        %v3816 = vadd.f32 %v3778, %v3793
        %v3817 = vadd.f32 %v3779, %v3793
        %v3818 = vadd.f32 %v3780, %v3793
        %v3819 = vadd.f32 %v3781, %v3793
        %v3820 = vadd.f32 %v3782, %v3793
        %v3821 = vadd.f32 %v3783, %v3793
        %v3822 = vadd.f32 %v3784, %v3793
        %v3823 = vadd.f32 %v3785, %v3793
        %v3824 = vadd.f32 %v3786, %v3793
        %v3825 = vadd.f32 %v3787, %v3793
        %v3826 = vadd.f32 %v3788, %v3793
        %v3827 = vadd.f32 %v3347, %v3795
        %v3828 = vadd.f32 %v3348, %v3796
        %v3829 = vadd.f32 %v3349, %v3797
        %v3830 = vadd.f32 %v3350, %v3798
        %v3831 = vadd.f32 %v3351, %v3799
        %v3832 = vadd.f32 %v3352, %v3800
        %v3833 = vadd.f32 %v3353, %v3801
        %v3834 = vadd.f32 %v3354, %v3802
        %v3835 = vadd.f32 %v3355, %v3803
        %v3836 = vadd.f32 %v3356, %v3804
        %v3837 = vadd.f32 %v3357, %v3805
        %v3838 = vadd.f32 %v3358, %v3806
        %v3839 = vadd.f32 %v3359, %v3807
        %v3840 = vadd.f32 %v3360, %v3808
        %v3841 = vadd.f32 %v3361, %v3809
        %v3842 = vadd.f32 %v3362, %v3810
        %v3843 = vadd.f32 %v3363, %v3811
        %v3844 = vadd.f32 %v3364, %v3812
        %v3845 = vadd.f32 %v3365, %v3813
        %v3846 = vadd.f32 %v3366, %v3814
        %v3847 = vadd.f32 %v3367, %v3815
        %v3848 = vadd.f32 %v3368, %v3816
        %v3849 = vadd.f32 %v3369, %v3817
        %v3850 = vadd.f32 %v3370, %v3818
        %v3851 = vadd.f32 %v3371, %v3819
        %v3852 = vadd.f32 %v3372, %v3820
        %v3853 = vadd.f32 %v3373, %v3821
        %v3854 = vadd.f32 %v3374, %v3822
        %v3855 = vadd.f32 %v3375, %v3823
        %v3856 = vadd.f32 %v3376, %v3824
        %v3857 = vadd.f32 %v3377, %v3825
        %v3858 = vadd.f32 %v3378, %v3826
        %v3859 = vmax.f32 %v3827, 0.0
        %v3860 = vmax.f32 %v3828, 0.0
        %v3861 = vmax.f32 %v3829, 0.0
        %v3862 = vmax.f32 %v3830, 0.0
        %v3863 = vmax.f32 %v3831, 0.0
        %v3864 = vmax.f32 %v3832, 0.0
        %v3865 = vmax.f32 %v3833, 0.0
        %v3866 = vmax.f32 %v3834, 0.0
        %v3867 = vmax.f32 %v3835, 0.0
        %v3868 = vmax.f32 %v3836, 0.0
        %v3869 = vmax.f32 %v3837, 0.0
        %v3870 = vmax.f32 %v3838, 0.0
        %v3871 = vmax.f32 %v3839, 0.0
        %v3872 = vmax.f32 %v3840, 0.0
        %v3873 = vmax.f32 %v3841, 0.0
        %v3874 = vmax.f32 %v3842, 0.0
        %v3875 = vmax.f32 %v3843, 0.0
        %v3876 = vmax.f32 %v3844, 0.0
        %v3877 = vmax.f32 %v3845, 0.0
        %v3878 = vmax.f32 %v3846, 0.0
        %v3879 = vmax.f32 %v3847, 0.0
        %v3880 = vmax.f32 %v3848, 0.0
        %v3881 = vmax.f32 %v3849, 0.0
        %v3882 = vmax.f32 %v3850, 0.0
        %v3883 = vmax.f32 %v3851, 0.0
        %v3884 = vmax.f32 %v3852, 0.0
        %v3885 = vmax.f32 %v3853, 0.0
        %v3886 = vmax.f32 %v3854, 0.0
        %v3887 = vmax.f32 %v3855, 0.0
        %v3888 = vmax.f32 %v3856, 0.0
        %v3889 = vmax.f32 %v3857, 0.0
        %v3890 = vmax.f32 %v3858, 0.0
        %3891 = vst [vmem:[%s516] sm:$0xff] %v3859
        %3892 = vst [vmem:[%s516 + $0x8] sm:$0xff] %v3860
        %3893 = vst [vmem:[%s516 + $0x10] sm:$0xff] %v3861
        %3894 = vst [vmem:[%s516 + $0x18] sm:$0xff] %v3862
        %3895 = vst [vmem:[%s516 + $0x20] sm:$0xff] %v3863
        %3896 = vst [vmem:[%s516 + $0x28] sm:$0xff] %v3864
        %3897 = vst [vmem:[%s516 + $0x30] sm:$0xff] %v3865
        %3898 = vst [vmem:[%s516 + $0x38] sm:$0xff] %v3866
        %3899 = vst [vmem:[%s516 + $0x40] sm:$0xff] %v3867
        %3900 = vst [vmem:[%s516 + $0x48] sm:$0xff] %v3868
        %3901 = vst [vmem:[%s516 + $0x50] sm:$0xff] %v3869
        %3902 = vst [vmem:[%s516 + $0x58] sm:$0xff] %v3870
        %3903 = vst [vmem:[%s516 + $0x60] sm:$0xff] %v3871
        %3904 = vst [vmem:[%s516 + $0x68] sm:$0xff] %v3872
        %3905 = vst [vmem:[%s516 + $0x70] sm:$0xff] %v3873
        %3906 = vst [vmem:[%s516 + $0x78] sm:$0xff] %v3874
        %3907 = vst [vmem:[%s516 + $0x80] sm:$0xff] %v3875
        %3908 = vst [vmem:[%s516 + $0x88] sm:$0xff] %v3876
        %3909 = vst [vmem:[%s516 + $0x90] sm:$0xff] %v3877
        %3910 = vst [vmem:[%s516 + $0x98] sm:$0xff] %v3878
        %3911 = vst [vmem:[%s516 + $0xa0] sm:$0xff] %v3879
        %3912 = vst [vmem:[%s516 + $0xa8] sm:$0xff] %v3880
        %3913 = vst [vmem:[%s516 + $0xb0] sm:$0xff] %v3881
        %3914 = vst [vmem:[%s516 + $0xb8] sm:$0xff] %v3882
        %3915 = vst [vmem:[%s516 + $0xc0] sm:$0xff] %v3883
        %3916 = vst [vmem:[%s516 + $0xc8] sm:$0xff] %v3884
        %3917 = vst [vmem:[%s516 + $0xd0] sm:$0xff] %v3885
        %3918 = vst [vmem:[%s516 + $0xd8] sm:$0xff] %v3886
        %3919 = vst [vmem:[%s516 + $0xe0] sm:$0xff] %v3887
        %3920 = vst [vmem:[%s516 + $0xe8] sm:$0xff] %v3888
        %3921 = vst [vmem:[%s516 + $0xf0] sm:$0xff] %v3889
        %3922 = vst [vmem:[%s516 + $0xf8] sm:$0xff] %v3890
        %s3923 = sand.u32 %s318, 1
        %s3924 = scalar_lea.sflag [#allocation5], %s3923
        %s3925 = sand.u32 %s318, 1
        %s3926 = smul.addr %s3925, 256
        %s3927 = scalar_lea.vmem [#allocation12], %s3926
        // Predicated region
        $region93: #{tpu_custom_call.1} parent=71 // pred_check
          %p3928 = pneg %p328
        $region94: #{tpu_custom_call.1} parent=71 // pred_check_branch
          %3930 = sbr.rel (%p3928) target = $region96
        $region95: #{tpu_custom_call.1} parent=71 // pred_region
          %s3932 = ssub.s32 4096, 4096
          %3933 = vsyncadd %s3924, %s3932
          %s3934 = smul.addr %s32, 32
          %s3935 = smul.addr %s3934, 128
          %s3936 = scalar_lea.hbm %s13, %s3935
          %s3937 = sshll.u32 %s3927, 4
          %s3938 = int_to_ptr.vmem [resolvable:$true] %s3937
          %3943 = dma.vmem_to_hbm [thread:$0]  %s3938, 4096, %s3936, %s3924, 128, 128, 8
        $region96: #{tpu_custom_call.1} parent=71 // pred_fallthru
          _
      $region72: #{tpu_custom_call.1} parent=5 // pred_fallthru
        _
      %p3944 = scmp.le.s32.totalorder 2, %s27
      // Predicated region
      $region97: #{tpu_custom_call.1} parent=5 // pred_check
        %p3945 = pneg %p3944
      $region98: #{tpu_custom_call.1} parent=5 // pred_check_branch
        %3947 = sbr.rel (%p3945) target = $region100
      $region99: #{tpu_custom_call.1} parent=5 // pred_region
        %s3948 = ssub.s32 %s27, 2
        // Predicated region
        $region101: #{tpu_custom_call.1} parent=99 // pred_check
          %p3949 = pneg %p334
        $region102: #{tpu_custom_call.1} parent=99 // pred_check_branch
          %3951 = sbr.rel (%p3949) target = $region104
        $region103: #{tpu_custom_call.1} parent=99 // pred_region
          %s3952 = sand.u32 %s319, 1
          %s3953 = scalar_lea.sflag [#allocation5], %s3952
          %s3954 = sand.u32 %s319, 1
          %s3955 = smul.addr %s3954, 256
          %s3956 = scalar_lea.vmem [#allocation12], %s3955
          %3957 = dma.done %s3953, 4096
        $region104: #{tpu_custom_call.1} parent=99 // pred_fallthru
          _
      $region100: #{tpu_custom_call.1} parent=5 // pred_fallthru
        _
    $region6: #{tpu_custom_call.1} parent=1 // loop_footer
      %s31 = sadd.s32 1, %s27
    $region7: #{tpu_custom_call.1} parent=1 // loop_footer_branch
      %26 = sbr.rel target = $region3
    $region8: #{tpu_custom_call.1} parent=1 // loop_exit
      _
    %3958 = vsyncpa [#allocation4], 1
    %s3959 = scalar_lea.sflag [#allocation4], 1
    %3960 = vsyncpa %s3959, 1
    %3961 = vsyncpa [#allocation7], 1
    %3962 = vsyncpa [#allocation10], 1
    %3963 = vsyncpa [#allocation5], 1
    %s3964 = scalar_lea.sflag [#allocation5], 1
    %3965 = vsyncpa %s3964, 1

</llo_original>
